<compile_context>
chip_gen: v7x
topology: tpu7x:2x2x1
jax: 0.10.0
libtpu: 0.0.40
codegen_flags: <defaults>
</compile_context>

<pallas_src>
import math

import jax
import jax.numpy as jnp
from jax.experimental import pallas as pl
from jax.experimental.pallas import tpu as pltpu

_SQRT_2_OVER_PI = 0.7978845608028654  # sqrt(2/pi), NewGELU constant


def _mlp_adapter_kernel(x_ref, wfc_ref, bfc_ref, wproj_ref, bproj_ref,
                        wdn_ref, bdn_ref, wup_ref, bup_ref, o_ref):
    x = x_ref[...]  # bf16 token tile (tm, E_p)

    # --- GPT2MLP: c_fc (Conv1D == x @ W + b), f32 accumulation, then NewGELU in f32 ---
    h = jnp.dot(x, wfc_ref[...], preferred_element_type=jnp.float32) + bfc_ref[...]
    h = 0.5 * h * (1.0 + jnp.tanh(_SQRT_2_OVER_PI * (h + 0.044715 * h * h * h)))

    # --- GPT2MLP: c_proj ---
    y = jnp.dot(h.astype(jnp.bfloat16), wproj_ref[...],
                preferred_element_type=jnp.float32) + bproj_ref[...]
    # TODO(synk): GPT2MLP's resid dropout is identity in eval mode; not modeled.

    # --- AdapterLayer: Linear -> ReLU -> Linear, residual add ---
    a = jnp.dot(y.astype(jnp.bfloat16), wdn_ref[...],
                preferred_element_type=jnp.float32) + bdn_ref[...]
    a = jnp.maximum(a, 0.0)
    out = y + jnp.dot(a.astype(jnp.bfloat16), wup_ref[...],
                      preferred_element_type=jnp.float32) + bup_ref[...]

    o_ref[...] = out.astype(o_ref.dtype)


def _round_up(n, m):
    return ((n + m - 1) // m) * m


def feedforward_adapter_wrapper(x, params, *, tm=256,
                                vmem_limit_bytes=48 * 1024 * 1024):
    """x: (batch, seq, emb). Weights stored (in_features, out_features).

    Returns (batch, seq, emb) with x's dtype.
    """
    w_fc, b_fc, w_proj, b_proj, w_dn, b_dn, w_up, b_up = params
    B, S, E = x.shape
    I = w_fc.shape[1]
    Bn = w_dn.shape[1]
    M = B * S
    out_dtype = x.dtype

    assert tm % 8 == 0, "token tile must be a sublane multiple"

    # Lane-dense / MXU-friendly padding: features to multiples of 128,
    # tokens to a multiple of tm.  Zero padding is exact for this forward pass
    # (zero weight rows/cols + zero biases keep padded lanes identically zero).
    E_p = _round_up(E, 128)
    I_p = _round_up(I, 128)
    Bn_p = _round_up(Bn, 128)
    M_p = _round_up(M, tm)

    def pad2(a, rows, cols):
        return jnp.pad(a, ((0, rows - a.shape[0]), (0, cols - a.shape[1])))

    x2 = pad2(x.reshape(M, E), M_p, E_p).astype(jnp.bfloat16)
    wfc = pad2(w_fc, E_p, I_p).astype(jnp.bfloat16)
    wpj = pad2(w_proj, I_p, E_p).astype(jnp.bfloat16)
    wdn = pad2(w_dn, E_p, Bn_p).astype(jnp.bfloat16)
    wup = pad2(w_up, Bn_p, E_p).astype(jnp.bfloat16)
    bfc = pad2(b_fc.reshape(1, -1), 1, I_p).astype(jnp.float32)
    bpj = pad2(b_proj.reshape(1, -1), 1, E_p).astype(jnp.float32)
    bdn = pad2(b_dn.reshape(1, -1), 1, Bn_p).astype(jnp.float32)
    bup = pad2(b_up.reshape(1, -1), 1, E_p).astype(jnp.float32)

    grid = (M_p // tm,)

    itemsize = jnp.dtype(out_dtype).itemsize
    cost = pl.CostEstimate(
        flops=4 * M_p * E_p * I_p + 4 * M_p * E_p * Bn_p,
        transcendentals=M_p * I_p,
        bytes_accessed=(x2.size * 2 + M_p * E_p * itemsize
                        + (wfc.size + wpj.size + wdn.size + wup.size) * 2
                        + (bfc.size + bpj.size + bdn.size + bup.size) * 4),
    )

    def build(weight_mode):
        def const_spec(shape):
            # Grid-invariant operand (weights / biases): index_map always (0, 0).
            if weight_mode is None:
                return pl.BlockSpec(shape, lambda i: (0, 0))
            return pl.BlockSpec(shape, lambda i: (0, 0), pipeline_mode=weight_mode)

        return pl.pallas_call(
            _mlp_adapter_kernel,
            out_shape=jax.ShapeDtypeStruct((M_p, E_p), out_dtype),
            grid_spec=pltpu.PrefetchScalarGridSpec(
                num_scalar_prefetch=0,
                grid=grid,
                in_specs=[
                    pl.BlockSpec((tm, E_p), lambda i: (i, 0)),      # x token tile
                    const_spec((E_p, I_p)), const_spec((1, I_p)),   # c_fc
                    const_spec((I_p, E_p)), const_spec((1, E_p)),   # c_proj
                    const_spec((E_p, Bn_p)), const_spec((1, Bn_p)), # adapter down
                    const_spec((Bn_p, E_p)), const_spec((1, E_p)),  # adapter up
                ],
                out_specs=pl.BlockSpec((tm, E_p), lambda i: (i, 0)),
            ),
            compiler_params=pltpu.CompilerParams(
                dimension_semantics=("parallel",),
                vmem_limit_bytes=vmem_limit_bytes),
            cost_estimate=cost,
        )

    args = (x2, wfc, bfc, wpj, bpj, wdn, bdn, wup, bup)
    try:
        # Single-buffer the constant weights/biases (they never change across the
        # token grid) to avoid double-buffered weight copies in VMEM.
        out = build(pl.Buffered(1))(*args)
    except Exception:
        # Fallback: default double-buffering (correct, just uses more VMEM).
        out = build(None)(*args)

    return out[:M, :E].reshape(B, S, E)


def _reference(x, params):
    w_fc, b_fc, w_proj, b_proj, w_dn, b_dn, w_up, b_up = params
    xf = x.astype(jnp.float32)
    h = xf @ w_fc + b_fc
    c = math.sqrt(2.0 / math.pi)
    h = 0.5 * h * (1.0 + jnp.tanh(c * (h + 0.044715 * h ** 3)))
    y = h @ w_proj + b_proj
    a = jnp.maximum(y @ w_dn + b_dn, 0.0)
    return (y + a @ w_up + b_up).astype(x.dtype)


def _init_params(key, emb_dim, inner_dim, bottleneck):
    ks = jax.random.split(key, 8)

    def lin(kw, fan_in, fan_out):
        bound = 1.0 / math.sqrt(fan_in)
        w = jax.random.uniform(kw, (fan_in, fan_out), jnp.float32, -bound, bound)
        b = jax.random.uniform(jax.random.fold_in(kw, 1), (1, fan_out),
                               jnp.float32, -bound, bound)
        return w, b

    w_fc, b_fc = lin(ks[0], emb_dim, inner_dim)
    w_proj, b_proj = lin(ks[1], inner_dim, emb_dim)
    w_dn, b_dn = lin(ks[2], emb_dim, bottleneck)
    w_up, b_up = lin(ks[3], bottleneck, emb_dim)
    return (w_fc, b_fc, w_proj, b_proj, w_dn, b_dn, w_up, b_up)


if __name__ == "__main__":
    key = jax.random.PRNGKey(0)
    batch, seq, emb = 2, 8, 32
    inner = 4 * emb          # GPT2MLP intermediate size
    bottleneck = 16          # adapter bottleneck_size

    kx, kp = jax.random.split(key)
    x = jax.random.normal(kx, (batch, seq, emb), dtype=jnp.float32)
    params = _init_params(kp, emb, inner, bottleneck)

    out = feedforward_adapter_wrapper(x, params)
    out = jax.block_until_ready(out)

    ref = _reference(x, params)
    assert out.shape == x.shape and out.dtype == x.dtype
    # bf16 matmul inputs (f32 accumulation) => loosened tolerance vs f32 reference.
    assert jnp.allclose(out, ref, atol=2e-2, rtol=2e-2), "mismatch vs reference"
    print("KERNEL_OK")
</pallas_src>

<mosaic_0001>
module attributes {stable_mosaic.version = 11 : i64} {
  func.func @_mlp_adapter_kernel(%arg0: i32, %arg1: memref<256x128xbf16, #tpu.memory_space<vmem>>, %arg2: memref<128x128xbf16, #tpu.memory_space<vmem>>, %arg3: memref<1x128xf32, #tpu.memory_space<vmem>>, %arg4: memref<128x128xbf16, #tpu.memory_space<vmem>>, %arg5: memref<1x128xf32, #tpu.memory_space<vmem>>, %arg6: memref<128x128xbf16, #tpu.memory_space<vmem>>, %arg7: memref<1x128xf32, #tpu.memory_space<vmem>>, %arg8: memref<128x128xbf16, #tpu.memory_space<vmem>>, %arg9: memref<1x128xf32, #tpu.memory_space<vmem>>, %arg10: memref<256x128xf32, #tpu.memory_space<vmem>>) attributes {dimension_semantics = [#tpu.dimension_semantics<parallel>], iteration_bounds = array<i64: 1>, scalar_prefetch = 0 : i64, scratch_operands = 0 : i64, tpu.core_type = #tpu.core_type<tc>, window_params = [{transform_indices = @transform_0, window_bounds = array<i64: 256, 128>}, {pipeline_mode = #tpu.pipeline_mode<synchronous>, transform_indices = @transform_1, window_bounds = array<i64: 128, 128>}, {pipeline_mode = #tpu.pipeline_mode<synchronous>, transform_indices = @transform_2, window_bounds = array<i64: 1, 128>}, {pipeline_mode = #tpu.pipeline_mode<synchronous>, transform_indices = @transform_3, window_bounds = array<i64: 128, 128>}, {pipeline_mode = #tpu.pipeline_mode<synchronous>, transform_indices = @transform_4, window_bounds = array<i64: 1, 128>}, {pipeline_mode = #tpu.pipeline_mode<synchronous>, transform_indices = @transform_5, window_bounds = array<i64: 128, 128>}, {pipeline_mode = #tpu.pipeline_mode<synchronous>, transform_indices = @transform_6, window_bounds = array<i64: 1, 128>}, {pipeline_mode = #tpu.pipeline_mode<synchronous>, transform_indices = @transform_7, window_bounds = array<i64: 128, 128>}, {pipeline_mode = #tpu.pipeline_mode<synchronous>, transform_indices = @transform_8, window_bounds = array<i64: 1, 128>}, {transform_indices = @transform_9, window_bounds = array<i64: 256, 128>}]} {
    %c0 = arith.constant 0 : index
    %c0_0 = arith.constant 0 : index
    %0 = vector.load %arg1[%c0, %c0_0] : memref<256x128xbf16, #tpu.memory_space<vmem>>, vector<256x128xbf16>
    %c0_1 = arith.constant 0 : index
    %c0_2 = arith.constant 0 : index
    %1 = vector.load %arg2[%c0_1, %c0_2] : memref<128x128xbf16, #tpu.memory_space<vmem>>, vector<128x128xbf16>
    %cst = arith.constant dense<0.000000e+00> : vector<256x128xf32>
    %2 = tpu.matmul %0, %1, %cst {dimension_numbers = #tpu.dot_dimension_numbers<[1], [0], [0], [1], [0, 0, 1, 1], [], []>} : vector<256x128xbf16>, vector<128x128xbf16>, vector<256x128xf32> -> vector<256x128xf32>
    %c0_3 = arith.constant 0 : index
    %c0_4 = arith.constant 0 : index
    %3 = vector.load %arg3[%c0_3, %c0_4] : memref<1x128xf32, #tpu.memory_space<vmem>>, vector<1x128xf32>
    %4 = vector.broadcast %3 : vector<1x128xf32> to vector<256x128xf32>
    %5 = arith.addf %2, %4 : vector<256x128xf32>
    %cst_5 = arith.constant 5.000000e-01 : f32
    %6 = vector.broadcast %cst_5 : f32 to vector<256x128xf32>
    %7 = arith.mulf %6, %5 : vector<256x128xf32>
    %cst_6 = arith.constant 4.471500e-02 : f32
    %8 = vector.broadcast %cst_6 : f32 to vector<256x128xf32>
    %9 = arith.mulf %8, %5 : vector<256x128xf32>
    %10 = arith.mulf %9, %5 : vector<256x128xf32>
    %11 = arith.mulf %10, %5 : vector<256x128xf32>
    %12 = arith.addf %5, %11 : vector<256x128xf32>
    %cst_7 = arith.constant 0.797884583 : f32
    %13 = vector.broadcast %cst_7 : f32 to vector<256x128xf32>
    %14 = arith.mulf %13, %12 : vector<256x128xf32>
    %15 = math.tanh %14 : vector<256x128xf32>
    %cst_8 = arith.constant 1.000000e+00 : f32
    %16 = vector.broadcast %cst_8 : f32 to vector<256x128xf32>
    %17 = arith.addf %16, %15 : vector<256x128xf32>
    %18 = arith.mulf %7, %17 : vector<256x128xf32>
    %19 = arith.truncf %18 : vector<256x128xf32> to vector<256x128xbf16>
    %c0_9 = arith.constant 0 : index
    %c0_10 = arith.constant 0 : index
    %20 = vector.load %arg4[%c0_9, %c0_10] : memref<128x128xbf16, #tpu.memory_space<vmem>>, vector<128x128xbf16>
    %cst_11 = arith.constant dense<0.000000e+00> : vector<256x128xf32>
    %21 = tpu.matmul %19, %20, %cst_11 {dimension_numbers = #tpu.dot_dimension_numbers<[1], [0], [0], [1], [0, 0, 1, 1], [], []>} : vector<256x128xbf16>, vector<128x128xbf16>, vector<256x128xf32> -> vector<256x128xf32>
    %c0_12 = arith.constant 0 : index
    %c0_13 = arith.constant 0 : index
    %22 = vector.load %arg5[%c0_12, %c0_13] : memref<1x128xf32, #tpu.memory_space<vmem>>, vector<1x128xf32>
    %23 = vector.broadcast %22 : vector<1x128xf32> to vector<256x128xf32>
    %24 = arith.addf %21, %23 : vector<256x128xf32>
    %25 = arith.truncf %24 : vector<256x128xf32> to vector<256x128xbf16>
    %c0_14 = arith.constant 0 : index
    %c0_15 = arith.constant 0 : index
    %26 = vector.load %arg6[%c0_14, %c0_15] : memref<128x128xbf16, #tpu.memory_space<vmem>>, vector<128x128xbf16>
    %cst_16 = arith.constant dense<0.000000e+00> : vector<256x128xf32>
    %27 = tpu.matmul %25, %26, %cst_16 {dimension_numbers = #tpu.dot_dimension_numbers<[1], [0], [0], [1], [0, 0, 1, 1], [], []>} : vector<256x128xbf16>, vector<128x128xbf16>, vector<256x128xf32> -> vector<256x128xf32>
    %c0_17 = arith.constant 0 : index
    %c0_18 = arith.constant 0 : index
    %28 = vector.load %arg7[%c0_17, %c0_18] : memref<1x128xf32, #tpu.memory_space<vmem>>, vector<1x128xf32>
    %29 = vector.broadcast %28 : vector<1x128xf32> to vector<256x128xf32>
    %30 = arith.addf %27, %29 : vector<256x128xf32>
    %cst_19 = arith.constant 0.000000e+00 : f32
    %31 = vector.broadcast %cst_19 : f32 to vector<256x128xf32>
    %32 = arith.maximumf %30, %31 : vector<256x128xf32>
    %33 = arith.truncf %32 : vector<256x128xf32> to vector<256x128xbf16>
    %c0_20 = arith.constant 0 : index
    %c0_21 = arith.constant 0 : index
    %34 = vector.load %arg8[%c0_20, %c0_21] : memref<128x128xbf16, #tpu.memory_space<vmem>>, vector<128x128xbf16>
    %cst_22 = arith.constant dense<0.000000e+00> : vector<256x128xf32>
    %35 = tpu.matmul %33, %34, %cst_22 {dimension_numbers = #tpu.dot_dimension_numbers<[1], [0], [0], [1], [0, 0, 1, 1], [], []>} : vector<256x128xbf16>, vector<128x128xbf16>, vector<256x128xf32> -> vector<256x128xf32>
    %36 = arith.addf %24, %35 : vector<256x128xf32>
    %c0_23 = arith.constant 0 : index
    %c0_24 = arith.constant 0 : index
    %37 = vector.load %arg9[%c0_23, %c0_24] : memref<1x128xf32, #tpu.memory_space<vmem>>, vector<1x128xf32>
    %38 = vector.broadcast %37 : vector<1x128xf32> to vector<256x128xf32>
    %39 = arith.addf %36, %38 : vector<256x128xf32>
    %c0_25 = arith.constant 0 : index
    %c0_26 = arith.constant 0 : index
    %40 = vector.load %arg10[%c0_25, %c0_26] : memref<256x128xf32, #tpu.memory_space<vmem>>, vector<256x128xf32>
    tpu.vector_store %arg10[%c0_25, %c0_26], %39 {strides = array<i32>} : memref<256x128xf32, #tpu.memory_space<vmem>>, vector<256x128xf32>,
    return
  }
  func.func @transform_0(%arg0: i32) -> (i32, i32) {
    %c0_i32 = arith.constant 0 : i32
    %c0_i32_0 = arith.constant 0 : i32
    return %arg0, %c0_i32 : i32, i32
  }
  func.func @transform_1(%arg0: i32) -> (i32, i32) {
    %c0_i32 = arith.constant 0 : i32
    %c0_i32_0 = arith.constant 0 : i32
    %c0_i32_1 = arith.constant 0 : i32
    return %c0_i32, %c0_i32_0 : i32, i32
  }
  func.func @transform_2(%arg0: i32) -> (i32, i32) {
    %c0_i32 = arith.constant 0 : i32
    %c0_i32_0 = arith.constant 0 : i32
    %c0_i32_1 = arith.constant 0 : i32
    return %c0_i32, %c0_i32_0 : i32, i32
  }
  func.func @transform_3(%arg0: i32) -> (i32, i32) {
    %c0_i32 = arith.constant 0 : i32
    %c0_i32_0 = arith.constant 0 : i32
    %c0_i32_1 = arith.constant 0 : i32
    return %c0_i32, %c0_i32_0 : i32, i32
  }
  func.func @transform_4(%arg0: i32) -> (i32, i32) {
    %c0_i32 = arith.constant 0 : i32
    %c0_i32_0 = arith.constant 0 : i32
    %c0_i32_1 = arith.constant 0 : i32
    return %c0_i32, %c0_i32_0 : i32, i32
  }
  func.func @transform_5(%arg0: i32) -> (i32, i32) {
    %c0_i32 = arith.constant 0 : i32
    %c0_i32_0 = arith.constant 0 : i32
    %c0_i32_1 = arith.constant 0 : i32
    return %c0_i32, %c0_i32_0 : i32, i32
  }
  func.func @transform_6(%arg0: i32) -> (i32, i32) {
    %c0_i32 = arith.constant 0 : i32
    %c0_i32_0 = arith.constant 0 : i32
    %c0_i32_1 = arith.constant 0 : i32
    return %c0_i32, %c0_i32_0 : i32, i32
  }
  func.func @transform_7(%arg0: i32) -> (i32, i32) {
    %c0_i32 = arith.constant 0 : i32
    %c0_i32_0 = arith.constant 0 : i32
    %c0_i32_1 = arith.constant 0 : i32
    return %c0_i32, %c0_i32_0 : i32, i32
  }
  func.func @transform_8(%arg0: i32) -> (i32, i32) {
    %c0_i32 = arith.constant 0 : i32
    %c0_i32_0 = arith.constant 0 : i32
    %c0_i32_1 = arith.constant 0 : i32
    return %c0_i32, %c0_i32_0 : i32, i32
  }
  func.func @transform_9(%arg0: i32) -> (i32, i32) {
    %c0_i32 = arith.constant 0 : i32
    %c0_i32_0 = arith.constant 0 : i32
    return %arg0, %c0_i32 : i32, i32
  }
}

module attributes {stable_mosaic.version = 11 : i64} {
  func.func @_mlp_adapter_kernel(%arg0: i32, %arg1: memref<256x128xbf16, #tpu.memory_space<vmem>>, %arg2: memref<128x128xbf16, #tpu.memory_space<vmem>>, %arg3: memref<1x128xf32, #tpu.memory_space<vmem>>, %arg4: memref<128x128xbf16, #tpu.memory_space<vmem>>, %arg5: memref<1x128xf32, #tpu.memory_space<vmem>>, %arg6: memref<128x128xbf16, #tpu.memory_space<vmem>>, %arg7: memref<1x128xf32, #tpu.memory_space<vmem>>, %arg8: memref<128x128xbf16, #tpu.memory_space<vmem>>, %arg9: memref<1x128xf32, #tpu.memory_space<vmem>>, %arg10: memref<256x128xf32, #tpu.memory_space<vmem>>) attributes {dimension_semantics = [#tpu.dimension_semantics<parallel>], iteration_bounds = array<i64: 1>, scalar_prefetch = 0 : i64, scratch_operands = 0 : i64, tpu.core_type = #tpu.core_type<tc>, window_params = [{transform_indices = @transform_0, window_bounds = array<i64: 256, 128>}, {pipeline_mode = #tpu.pipeline_mode<synchronous>, transform_indices = @transform_1, window_bounds = array<i64: 128, 128>}, {pipeline_mode = #tpu.pipeline_mode<synchronous>, transform_indices = @transform_2, window_bounds = array<i64: 1, 128>}, {pipeline_mode = #tpu.pipeline_mode<synchronous>, transform_indices = @transform_3, window_bounds = array<i64: 128, 128>}, {pipeline_mode = #tpu.pipeline_mode<synchronous>, transform_indices = @transform_4, window_bounds = array<i64: 1, 128>}, {pipeline_mode = #tpu.pipeline_mode<synchronous>, transform_indices = @transform_5, window_bounds = array<i64: 128, 128>}, {pipeline_mode = #tpu.pipeline_mode<synchronous>, transform_indices = @transform_6, window_bounds = array<i64: 1, 128>}, {pipeline_mode = #tpu.pipeline_mode<synchronous>, transform_indices = @transform_7, window_bounds = array<i64: 128, 128>}, {pipeline_mode = #tpu.pipeline_mode<synchronous>, transform_indices = @transform_8, window_bounds = array<i64: 1, 128>}, {transform_indices = @transform_9, window_bounds = array<i64: 256, 128>}]} {
    %c0 = arith.constant 0 : index
    %c0_0 = arith.constant 0 : index
    %0 = vector.load %arg1[%c0, %c0_0] : memref<256x128xbf16, #tpu.memory_space<vmem>>, vector<256x128xbf16>
    %c0_1 = arith.constant 0 : index
    %c0_2 = arith.constant 0 : index
    %1 = vector.load %arg2[%c0_1, %c0_2] : memref<128x128xbf16, #tpu.memory_space<vmem>>, vector<128x128xbf16>
    %cst = arith.constant dense<0.000000e+00> : vector<256x128xf32>
    %2 = tpu.matmul %0, %1, %cst {dimension_numbers = #tpu.dot_dimension_numbers<[1], [0], [0], [1], [0, 0, 1, 1], [], []>} : vector<256x128xbf16>, vector<128x128xbf16>, vector<256x128xf32> -> vector<256x128xf32>
    %c0_3 = arith.constant 0 : index
    %c0_4 = arith.constant 0 : index
    %3 = vector.load %arg3[%c0_3, %c0_4] : memref<1x128xf32, #tpu.memory_space<vmem>>, vector<1x128xf32>
    %4 = vector.broadcast %3 : vector<1x128xf32> to vector<256x128xf32>
    %5 = arith.addf %2, %4 : vector<256x128xf32>
    %cst_5 = arith.constant 5.000000e-01 : f32
    %6 = vector.broadcast %cst_5 : f32 to vector<256x128xf32>
    %7 = arith.mulf %6, %5 : vector<256x128xf32>
    %cst_6 = arith.constant 4.471500e-02 : f32
    %8 = vector.broadcast %cst_6 : f32 to vector<256x128xf32>
    %9 = arith.mulf %8, %5 : vector<256x128xf32>
    %10 = arith.mulf %9, %5 : vector<256x128xf32>
    %11 = arith.mulf %10, %5 : vector<256x128xf32>
    %12 = arith.addf %5, %11 : vector<256x128xf32>
    %cst_7 = arith.constant 0.797884583 : f32
    %13 = vector.broadcast %cst_7 : f32 to vector<256x128xf32>
    %14 = arith.mulf %13, %12 : vector<256x128xf32>
    %15 = math.tanh %14 : vector<256x128xf32>
    %cst_8 = arith.constant 1.000000e+00 : f32
    %16 = vector.broadcast %cst_8 : f32 to vector<256x128xf32>
    %17 = arith.addf %16, %15 : vector<256x128xf32>
    %18 = arith.mulf %7, %17 : vector<256x128xf32>
    %19 = arith.truncf %18 : vector<256x128xf32> to vector<256x128xbf16>
    %c0_9 = arith.constant 0 : index
    %c0_10 = arith.constant 0 : index
    %20 = vector.load %arg4[%c0_9, %c0_10] : memref<128x128xbf16, #tpu.memory_space<vmem>>, vector<128x128xbf16>
    %cst_11 = arith.constant dense<0.000000e+00> : vector<256x128xf32>
    %21 = tpu.matmul %19, %20, %cst_11 {dimension_numbers = #tpu.dot_dimension_numbers<[1], [0], [0], [1], [0, 0, 1, 1], [], []>} : vector<256x128xbf16>, vector<128x128xbf16>, vector<256x128xf32> -> vector<256x128xf32>
    %c0_12 = arith.constant 0 : index
    %c0_13 = arith.constant 0 : index
    %22 = vector.load %arg5[%c0_12, %c0_13] : memref<1x128xf32, #tpu.memory_space<vmem>>, vector<1x128xf32>
    %23 = vector.broadcast %22 : vector<1x128xf32> to vector<256x128xf32>
    %24 = arith.addf %21, %23 : vector<256x128xf32>
    %25 = arith.truncf %24 : vector<256x128xf32> to vector<256x128xbf16>
    %c0_14 = arith.constant 0 : index
    %c0_15 = arith.constant 0 : index
    %26 = vector.load %arg6[%c0_14, %c0_15] : memref<128x128xbf16, #tpu.memory_space<vmem>>, vector<128x128xbf16>
    %cst_16 = arith.constant dense<0.000000e+00> : vector<256x128xf32>
    %27 = tpu.matmul %25, %26, %cst_16 {dimension_numbers = #tpu.dot_dimension_numbers<[1], [0], [0], [1], [0, 0, 1, 1], [], []>} : vector<256x128xbf16>, vector<128x128xbf16>, vector<256x128xf32> -> vector<256x128xf32>
    %c0_17 = arith.constant 0 : index
    %c0_18 = arith.constant 0 : index
    %28 = vector.load %arg7[%c0_17, %c0_18] : memref<1x128xf32, #tpu.memory_space<vmem>>, vector<1x128xf32>
    %29 = vector.broadcast %28 : vector<1x128xf32> to vector<256x128xf32>
    %30 = arith.addf %27, %29 : vector<256x128xf32>
    %cst_19 = arith.constant 0.000000e+00 : f32
    %31 = vector.broadcast %cst_19 : f32 to vector<256x128xf32>
    %32 = arith.maximumf %30, %31 : vector<256x128xf32>
    %33 = arith.truncf %32 : vector<256x128xf32> to vector<256x128xbf16>
    %c0_20 = arith.constant 0 : index
    %c0_21 = arith.constant 0 : index
    %34 = vector.load %arg8[%c0_20, %c0_21] : memref<128x128xbf16, #tpu.memory_space<vmem>>, vector<128x128xbf16>
    %cst_22 = arith.constant dense<0.000000e+00> : vector<256x128xf32>
    %35 = tpu.matmul %33, %34, %cst_22 {dimension_numbers = #tpu.dot_dimension_numbers<[1], [0], [0], [1], [0, 0, 1, 1], [], []>} : vector<256x128xbf16>, vector<128x128xbf16>, vector<256x128xf32> -> vector<256x128xf32>
    %36 = arith.addf %24, %35 : vector<256x128xf32>
    %c0_23 = arith.constant 0 : index
    %c0_24 = arith.constant 0 : index
    %37 = vector.load %arg9[%c0_23, %c0_24] : memref<1x128xf32, #tpu.memory_space<vmem>>, vector<1x128xf32>
    %38 = vector.broadcast %37 : vector<1x128xf32> to vector<256x128xf32>
    %39 = arith.addf %36, %38 : vector<256x128xf32>
    %c0_25 = arith.constant 0 : index
    %c0_26 = arith.constant 0 : index
    %40 = vector.load %arg10[%c0_25, %c0_26] : memref<256x128xf32, #tpu.memory_space<vmem>>, vector<256x128xf32>
    tpu.vector_store %arg10[%c0_25, %c0_26], %39 {strides = array<i32>} : memref<256x128xf32, #tpu.memory_space<vmem>>, vector<256x128xf32>,
    return
  }
  func.func @transform_0(%arg0: i32) -> (i32, i32) {
    %c0_i32 = arith.constant 0 : i32
    %c0_i32_0 = arith.constant 0 : i32
    return %arg0, %c0_i32 : i32, i32
  }
  func.func @transform_1(%arg0: i32) -> (i32, i32) {
    %c0_i32 = arith.constant 0 : i32
    %c0_i32_0 = arith.constant 0 : i32
    %c0_i32_1 = arith.constant 0 : i32
    return %c0_i32, %c0_i32_0 : i32, i32
  }
  func.func @transform_2(%arg0: i32) -> (i32, i32) {
    %c0_i32 = arith.constant 0 : i32
    %c0_i32_0 = arith.constant 0 : i32
    %c0_i32_1 = arith.constant 0 : i32
    return %c0_i32, %c0_i32_0 : i32, i32
  }
  func.func @transform_3(%arg0: i32) -> (i32, i32) {
    %c0_i32 = arith.constant 0 : i32
    %c0_i32_0 = arith.constant 0 : i32
    %c0_i32_1 = arith.constant 0 : i32
    return %c0_i32, %c0_i32_0 : i32, i32
  }
  func.func @transform_4(%arg0: i32) -> (i32, i32) {
    %c0_i32 = arith.constant 0 : i32
    %c0_i32_0 = arith.constant 0 : i32
    %c0_i32_1 = arith.constant 0 : i32
    return %c0_i32, %c0_i32_0 : i32, i32
  }
  func.func @transform_5(%arg0: i32) -> (i32, i32) {
    %c0_i32 = arith.constant 0 : i32
    %c0_i32_0 = arith.constant 0 : i32
    %c0_i32_1 = arith.constant 0 : i32
    return %c0_i32, %c0_i32_0 : i32, i32
  }
  func.func @transform_6(%arg0: i32) -> (i32, i32) {
    %c0_i32 = arith.constant 0 : i32
    %c0_i32_0 = arith.constant 0 : i32
    %c0_i32_1 = arith.constant 0 : i32
    return %c0_i32, %c0_i32_0 : i32, i32
  }
  func.func @transform_7(%arg0: i32) -> (i32, i32) {
    %c0_i32 = arith.constant 0 : i32
    %c0_i32_0 = arith.constant 0 : i32
    %c0_i32_1 = arith.constant 0 : i32
    return %c0_i32, %c0_i32_0 : i32, i32
  }
  func.func @transform_8(%arg0: i32) -> (i32, i32) {
    %c0_i32 = arith.constant 0 : i32
    %c0_i32_0 = arith.constant 0 : i32
    %c0_i32_1 = arith.constant 0 : i32
    return %c0_i32, %c0_i32_0 : i32, i32
  }
  func.func @transform_9(%arg0: i32) -> (i32, i32) {
    %c0_i32 = arith.constant 0 : i32
    %c0_i32_0 = arith.constant 0 : i32
    return %arg0, %c0_i32 : i32, i32
  }
}

</mosaic_0001>

<llo_original>
// kernel: tpu_custom_call.1
$region0: #{tpu_custom_call.1}
  #allocation0 [shape = 'u32[]', space=smem, size = 0x4, offset = 0x4, fixed_abs, tag = 'smem constant byte address 0x4 - core index']
  #allocation1 [shape = 'u32[144,128]{1,0:T(1,128)}', space=vmem, size = 0x12000, scoped, tag = 'internal scratch']
  %s0 = inlined_call_operand.hbm [shape: bf16[256,128], index: 0, kind: input, shape index: {}]
  %s1 = inlined_call_operand.hbm [shape: bf16[128,128], index: 1, kind: input, shape index: {}]
  %s2 = inlined_call_operand.vmem [shape: f32[1,128], index: 2, kind: input, shape index: {}]
  %s3 = inlined_call_operand.hbm [shape: bf16[128,128], index: 3, kind: input, shape index: {}]
  %s4 = inlined_call_operand.vmem [shape: f32[1,128], index: 4, kind: input, shape index: {}]
  %s5 = inlined_call_operand.hbm [shape: bf16[128,128], index: 5, kind: input, shape index: {}]
  %s6 = inlined_call_operand.vmem [shape: f32[1,128], index: 6, kind: input, shape index: {}]
  %s7 = inlined_call_operand.hbm [shape: bf16[128,128], index: 7, kind: input, shape index: {}]
  %s8 = inlined_call_operand.vmem [shape: f32[1,128], index: 8, kind: input, shape index: {}]
  %s9 = inlined_call_operand.hbm [shape: f32[256,128], index: 9, kind: output, shape index: {}]
  %s10 = sld [smem:[#allocation0]]
  $region66: #{tpu_custom_call.1} parent=0
    _
  %s12 = ssub.s32 1, %s10
  %s13 = scalar_select 0, %s12, %s10
  $region1: #{tpu_custom_call.1} parent=0
    #allocation2 [shape = 'u8[65536]{0}', space=vmem, size = 0x10000, scoped, tag = 'input window, operand 0, single buffered']
    #allocation3 [shape = 's32[1]{0}', space=sflag, size = 0x4, scoped, tag = 'scoped memory for tpu_custom_call.1']
    #allocation4 [shape = 's32[1]{0}', space=sflag, size = 0x4, scoped, tag = 'scoped memory for tpu_custom_call.1']
    #allocation5 [shape = 'u8[32768]{0}', space=vmem, size = 0x8000, scoped, tag = 'input window, operand 1, single buffered']
    #allocation6 [shape = 's32[1]{0}', space=sflag, size = 0x4, scoped, tag = 'scoped memory for tpu_custom_call.1']
    #allocation7 [shape = 'u8[32768]{0}', space=vmem, size = 0x8000, scoped, tag = 'input window, operand 3, single buffered']
    #allocation8 [shape = 'u8[32768]{0}', space=vmem, size = 0x8000, scoped, tag = 'input window, operand 5, single buffered']
    #allocation9 [shape = 's32[1]{0}', space=sflag, size = 0x4, scoped, tag = 'scoped memory for tpu_custom_call.1']
    #allocation10 [shape = 'u8[32768]{0}', space=vmem, size = 0x8000, scoped, tag = 'input window, operand 7, single buffered']
    #allocation11 [shape = 'u8[131072]{0}', space=vmem, size = 0x20000, scoped, tag = 'output window, operand 0, single buffered']
    %14 = vsyncpa [#allocation3], 0
    %15 = vsyncpa [#allocation6], 0
    %16 = vsyncpa [#allocation9], 0
    %17 = vsyncpa [#allocation4], 0
    // Predicated region
    $region2: #{tpu_custom_call.1} parent=1 // pred_check
      _
    $region3: #{tpu_custom_call.1} parent=1 // pred_check_branch
      %19 = sbr.rel (0) target = $region5
    $region4: #{tpu_custom_call.1} parent=1 // pred_region
      %s21 = ssub.s32 2048, 2048
      %22 = vsyncadd [#allocation3], %s21
      %s23 = sshll.u32 [#allocation2], 4
      %s24 = int_to_ptr.vmem [resolvable:$true] %s23
      %29 = dma.hbm_to_vmem [thread:$0]  %s0, 2048, %s24, [#allocation3], 64, 64, 4
    $region5: #{tpu_custom_call.1} parent=1 // pred_fallthru
      _
    // Predicated region
    $region6: #{tpu_custom_call.1} parent=1 // pred_check
      _
    $region7: #{tpu_custom_call.1} parent=1 // pred_check_branch
      %31 = sbr.rel (0) target = $region9
    $region8: #{tpu_custom_call.1} parent=1 // pred_region
      %s33 = ssub.s32 1024, 1024
      %34 = vsyncadd [#allocation6], %s33
      %s35 = sshll.u32 [#allocation5], 4
      %s36 = int_to_ptr.vmem [resolvable:$true] %s35
      %41 = dma.hbm_to_vmem [thread:$0]  %s1, 1024, %s36, [#allocation6], 64, 64, 4
    $region9: #{tpu_custom_call.1} parent=1 // pred_fallthru
      _
    // Predicated region
    $region10: #{tpu_custom_call.1} parent=1 // pred_check
      _
    $region11: #{tpu_custom_call.1} parent=1 // pred_check_branch
      %43 = sbr.rel (0) target = $region13
    $region12: #{tpu_custom_call.1} parent=1 // pred_region
      _
    $region13: #{tpu_custom_call.1} parent=1 // pred_fallthru
      _
    // Predicated region
    $region14: #{tpu_custom_call.1} parent=1 // pred_check
      _
    $region15: #{tpu_custom_call.1} parent=1 // pred_check_branch
      %45 = sbr.rel (0) target = $region17
    $region16: #{tpu_custom_call.1} parent=1 // pred_region
      %s47 = ssub.s32 1024, 1024
      %48 = vsyncadd [#allocation6], %s47
      %s49 = sshll.u32 [#allocation7], 4
      %s50 = int_to_ptr.vmem [resolvable:$true] %s49
      %55 = dma.hbm_to_vmem [thread:$0]  %s3, 1024, %s50, [#allocation6], 64, 64, 4
    $region17: #{tpu_custom_call.1} parent=1 // pred_fallthru
      _
    // Predicated region
    $region18: #{tpu_custom_call.1} parent=1 // pred_check
      _
    $region19: #{tpu_custom_call.1} parent=1 // pred_check_branch
      %57 = sbr.rel (0) target = $region21
    $region20: #{tpu_custom_call.1} parent=1 // pred_region
      _
    $region21: #{tpu_custom_call.1} parent=1 // pred_fallthru
      _
    // Predicated region
    $region22: #{tpu_custom_call.1} parent=1 // pred_check
      _
    $region23: #{tpu_custom_call.1} parent=1 // pred_check_branch
      %59 = sbr.rel (0) target = $region25
    $region24: #{tpu_custom_call.1} parent=1 // pred_region
      %s61 = ssub.s32 1024, 1024
      %62 = vsyncadd [#allocation9], %s61
      %s63 = sshll.u32 [#allocation8], 4
      %s64 = int_to_ptr.vmem [resolvable:$true] %s63
      %69 = dma.hbm_to_vmem [thread:$0]  %s5, 1024, %s64, [#allocation9], 64, 64, 4
    $region25: #{tpu_custom_call.1} parent=1 // pred_fallthru
      _
    // Predicated region
    $region26: #{tpu_custom_call.1} parent=1 // pred_check
      _
    $region27: #{tpu_custom_call.1} parent=1 // pred_check_branch
      %71 = sbr.rel (0) target = $region29
    $region28: #{tpu_custom_call.1} parent=1 // pred_region
      _
    $region29: #{tpu_custom_call.1} parent=1 // pred_fallthru
      _
    // Predicated region
    $region30: #{tpu_custom_call.1} parent=1 // pred_check
      _
    $region31: #{tpu_custom_call.1} parent=1 // pred_check_branch
      %73 = sbr.rel (0) target = $region33
    $region32: #{tpu_custom_call.1} parent=1 // pred_region
      %s75 = ssub.s32 1024, 1024
      %76 = vsyncadd [#allocation9], %s75
      %s77 = sshll.u32 [#allocation10], 4
      %s78 = int_to_ptr.vmem [resolvable:$true] %s77
      %83 = dma.hbm_to_vmem [thread:$0]  %s7, 1024, %s78, [#allocation9], 64, 64, 4
    $region33: #{tpu_custom_call.1} parent=1 // pred_fallthru
      _
    // Predicated region
    $region34: #{tpu_custom_call.1} parent=1 // pred_check
      _
    $region35: #{tpu_custom_call.1} parent=1 // pred_check_branch
      %85 = sbr.rel (0) target = $region37
    $region36: #{tpu_custom_call.1} parent=1 // pred_region
      _
    $region37: #{tpu_custom_call.1} parent=1 // pred_fallthru
      _
    // Predicated region
    $region38: #{tpu_custom_call.1} parent=1 // pred_check
      _
    $region39: #{tpu_custom_call.1} parent=1 // pred_check_branch
      %87 = sbr.rel (0) target = $region41
    $region40: #{tpu_custom_call.1} parent=1 // pred_region
      %88 = dma.done [#allocation3], 2048
    $region41: #{tpu_custom_call.1} parent=1 // pred_fallthru
      _
    // Predicated region
    $region42: #{tpu_custom_call.1} parent=1 // pred_check
      _
    $region43: #{tpu_custom_call.1} parent=1 // pred_check_branch
      %90 = sbr.rel (0) target = $region45
    $region44: #{tpu_custom_call.1} parent=1 // pred_region
      %91 = dma.done [#allocation6], 1024
    $region45: #{tpu_custom_call.1} parent=1 // pred_fallthru
      _
    // Predicated region
    $region46: #{tpu_custom_call.1} parent=1 // pred_check
      _
    $region47: #{tpu_custom_call.1} parent=1 // pred_check_branch
      %93 = sbr.rel (0) target = $region49
    $region48: #{tpu_custom_call.1} parent=1 // pred_region
      %94 = dma.done [#allocation6], 1024
    $region49: #{tpu_custom_call.1} parent=1 // pred_fallthru
      _
    // Predicated region
    $region50: #{tpu_custom_call.1} parent=1 // pred_check
      _
    $region51: #{tpu_custom_call.1} parent=1 // pred_check_branch
      %96 = sbr.rel (0) target = $region53
    $region52: #{tpu_custom_call.1} parent=1 // pred_region
      %97 = dma.done [#allocation9], 1024
    $region53: #{tpu_custom_call.1} parent=1 // pred_fallthru
      _
    // Predicated region
    $region54: #{tpu_custom_call.1} parent=1 // pred_check
      _
    $region55: #{tpu_custom_call.1} parent=1 // pred_check_branch
      %99 = sbr.rel (0) target = $region57
    $region56: #{tpu_custom_call.1} parent=1 // pred_region
      %100 = dma.done [#allocation9], 1024
    $region57: #{tpu_custom_call.1} parent=1 // pred_fallthru
      _
    %v102 = vld [vmem:[#allocation2] sm:$0xf]
    %v103 = vld [vmem:[#allocation2 + $0x4] sm:$0xf]
    %v104 = vld [vmem:[#allocation2 + $0x8] sm:$0xf]
    %v105 = vld [vmem:[#allocation2 + $0xc] sm:$0xf]
    %v106 = vld [vmem:[#allocation2 + $0x10] sm:$0xf]
    %v107 = vld [vmem:[#allocation2 + $0x14] sm:$0xf]
    %v108 = vld [vmem:[#allocation2 + $0x18] sm:$0xf]
    %v109 = vld [vmem:[#allocation2 + $0x1c] sm:$0xf]
    %v110 = vld [vmem:[#allocation2 + $0x20] sm:$0xf]
    %v111 = vld [vmem:[#allocation2 + $0x24] sm:$0xf]
    %v112 = vld [vmem:[#allocation2 + $0x28] sm:$0xf]
    %v113 = vld [vmem:[#allocation2 + $0x2c] sm:$0xf]
    %v114 = vld [vmem:[#allocation2 + $0x30] sm:$0xf]
    %v115 = vld [vmem:[#allocation2 + $0x34] sm:$0xf]
    %v116 = vld [vmem:[#allocation2 + $0x38] sm:$0xf]
    %v117 = vld [vmem:[#allocation2 + $0x3c] sm:$0xf]
    %v118 = vld [vmem:[#allocation2 + $0x40] sm:$0xf]
    %v119 = vld [vmem:[#allocation2 + $0x44] sm:$0xf]
    %v120 = vld [vmem:[#allocation2 + $0x48] sm:$0xf]
    %v121 = vld [vmem:[#allocation2 + $0x4c] sm:$0xf]
    %v122 = vld [vmem:[#allocation2 + $0x50] sm:$0xf]
    %v123 = vld [vmem:[#allocation2 + $0x54] sm:$0xf]
    %v124 = vld [vmem:[#allocation2 + $0x58] sm:$0xf]
    %v125 = vld [vmem:[#allocation2 + $0x5c] sm:$0xf]
    %v126 = vld [vmem:[#allocation2 + $0x60] sm:$0xf]
    %v127 = vld [vmem:[#allocation2 + $0x64] sm:$0xf]
    %v128 = vld [vmem:[#allocation2 + $0x68] sm:$0xf]
    %v129 = vld [vmem:[#allocation2 + $0x6c] sm:$0xf]
    %v130 = vld [vmem:[#allocation2 + $0x70] sm:$0xf]
    %v131 = vld [vmem:[#allocation2 + $0x74] sm:$0xf]
    %v132 = vld [vmem:[#allocation2 + $0x78] sm:$0xf]
    %v133 = vld [vmem:[#allocation2 + $0x7c] sm:$0xf]
    %v134 = vld [vmem:[#allocation5] sm:$0xf]
    %v135 = vld [vmem:[#allocation5 + $0x4] sm:$0xf]
    %v136 = vld [vmem:[#allocation5 + $0x8] sm:$0xf]
    %v137 = vld [vmem:[#allocation5 + $0xc] sm:$0xf]
    %v138 = vld [vmem:[#allocation5 + $0x10] sm:$0xf]
    %v139 = vld [vmem:[#allocation5 + $0x14] sm:$0xf]
    %v140 = vld [vmem:[#allocation5 + $0x18] sm:$0xf]
    %v141 = vld [vmem:[#allocation5 + $0x1c] sm:$0xf]
    %v142 = vld [vmem:[#allocation5 + $0x20] sm:$0xf]
    %v143 = vld [vmem:[#allocation5 + $0x24] sm:$0xf]
    %v144 = vld [vmem:[#allocation5 + $0x28] sm:$0xf]
    %v145 = vld [vmem:[#allocation5 + $0x2c] sm:$0xf]
    %v146 = vld [vmem:[#allocation5 + $0x30] sm:$0xf]
    %v147 = vld [vmem:[#allocation5 + $0x34] sm:$0xf]
    %v148 = vld [vmem:[#allocation5 + $0x38] sm:$0xf]
    %v149 = vld [vmem:[#allocation5 + $0x3c] sm:$0xf]
    %v150 = vld [vmem:[%s2] sm:$0x1]
    %v152 = vlaneseq
    %v153 = vshrl.u32 %v152, 7
    %v154 = vsub.s32 0, %v153
    %v155 = vrot.slane %v150, %v154
    %v189 = vunpack.c.l.b16 %v102
    %v190 = vunpack.c.l.b16 %v103
    %v191 = vunpack.c.l.b16 %v104
    %v192 = vunpack.c.l.b16 %v105
    %v193 = vunpack.c.l.b16 %v106
    %v194 = vunpack.c.l.b16 %v107
    %v195 = vunpack.c.l.b16 %v108
    %v196 = vunpack.c.l.b16 %v109
    %v197 = vunpack.c.l.b16 %v110
    %v198 = vunpack.c.l.b16 %v111
    %v199 = vunpack.c.l.b16 %v112
    %v200 = vunpack.c.l.b16 %v113
    %v201 = vunpack.c.l.b16 %v114
    %v202 = vunpack.c.l.b16 %v115
    %v203 = vunpack.c.l.b16 %v116
    %v204 = vunpack.c.l.b16 %v117
    %v205 = vunpack.c.l.b16 %v118
    %v206 = vunpack.c.l.b16 %v119
    %v207 = vunpack.c.l.b16 %v120
    %v208 = vunpack.c.l.b16 %v121
    %v209 = vunpack.c.l.b16 %v122
    %v210 = vunpack.c.l.b16 %v123
    %v211 = vunpack.c.l.b16 %v124
    %v212 = vunpack.c.l.b16 %v125
    %v213 = vunpack.c.l.b16 %v126
    %v214 = vunpack.c.l.b16 %v127
    %v215 = vunpack.c.l.b16 %v128
    %v216 = vunpack.c.l.b16 %v129
    %v217 = vunpack.c.l.b16 %v130
    %v218 = vunpack.c.l.b16 %v131
    %v219 = vunpack.c.l.b16 %v132
    %v220 = vunpack.c.l.b16 %v133
    %v221 = vpack.c.b16 %v190, %v189
    %v222 = vpack.c.b16 %v192, %v191
    %v223 = vpack.c.b16 %v194, %v193
    %v224 = vpack.c.b16 %v196, %v195
    %v225 = vpack.c.b16 %v198, %v197
    %v226 = vpack.c.b16 %v200, %v199
    %v227 = vpack.c.b16 %v202, %v201
    %v228 = vpack.c.b16 %v204, %v203
    %v229 = vpack.c.b16 %v206, %v205
    %v230 = vpack.c.b16 %v208, %v207
    %v231 = vpack.c.b16 %v210, %v209
    %v232 = vpack.c.b16 %v212, %v211
    %v233 = vpack.c.b16 %v214, %v213
    %v234 = vpack.c.b16 %v216, %v215
    %v235 = vpack.c.b16 %v218, %v217
    %v236 = vpack.c.b16 %v220, %v219
    %v269 = vunpack.c.l.b16 %v134
    %v270 = vunpack.c.l.b16 %v135
    %v271 = vunpack.c.l.b16 %v136
    %v272 = vunpack.c.l.b16 %v137
    %v273 = vunpack.c.l.b16 %v138
    %v274 = vunpack.c.l.b16 %v139
    %v275 = vunpack.c.l.b16 %v140
    %v276 = vunpack.c.l.b16 %v141
    %v277 = vunpack.c.l.b16 %v142
    %v278 = vunpack.c.l.b16 %v143
    %v279 = vunpack.c.l.b16 %v144
    %v280 = vunpack.c.l.b16 %v145
    %v281 = vunpack.c.l.b16 %v146
    %v282 = vunpack.c.l.b16 %v147
    %v283 = vunpack.c.l.b16 %v148
    %v284 = vunpack.c.l.b16 %v149
    %v285 = vpack.c.b16 %v270, %v269
    %v286 = vpack.c.b16 %v272, %v271
    %v287 = vpack.c.b16 %v274, %v273
    %v288 = vpack.c.b16 %v276, %v275
    %v289 = vpack.c.b16 %v278, %v277
    %v290 = vpack.c.b16 %v280, %v279
    %v291 = vpack.c.b16 %v282, %v281
    %v292 = vpack.c.b16 %v284, %v283
    %301 = vmatprep.subr.bf16.mxu0 0
    %302 = vmatpush1.bf16.msra.mxu0 %v285
    %303 = vmatprep.subr.bf16.mxu0 0
    %304 = vmatpush1.bf16.msra.mxu0 %v286
    %305 = vmatprep.subr.bf16.mxu0 0
    %306 = vmatpush1.bf16.msra.mxu0 %v287
    %307 = vmatprep.subr.bf16.mxu0 0
    %308 = vmatpush1.bf16.msra.mxu0 %v288
    %309 = vmatprep.subr.bf16.mxu0 0
    %310 = vmatpush1.bf16.msra.mxu0 %v289
    %311 = vmatprep.subr.bf16.mxu0 0
    %312 = vmatpush1.bf16.msra.mxu0 %v290
    %313 = vmatprep.subr.bf16.mxu0 0
    %314 = vmatpush1.bf16.msra.mxu0 %v291
    %315 = vmatprep.subr.bf16.mxu0 0
    %316 = vmatpush1.bf16.msra.mxu0 %v292
    %317 = vmatprep.subr.bf16.mxu0 0
    %318 = vmatpush1.bf16.msra.mxu0 0
    %319 = vmatprep.subr.bf16.mxu0 0
    %320 = vmatpush1.bf16.msra.mxu0 0
    %321 = vmatprep.subr.bf16.mxu0 0
    %322 = vmatpush1.bf16.msra.mxu0 0
    %323 = vmatprep.subr.bf16.mxu0 0
    %324 = vmatpush1.bf16.msra.mxu0 0
    %325 = vmatprep.subr.bf16.mxu0 0
    %326 = vmatpush1.bf16.msra.mxu0 0
    %327 = vmatprep.subr.bf16.mxu0 0
    %328 = vmatpush1.bf16.msra.mxu0 0
    %329 = vmatprep.subr.bf16.mxu0 0
    %330 = vmatpush1.bf16.msra.mxu0 0
    %331 = vmatprep.subr.bf16.mxu0 0
    %332 = vmatpush1.bf16.msra.mxu0 0
    %333 = vmatprep.mubr.bf16.mxu0 0
    %334 = vmatmul.mubr.bf16.gmra.mrb[0].mxu0 %v221
    %v335 = vpop.f32.mrb[0].mxu0
    %v336 = vadd.f32 %v155, %v335
    %v337 = vpop.f32.mrb[0].mxu0
    %v338 = vpop.f32.mrb[0].mxu0
    %v339 = vadd.f32 %v155, %v338
    %v340 = vpop.f32.mrb[0].mxu0
    %341 = vmatprep.mubr.bf16.mxu0 0
    %342 = vmatmul.mubr.bf16.gmra.mrb[0].mxu0 %v222
    %v343 = vpop.f32.mrb[0].mxu0
    %v344 = vadd.f32 %v155, %v343
    %v345 = vpop.f32.mrb[0].mxu0
    %v346 = vpop.f32.mrb[0].mxu0
    %v347 = vadd.f32 %v155, %v346
    %v348 = vpop.f32.mrb[0].mxu0
    %349 = vmatprep.mubr.bf16.mxu0 0
    %350 = vmatmul.mubr.bf16.gmra.mrb[0].mxu0 %v223
    %v351 = vpop.f32.mrb[0].mxu0
    %v352 = vadd.f32 %v155, %v351
    %v353 = vpop.f32.mrb[0].mxu0
    %v354 = vpop.f32.mrb[0].mxu0
    %v355 = vadd.f32 %v155, %v354
    %v356 = vpop.f32.mrb[0].mxu0
    %357 = vmatprep.mubr.bf16.mxu0 0
    %358 = vmatmul.mubr.bf16.gmra.mrb[0].mxu0 %v224
    %v359 = vpop.f32.mrb[0].mxu0
    %v360 = vadd.f32 %v155, %v359
    %v361 = vpop.f32.mrb[0].mxu0
    %v362 = vpop.f32.mrb[0].mxu0
    %v363 = vadd.f32 %v155, %v362
    %v364 = vpop.f32.mrb[0].mxu0
    %365 = vmatprep.mubr.bf16.mxu0 0
    %366 = vmatmul.mubr.bf16.gmra.mrb[0].mxu0 %v225
    %v367 = vpop.f32.mrb[0].mxu0
    %v368 = vadd.f32 %v155, %v367
    %v369 = vpop.f32.mrb[0].mxu0
    %v370 = vpop.f32.mrb[0].mxu0
    %v371 = vadd.f32 %v155, %v370
    %v372 = vpop.f32.mrb[0].mxu0
    %373 = vmatprep.mubr.bf16.mxu0 0
    %374 = vmatmul.mubr.bf16.gmra.mrb[0].mxu0 %v226
    %v375 = vpop.f32.mrb[0].mxu0
    %v376 = vadd.f32 %v155, %v375
    %v377 = vpop.f32.mrb[0].mxu0
    %v378 = vpop.f32.mrb[0].mxu0
    %v379 = vadd.f32 %v155, %v378
    %v380 = vpop.f32.mrb[0].mxu0
    %381 = vmatprep.mubr.bf16.mxu0 0
    %382 = vmatmul.mubr.bf16.gmra.mrb[0].mxu0 %v227
    %v383 = vpop.f32.mrb[0].mxu0
    %v384 = vadd.f32 %v155, %v383
    %v385 = vpop.f32.mrb[0].mxu0
    %v386 = vpop.f32.mrb[0].mxu0
    %v387 = vadd.f32 %v155, %v386
    %v388 = vpop.f32.mrb[0].mxu0
    %389 = vmatprep.mubr.bf16.mxu0 0
    %390 = vmatmul.mubr.bf16.gmra.mrb[0].mxu0 %v228
    %v391 = vpop.f32.mrb[0].mxu0
    %v392 = vadd.f32 %v155, %v391
    %v393 = vpop.f32.mrb[0].mxu0
    %v394 = vpop.f32.mrb[0].mxu0
    %v395 = vadd.f32 %v155, %v394
    %v396 = vpop.f32.mrb[0].mxu0
    %397 = vmatprep.mubr.bf16.mxu0 0
    %398 = vmatmul.mubr.bf16.gmra.mrb[0].mxu0 %v229
    %v399 = vpop.f32.mrb[0].mxu0
    %v400 = vadd.f32 %v155, %v399
    %v401 = vpop.f32.mrb[0].mxu0
    %v402 = vpop.f32.mrb[0].mxu0
    %v403 = vadd.f32 %v155, %v402
    %v404 = vpop.f32.mrb[0].mxu0
    %405 = vmatprep.mubr.bf16.mxu0 0
    %406 = vmatmul.mubr.bf16.gmra.mrb[0].mxu0 %v230
    %v407 = vpop.f32.mrb[0].mxu0
    %v408 = vadd.f32 %v155, %v407
    %v409 = vpop.f32.mrb[0].mxu0
    %v410 = vpop.f32.mrb[0].mxu0
    %v411 = vadd.f32 %v155, %v410
    %v412 = vpop.f32.mrb[0].mxu0
    %413 = vmatprep.mubr.bf16.mxu0 0
    %414 = vmatmul.mubr.bf16.gmra.mrb[0].mxu0 %v231
    %v415 = vpop.f32.mrb[0].mxu0
    %v416 = vadd.f32 %v155, %v415
    %v417 = vpop.f32.mrb[0].mxu0
    %v418 = vpop.f32.mrb[0].mxu0
    %v419 = vadd.f32 %v155, %v418
    %v420 = vpop.f32.mrb[0].mxu0
    %421 = vmatprep.mubr.bf16.mxu0 0
    %422 = vmatmul.mubr.bf16.gmra.mrb[0].mxu0 %v232
    %v423 = vpop.f32.mrb[0].mxu0
    %v424 = vadd.f32 %v155, %v423
    %v425 = vpop.f32.mrb[0].mxu0
    %v426 = vpop.f32.mrb[0].mxu0
    %v427 = vadd.f32 %v155, %v426
    %v428 = vpop.f32.mrb[0].mxu0
    %429 = vmatprep.mubr.bf16.mxu0 0
    %430 = vmatmul.mubr.bf16.gmra.mrb[0].mxu0 %v233
    %v431 = vpop.f32.mrb[0].mxu0
    %v432 = vadd.f32 %v155, %v431
    %v433 = vpop.f32.mrb[0].mxu0
    %v434 = vpop.f32.mrb[0].mxu0
    %v435 = vadd.f32 %v155, %v434
    %v436 = vpop.f32.mrb[0].mxu0
    %437 = vmatprep.mubr.bf16.mxu0 0
    %438 = vmatmul.mubr.bf16.gmra.mrb[0].mxu0 %v234
    %v439 = vpop.f32.mrb[0].mxu0
    %v440 = vadd.f32 %v155, %v439
    %v441 = vpop.f32.mrb[0].mxu0
    %v442 = vpop.f32.mrb[0].mxu0
    %v443 = vadd.f32 %v155, %v442
    %v444 = vpop.f32.mrb[0].mxu0
    %445 = vmatprep.mubr.bf16.mxu0 0
    %446 = vmatmul.mubr.bf16.gmra.mrb[0].mxu0 %v235
    %v447 = vpop.f32.mrb[0].mxu0
    %v448 = vadd.f32 %v155, %v447
    %v449 = vpop.f32.mrb[0].mxu0
    %v450 = vpop.f32.mrb[0].mxu0
    %v451 = vadd.f32 %v155, %v450
    %v452 = vpop.f32.mrb[0].mxu0
    %453 = vmatprep.mubr.bf16.mxu0 0
    %454 = vmatmul.mubr.bf16.gmra.mrb[0].mxu0 %v236
    %v455 = vpop.f32.mrb[0].mxu0
    %v456 = vadd.f32 %v155, %v455
    %v457 = vpop.f32.mrb[0].mxu0
    %v458 = vpop.f32.mrb[0].mxu0
    %v459 = vadd.f32 %v155, %v458
    %v460 = vpop.f32.mrb[0].mxu0
    %461 = vdwg.mxu0
    %v462 = vmul.f32 %v336, 0.5
    %v463 = vmul.f32 %v339, 0.5
    %v464 = vmul.f32 %v344, 0.5
    %v465 = vmul.f32 %v347, 0.5
    %v466 = vmul.f32 %v352, 0.5
    %v467 = vmul.f32 %v355, 0.5
    %v468 = vmul.f32 %v360, 0.5
    %v469 = vmul.f32 %v363, 0.5
    %v470 = vmul.f32 %v368, 0.5
    %v471 = vmul.f32 %v371, 0.5
    %v472 = vmul.f32 %v376, 0.5
    %v473 = vmul.f32 %v379, 0.5
    %v474 = vmul.f32 %v384, 0.5
    %v475 = vmul.f32 %v387, 0.5
    %v476 = vmul.f32 %v392, 0.5
    %v477 = vmul.f32 %v395, 0.5
    %v478 = vmul.f32 %v400, 0.5
    %v479 = vmul.f32 %v403, 0.5
    %v480 = vmul.f32 %v408, 0.5
    %v481 = vmul.f32 %v411, 0.5
    %v482 = vmul.f32 %v416, 0.5
    %v483 = vmul.f32 %v419, 0.5
    %v484 = vmul.f32 %v424, 0.5
    %v485 = vmul.f32 %v427, 0.5
    %v486 = vmul.f32 %v432, 0.5
    %v487 = vmul.f32 %v435, 0.5
    %v488 = vmul.f32 %v440, 0.5
    %v489 = vmul.f32 %v443, 0.5
    %v490 = vmul.f32 %v448, 0.5
    %v491 = vmul.f32 %v451, 0.5
    %v492 = vmul.f32 %v456, 0.5
    %v493 = vmul.f32 %v459, 0.5
    %v494 = vmul.f32 %v336, 0.044715
    %v495 = vmul.f32 %v339, 0.044715
    %v496 = vmul.f32 %v344, 0.044715
    %v497 = vmul.f32 %v347, 0.044715
    %v498 = vmul.f32 %v352, 0.044715
    %v499 = vmul.f32 %v355, 0.044715
    %v500 = vmul.f32 %v360, 0.044715
    %v501 = vmul.f32 %v363, 0.044715
    %v502 = vmul.f32 %v368, 0.044715
    %v503 = vmul.f32 %v371, 0.044715
    %v504 = vmul.f32 %v376, 0.044715
    %v505 = vmul.f32 %v379, 0.044715
    %v506 = vmul.f32 %v384, 0.044715
    %v507 = vmul.f32 %v387, 0.044715
    %v508 = vmul.f32 %v392, 0.044715
    %v509 = vmul.f32 %v395, 0.044715
    %v510 = vmul.f32 %v400, 0.044715
    %v511 = vmul.f32 %v403, 0.044715
    %v512 = vmul.f32 %v408, 0.044715
    %v513 = vmul.f32 %v411, 0.044715
    %v514 = vmul.f32 %v416, 0.044715
    %v515 = vmul.f32 %v419, 0.044715
    %v516 = vmul.f32 %v424, 0.044715
    %v517 = vmul.f32 %v427, 0.044715
    %v518 = vmul.f32 %v432, 0.044715
    %v519 = vmul.f32 %v435, 0.044715
    %v520 = vmul.f32 %v440, 0.044715
    %v521 = vmul.f32 %v443, 0.044715
    %v522 = vmul.f32 %v448, 0.044715
    %v523 = vmul.f32 %v451, 0.044715
    %v524 = vmul.f32 %v456, 0.044715
    %v525 = vmul.f32 %v459, 0.044715
    %v526 = vmul.f32 %v494, %v336
    %v527 = vmul.f32 %v495, %v339
    %v528 = vmul.f32 %v496, %v344
    %v529 = vmul.f32 %v497, %v347
    %v530 = vmul.f32 %v498, %v352
    %v531 = vmul.f32 %v499, %v355
    %v532 = vmul.f32 %v500, %v360
    %v533 = vmul.f32 %v501, %v363
    %v534 = vmul.f32 %v502, %v368
    %v535 = vmul.f32 %v503, %v371
    %v536 = vmul.f32 %v504, %v376
    %v537 = vmul.f32 %v505, %v379
    %v538 = vmul.f32 %v506, %v384
    %v539 = vmul.f32 %v507, %v387
    %v540 = vmul.f32 %v508, %v392
    %v541 = vmul.f32 %v509, %v395
    %v542 = vmul.f32 %v510, %v400
    %v543 = vmul.f32 %v511, %v403
    %v544 = vmul.f32 %v512, %v408
    %v545 = vmul.f32 %v513, %v411
    %v546 = vmul.f32 %v514, %v416
    %v547 = vmul.f32 %v515, %v419
    %v548 = vmul.f32 %v516, %v424
    %v549 = vmul.f32 %v517, %v427
    %v550 = vmul.f32 %v518, %v432
    %v551 = vmul.f32 %v519, %v435
    %v552 = vmul.f32 %v520, %v440
    %v553 = vmul.f32 %v521, %v443
    %v554 = vmul.f32 %v522, %v448
    %v555 = vmul.f32 %v523, %v451
    %v556 = vmul.f32 %v524, %v456
    %v557 = vmul.f32 %v525, %v459
    %v558 = vmul.f32 %v526, %v336
    %v559 = vmul.f32 %v527, %v339
    %v560 = vmul.f32 %v528, %v344
    %v561 = vmul.f32 %v529, %v347
    %v562 = vmul.f32 %v530, %v352
    %v563 = vmul.f32 %v531, %v355
    %v564 = vmul.f32 %v532, %v360
    %v565 = vmul.f32 %v533, %v363
    %v566 = vmul.f32 %v534, %v368
    %v567 = vmul.f32 %v535, %v371
    %v568 = vmul.f32 %v536, %v376
    %v569 = vmul.f32 %v537, %v379
    %v570 = vmul.f32 %v538, %v384
    %v571 = vmul.f32 %v539, %v387
    %v572 = vmul.f32 %v540, %v392
    %v573 = vmul.f32 %v541, %v395
    %v574 = vmul.f32 %v542, %v400
    %v575 = vmul.f32 %v543, %v403
    %v576 = vmul.f32 %v544, %v408
    %v577 = vmul.f32 %v545, %v411
    %v578 = vmul.f32 %v546, %v416
    %v579 = vmul.f32 %v547, %v419
    %v580 = vmul.f32 %v548, %v424
    %v581 = vmul.f32 %v549, %v427
    %v582 = vmul.f32 %v550, %v432
    %v583 = vmul.f32 %v551, %v435
    %v584 = vmul.f32 %v552, %v440
    %v585 = vmul.f32 %v553, %v443
    %v586 = vmul.f32 %v554, %v448
    %v587 = vmul.f32 %v555, %v451
    %v588 = vmul.f32 %v556, %v456
    %v589 = vmul.f32 %v557, %v459
    %v590 = vadd.f32 %v336, %v558
    %v591 = vadd.f32 %v339, %v559
    %v592 = vadd.f32 %v344, %v560
    %v593 = vadd.f32 %v347, %v561
    %v594 = vadd.f32 %v352, %v562
    %v595 = vadd.f32 %v355, %v563
    %v596 = vadd.f32 %v360, %v564
    %v597 = vadd.f32 %v363, %v565
    %v598 = vadd.f32 %v368, %v566
    %v599 = vadd.f32 %v371, %v567
    %v600 = vadd.f32 %v376, %v568
    %v601 = vadd.f32 %v379, %v569
    %v602 = vadd.f32 %v384, %v570
    %v603 = vadd.f32 %v387, %v571
    %v604 = vadd.f32 %v392, %v572
    %v605 = vadd.f32 %v395, %v573
    %v606 = vadd.f32 %v400, %v574
    %v607 = vadd.f32 %v403, %v575
    %v608 = vadd.f32 %v408, %v576
    %v609 = vadd.f32 %v411, %v577
    %v610 = vadd.f32 %v416, %v578
    %v611 = vadd.f32 %v419, %v579
    %v612 = vadd.f32 %v424, %v580
    %v613 = vadd.f32 %v427, %v581
    %v614 = vadd.f32 %v432, %v582
    %v615 = vadd.f32 %v435, %v583
    %v616 = vadd.f32 %v440, %v584
    %v617 = vadd.f32 %v443, %v585
    %v618 = vadd.f32 %v448, %v586
    %v619 = vadd.f32 %v451, %v587
    %v620 = vadd.f32 %v456, %v588
    %v621 = vadd.f32 %v459, %v589
    %v622 = vmul.f32 %v590, 0.7978846
    %v623 = vmul.f32 %v591, 0.7978846
    %v624 = vmul.f32 %v592, 0.7978846
    %v625 = vmul.f32 %v593, 0.7978846
    %v626 = vmul.f32 %v594, 0.7978846
    %v627 = vmul.f32 %v595, 0.7978846
    %v628 = vmul.f32 %v596, 0.7978846
    %v629 = vmul.f32 %v597, 0.7978846
    %v630 = vmul.f32 %v598, 0.7978846
    %v631 = vmul.f32 %v599, 0.7978846
    %v632 = vmul.f32 %v600, 0.7978846
    %v633 = vmul.f32 %v601, 0.7978846
    %v634 = vmul.f32 %v602, 0.7978846
    %v635 = vmul.f32 %v603, 0.7978846
    %v636 = vmul.f32 %v604, 0.7978846
    %v637 = vmul.f32 %v605, 0.7978846
    %v638 = vmul.f32 %v606, 0.7978846
    %v639 = vmul.f32 %v607, 0.7978846
    %v640 = vmul.f32 %v608, 0.7978846
    %v641 = vmul.f32 %v609, 0.7978846
    %v642 = vmul.f32 %v610, 0.7978846
    %v643 = vmul.f32 %v611, 0.7978846
    %v644 = vmul.f32 %v612, 0.7978846
    %v645 = vmul.f32 %v613, 0.7978846
    %v646 = vmul.f32 %v614, 0.7978846
    %v647 = vmul.f32 %v615, 0.7978846
    %v648 = vmul.f32 %v616, 0.7978846
    %v649 = vmul.f32 %v617, 0.7978846
    %v650 = vmul.f32 %v618, 0.7978846
    %v651 = vmul.f32 %v619, 0.7978846
    %v652 = vmul.f32 %v620, 0.7978846
    %v653 = vmul.f32 %v621, 0.7978846
    %v654 = vtanh.pop %v622
    %v655 = vtanh.pop %v623
    %v656 = vtanh.pop %v624
    %v657 = vtanh.pop %v625
    %v658 = vtanh.pop %v626
    %v659 = vtanh.pop %v627
    %v660 = vtanh.pop %v628
    %v661 = vtanh.pop %v629
    %v662 = vtanh.pop %v630
    %v663 = vtanh.pop %v631
    %v664 = vtanh.pop %v632
    %v665 = vtanh.pop %v633
    %v666 = vtanh.pop %v634
    %v667 = vtanh.pop %v635
    %v668 = vtanh.pop %v636
    %v669 = vtanh.pop %v637
    %v670 = vtanh.pop %v638
    %v671 = vtanh.pop %v639
    %v672 = vtanh.pop %v640
    %v673 = vtanh.pop %v641
    %v674 = vtanh.pop %v642
    %v675 = vtanh.pop %v643
    %v676 = vtanh.pop %v644
    %v677 = vtanh.pop %v645
    %v678 = vtanh.pop %v646
    %v679 = vtanh.pop %v647
    %v680 = vtanh.pop %v648
    %v681 = vtanh.pop %v649
    %v682 = vtanh.pop %v650
    %v683 = vtanh.pop %v651
    %v684 = vtanh.pop %v652
    %v685 = vtanh.pop %v653
    %v686 = vadd.f32 %v654, 1.0
    %v687 = vadd.f32 %v655, 1.0
    %v688 = vadd.f32 %v656, 1.0
    %v689 = vadd.f32 %v657, 1.0
    %v690 = vadd.f32 %v658, 1.0
    %v691 = vadd.f32 %v659, 1.0
    %v692 = vadd.f32 %v660, 1.0
    %v693 = vadd.f32 %v661, 1.0
    %v694 = vadd.f32 %v662, 1.0
    %v695 = vadd.f32 %v663, 1.0
    %v696 = vadd.f32 %v664, 1.0
    %v697 = vadd.f32 %v665, 1.0
    %v698 = vadd.f32 %v666, 1.0
    %v699 = vadd.f32 %v667, 1.0
    %v700 = vadd.f32 %v668, 1.0
    %v701 = vadd.f32 %v669, 1.0
    %v702 = vadd.f32 %v670, 1.0
    %v703 = vadd.f32 %v671, 1.0
    %v704 = vadd.f32 %v672, 1.0
    %v705 = vadd.f32 %v673, 1.0
    %v706 = vadd.f32 %v674, 1.0
    %v707 = vadd.f32 %v675, 1.0
    %v708 = vadd.f32 %v676, 1.0
    %v709 = vadd.f32 %v677, 1.0
    %v710 = vadd.f32 %v678, 1.0
    %v711 = vadd.f32 %v679, 1.0
    %v712 = vadd.f32 %v680, 1.0
    %v713 = vadd.f32 %v681, 1.0
    %v714 = vadd.f32 %v682, 1.0
    %v715 = vadd.f32 %v683, 1.0
    %v716 = vadd.f32 %v684, 1.0
    %v717 = vadd.f32 %v685, 1.0
    %v718 = vmul.f32 %v462, %v686
    %v719 = vmul.f32 %v463, %v687
    %v720 = vmul.f32 %v464, %v688
    %v721 = vmul.f32 %v465, %v689
    %v722 = vmul.f32 %v466, %v690
    %v723 = vmul.f32 %v467, %v691
    %v724 = vmul.f32 %v468, %v692
    %v725 = vmul.f32 %v469, %v693
    %v726 = vmul.f32 %v470, %v694
    %v727 = vmul.f32 %v471, %v695
    %v728 = vmul.f32 %v472, %v696
    %v729 = vmul.f32 %v473, %v697
    %v730 = vmul.f32 %v474, %v698
    %v731 = vmul.f32 %v475, %v699
    %v732 = vmul.f32 %v476, %v700
    %v733 = vmul.f32 %v477, %v701
    %v734 = vmul.f32 %v478, %v702
    %v735 = vmul.f32 %v479, %v703
    %v736 = vmul.f32 %v480, %v704
    %v737 = vmul.f32 %v481, %v705
    %v738 = vmul.f32 %v482, %v706
    %v739 = vmul.f32 %v483, %v707
    %v740 = vmul.f32 %v484, %v708
    %v741 = vmul.f32 %v485, %v709
    %v742 = vmul.f32 %v486, %v710
    %v743 = vmul.f32 %v487, %v711
    %v744 = vmul.f32 %v488, %v712
    %v745 = vmul.f32 %v489, %v713
    %v746 = vmul.f32 %v490, %v714
    %v747 = vmul.f32 %v491, %v715
    %v748 = vmul.f32 %v492, %v716
    %v749 = vmul.f32 %v493, %v717
    %v750 = vpack.c.bf16 %v719, %v718
    %v751 = vpack.c.bf16 %v721, %v720
    %v752 = vpack.c.bf16 %v723, %v722
    %v753 = vpack.c.bf16 %v725, %v724
    %v754 = vpack.c.bf16 %v727, %v726
    %v755 = vpack.c.bf16 %v729, %v728
    %v756 = vpack.c.bf16 %v731, %v730
    %v757 = vpack.c.bf16 %v733, %v732
    %v758 = vpack.c.bf16 %v735, %v734
    %v759 = vpack.c.bf16 %v737, %v736
    %v760 = vpack.c.bf16 %v739, %v738
    %v761 = vpack.c.bf16 %v741, %v740
    %v762 = vpack.c.bf16 %v743, %v742
    %v763 = vpack.c.bf16 %v745, %v744
    %v764 = vpack.c.bf16 %v747, %v746
    %v765 = vpack.c.bf16 %v749, %v748
    %v766 = vld [vmem:[#allocation7] sm:$0xf]
    %v767 = vld [vmem:[#allocation7 + $0x4] sm:$0xf]
    %v768 = vld [vmem:[#allocation7 + $0x8] sm:$0xf]
    %v769 = vld [vmem:[#allocation7 + $0xc] sm:$0xf]
    %v770 = vld [vmem:[#allocation7 + $0x10] sm:$0xf]
    %v771 = vld [vmem:[#allocation7 + $0x14] sm:$0xf]
    %v772 = vld [vmem:[#allocation7 + $0x18] sm:$0xf]
    %v773 = vld [vmem:[#allocation7 + $0x1c] sm:$0xf]
    %v774 = vld [vmem:[#allocation7 + $0x20] sm:$0xf]
    %v775 = vld [vmem:[#allocation7 + $0x24] sm:$0xf]
    %v776 = vld [vmem:[#allocation7 + $0x28] sm:$0xf]
    %v777 = vld [vmem:[#allocation7 + $0x2c] sm:$0xf]
    %v778 = vld [vmem:[#allocation7 + $0x30] sm:$0xf]
    %v779 = vld [vmem:[#allocation7 + $0x34] sm:$0xf]
    %v780 = vld [vmem:[#allocation7 + $0x38] sm:$0xf]
    %v781 = vld [vmem:[#allocation7 + $0x3c] sm:$0xf]
    %v782 = vld [vmem:[%s4] sm:$0x1]
    %v784 = vlaneseq
    %v785 = vshrl.u32 %v784, 7
    %v786 = vsub.s32 0, %v785
    %v787 = vrot.slane %v782, %v786
    %v805 = vunpack.c.l.b16 %v766
    %v806 = vunpack.c.l.b16 %v767
    %v807 = vunpack.c.l.b16 %v768
    %v808 = vunpack.c.l.b16 %v769
    %v809 = vunpack.c.l.b16 %v770
    %v810 = vunpack.c.l.b16 %v771
    %v811 = vunpack.c.l.b16 %v772
    %v812 = vunpack.c.l.b16 %v773
    %v813 = vunpack.c.l.b16 %v774
    %v814 = vunpack.c.l.b16 %v775
    %v815 = vunpack.c.l.b16 %v776
    %v816 = vunpack.c.l.b16 %v777
    %v817 = vunpack.c.l.b16 %v778
    %v818 = vunpack.c.l.b16 %v779
    %v819 = vunpack.c.l.b16 %v780
    %v820 = vunpack.c.l.b16 %v781
    %v821 = vpack.c.b16 %v806, %v805
    %v822 = vpack.c.b16 %v808, %v807
    %v823 = vpack.c.b16 %v810, %v809
    %v824 = vpack.c.b16 %v812, %v811
    %v825 = vpack.c.b16 %v814, %v813
    %v826 = vpack.c.b16 %v816, %v815
    %v827 = vpack.c.b16 %v818, %v817
    %v828 = vpack.c.b16 %v820, %v819
    %837 = vmatprep.subr.bf16.mxu0 0
    %838 = vmatpush1.bf16.msra.mxu0 %v821
    %839 = vmatprep.subr.bf16.mxu0 0
    %840 = vmatpush1.bf16.msra.mxu0 %v822
    %841 = vmatprep.subr.bf16.mxu0 0
    %842 = vmatpush1.bf16.msra.mxu0 %v823
    %843 = vmatprep.subr.bf16.mxu0 0
    %844 = vmatpush1.bf16.msra.mxu0 %v824
    %845 = vmatprep.subr.bf16.mxu0 0
    %846 = vmatpush1.bf16.msra.mxu0 %v825
    %847 = vmatprep.subr.bf16.mxu0 0
    %848 = vmatpush1.bf16.msra.mxu0 %v826
    %849 = vmatprep.subr.bf16.mxu0 0
    %850 = vmatpush1.bf16.msra.mxu0 %v827
    %851 = vmatprep.subr.bf16.mxu0 0
    %852 = vmatpush1.bf16.msra.mxu0 %v828
    %853 = vmatprep.subr.bf16.mxu0 0
    %854 = vmatpush1.bf16.msra.mxu0 0
    %855 = vmatprep.subr.bf16.mxu0 0
    %856 = vmatpush1.bf16.msra.mxu0 0
    %857 = vmatprep.subr.bf16.mxu0 0
    %858 = vmatpush1.bf16.msra.mxu0 0
    %859 = vmatprep.subr.bf16.mxu0 0
    %860 = vmatpush1.bf16.msra.mxu0 0
    %861 = vmatprep.subr.bf16.mxu0 0
    %862 = vmatpush1.bf16.msra.mxu0 0
    %863 = vmatprep.subr.bf16.mxu0 0
    %864 = vmatpush1.bf16.msra.mxu0 0
    %865 = vmatprep.subr.bf16.mxu0 0
    %866 = vmatpush1.bf16.msra.mxu0 0
    %867 = vmatprep.subr.bf16.mxu0 0
    %868 = vmatpush1.bf16.msra.mxu0 0
    %869 = vmatprep.mubr.bf16.mxu0 0
    %870 = vmatmul.mubr.bf16.gmra.mrb[0].mxu0 %v750
    %v871 = vpop.f32.mrb[0].mxu0
    %v872 = vadd.f32 %v787, %v871
    %v873 = vpop.f32.mrb[0].mxu0
    %v874 = vpop.f32.mrb[0].mxu0
    %v875 = vadd.f32 %v787, %v874
    %v876 = vpop.f32.mrb[0].mxu0
    %877 = vmatprep.mubr.bf16.mxu0 0
    %878 = vmatmul.mubr.bf16.gmra.mrb[0].mxu0 %v751
    %v879 = vpop.f32.mrb[0].mxu0
    %v880 = vadd.f32 %v787, %v879
    %v881 = vpop.f32.mrb[0].mxu0
    %v882 = vpop.f32.mrb[0].mxu0
    %v883 = vadd.f32 %v787, %v882
    %v884 = vpop.f32.mrb[0].mxu0
    %885 = vmatprep.mubr.bf16.mxu0 0
    %886 = vmatmul.mubr.bf16.gmra.mrb[0].mxu0 %v752
    %v887 = vpop.f32.mrb[0].mxu0
    %v888 = vadd.f32 %v787, %v887
    %v889 = vpop.f32.mrb[0].mxu0
    %v890 = vpop.f32.mrb[0].mxu0
    %v891 = vadd.f32 %v787, %v890
    %v892 = vpop.f32.mrb[0].mxu0
    %893 = vmatprep.mubr.bf16.mxu0 0
    %894 = vmatmul.mubr.bf16.gmra.mrb[0].mxu0 %v753
    %v895 = vpop.f32.mrb[0].mxu0
    %v896 = vadd.f32 %v787, %v895
    %v897 = vpop.f32.mrb[0].mxu0
    %v898 = vpop.f32.mrb[0].mxu0
    %v899 = vadd.f32 %v787, %v898
    %v900 = vpop.f32.mrb[0].mxu0
    %901 = vmatprep.mubr.bf16.mxu0 0
    %902 = vmatmul.mubr.bf16.gmra.mrb[0].mxu0 %v754
    %v903 = vpop.f32.mrb[0].mxu0
    %v904 = vadd.f32 %v787, %v903
    %v905 = vpop.f32.mrb[0].mxu0
    %v906 = vpop.f32.mrb[0].mxu0
    %v907 = vadd.f32 %v787, %v906
    %v908 = vpop.f32.mrb[0].mxu0
    %909 = vmatprep.mubr.bf16.mxu0 0
    %910 = vmatmul.mubr.bf16.gmra.mrb[0].mxu0 %v755
    %v911 = vpop.f32.mrb[0].mxu0
    %v912 = vadd.f32 %v787, %v911
    %v913 = vpop.f32.mrb[0].mxu0
    %v914 = vpop.f32.mrb[0].mxu0
    %v915 = vadd.f32 %v787, %v914
    %v916 = vpop.f32.mrb[0].mxu0
    %917 = vmatprep.mubr.bf16.mxu0 0
    %918 = vmatmul.mubr.bf16.gmra.mrb[0].mxu0 %v756
    %v919 = vpop.f32.mrb[0].mxu0
    %v920 = vadd.f32 %v787, %v919
    %v921 = vpop.f32.mrb[0].mxu0
    %v922 = vpop.f32.mrb[0].mxu0
    %v923 = vadd.f32 %v787, %v922
    %v924 = vpop.f32.mrb[0].mxu0
    %925 = vmatprep.mubr.bf16.mxu0 0
    %926 = vmatmul.mubr.bf16.gmra.mrb[0].mxu0 %v757
    %v927 = vpop.f32.mrb[0].mxu0
    %v928 = vadd.f32 %v787, %v927
    %v929 = vpop.f32.mrb[0].mxu0
    %v930 = vpop.f32.mrb[0].mxu0
    %v931 = vadd.f32 %v787, %v930
    %v932 = vpop.f32.mrb[0].mxu0
    %933 = vmatprep.mubr.bf16.mxu0 0
    %934 = vmatmul.mubr.bf16.gmra.mrb[0].mxu0 %v758
    %v935 = vpop.f32.mrb[0].mxu0
    %v936 = vadd.f32 %v787, %v935
    %v937 = vpop.f32.mrb[0].mxu0
    %v938 = vpop.f32.mrb[0].mxu0
    %v939 = vadd.f32 %v787, %v938
    %v940 = vpop.f32.mrb[0].mxu0
    %941 = vmatprep.mubr.bf16.mxu0 0
    %942 = vmatmul.mubr.bf16.gmra.mrb[0].mxu0 %v759
    %v943 = vpop.f32.mrb[0].mxu0
    %v944 = vadd.f32 %v787, %v943
    %v945 = vpop.f32.mrb[0].mxu0
    %v946 = vpop.f32.mrb[0].mxu0
    %v947 = vadd.f32 %v787, %v946
    %v948 = vpop.f32.mrb[0].mxu0
    %949 = vmatprep.mubr.bf16.mxu0 0
    %950 = vmatmul.mubr.bf16.gmra.mrb[0].mxu0 %v760
    %v951 = vpop.f32.mrb[0].mxu0
    %v952 = vadd.f32 %v787, %v951
    %v953 = vpop.f32.mrb[0].mxu0
    %v954 = vpop.f32.mrb[0].mxu0
    %v955 = vadd.f32 %v787, %v954
    %v956 = vpop.f32.mrb[0].mxu0
    %957 = vmatprep.mubr.bf16.mxu0 0
    %958 = vmatmul.mubr.bf16.gmra.mrb[0].mxu0 %v761
    %v959 = vpop.f32.mrb[0].mxu0
    %v960 = vadd.f32 %v787, %v959
    %v961 = vpop.f32.mrb[0].mxu0
    %v962 = vpop.f32.mrb[0].mxu0
    %v963 = vadd.f32 %v787, %v962
    %v964 = vpop.f32.mrb[0].mxu0
    %965 = vmatprep.mubr.bf16.mxu0 0
    %966 = vmatmul.mubr.bf16.gmra.mrb[0].mxu0 %v762
    %v967 = vpop.f32.mrb[0].mxu0
    %v968 = vadd.f32 %v787, %v967
    %v969 = vpop.f32.mrb[0].mxu0
    %v970 = vpop.f32.mrb[0].mxu0
    %v971 = vadd.f32 %v787, %v970
    %v972 = vpop.f32.mrb[0].mxu0
    %973 = vmatprep.mubr.bf16.mxu0 0
    %974 = vmatmul.mubr.bf16.gmra.mrb[0].mxu0 %v763
    %v975 = vpop.f32.mrb[0].mxu0
    %v976 = vadd.f32 %v787, %v975
    %v977 = vpop.f32.mrb[0].mxu0
    %v978 = vpop.f32.mrb[0].mxu0
    %v979 = vadd.f32 %v787, %v978
    %v980 = vpop.f32.mrb[0].mxu0
    %981 = vmatprep.mubr.bf16.mxu0 0
    %982 = vmatmul.mubr.bf16.gmra.mrb[0].mxu0 %v764
    %v983 = vpop.f32.mrb[0].mxu0
    %v984 = vadd.f32 %v787, %v983
    %v985 = vpop.f32.mrb[0].mxu0
    %v986 = vpop.f32.mrb[0].mxu0
    %v987 = vadd.f32 %v787, %v986
    %v988 = vpop.f32.mrb[0].mxu0
    %989 = vmatprep.mubr.bf16.mxu0 0
    %990 = vmatmul.mubr.bf16.gmra.mrb[0].mxu0 %v765
    %v991 = vpop.f32.mrb[0].mxu0
    %v992 = vadd.f32 %v787, %v991
    %v993 = vpop.f32.mrb[0].mxu0
    %v994 = vpop.f32.mrb[0].mxu0
    %v995 = vadd.f32 %v787, %v994
    %v996 = vpop.f32.mrb[0].mxu0
    %997 = vdwg.mxu0
    %v998 = vpack.c.bf16 %v875, %v872
    %v999 = vpack.c.bf16 %v883, %v880
    %v1000 = vpack.c.bf16 %v891, %v888
    %v1001 = vpack.c.bf16 %v899, %v896
    %v1002 = vpack.c.bf16 %v907, %v904
    %v1003 = vpack.c.bf16 %v915, %v912
    %v1004 = vpack.c.bf16 %v923, %v920
    %v1005 = vpack.c.bf16 %v931, %v928
    %v1006 = vpack.c.bf16 %v939, %v936
    %v1007 = vpack.c.bf16 %v947, %v944
    %v1008 = vpack.c.bf16 %v955, %v952
    %v1009 = vpack.c.bf16 %v963, %v960
    %v1010 = vpack.c.bf16 %v971, %v968
    %v1011 = vpack.c.bf16 %v979, %v976
    %v1012 = vpack.c.bf16 %v987, %v984
    %v1013 = vpack.c.bf16 %v995, %v992
    %v1014 = vld [vmem:[#allocation8] sm:$0xf]
    %v1015 = vld [vmem:[#allocation8 + $0x4] sm:$0xf]
    %v1016 = vld [vmem:[#allocation8 + $0x8] sm:$0xf]
    %v1017 = vld [vmem:[#allocation8 + $0xc] sm:$0xf]
    %v1018 = vld [vmem:[#allocation8 + $0x10] sm:$0xf]
    %v1019 = vld [vmem:[#allocation8 + $0x14] sm:$0xf]
    %v1020 = vld [vmem:[#allocation8 + $0x18] sm:$0xf]
    %v1021 = vld [vmem:[#allocation8 + $0x1c] sm:$0xf]
    %v1022 = vld [vmem:[#allocation8 + $0x20] sm:$0xf]
    %v1023 = vld [vmem:[#allocation8 + $0x24] sm:$0xf]
    %v1024 = vld [vmem:[#allocation8 + $0x28] sm:$0xf]
    %v1025 = vld [vmem:[#allocation8 + $0x2c] sm:$0xf]
    %v1026 = vld [vmem:[#allocation8 + $0x30] sm:$0xf]
    %v1027 = vld [vmem:[#allocation8 + $0x34] sm:$0xf]
    %v1028 = vld [vmem:[#allocation8 + $0x38] sm:$0xf]
    %v1029 = vld [vmem:[#allocation8 + $0x3c] sm:$0xf]
    %v1030 = vld [vmem:[%s6] sm:$0x1]
    %v1032 = vlaneseq
    %v1033 = vshrl.u32 %v1032, 7
    %v1034 = vsub.s32 0, %v1033
    %v1035 = vrot.slane %v1030, %v1034
    %v1053 = vunpack.c.l.b16 %v1014
    %v1054 = vunpack.c.l.b16 %v1015
    %v1055 = vunpack.c.l.b16 %v1016
    %v1056 = vunpack.c.l.b16 %v1017
    %v1057 = vunpack.c.l.b16 %v1018
    %v1058 = vunpack.c.l.b16 %v1019
    %v1059 = vunpack.c.l.b16 %v1020
    %v1060 = vunpack.c.l.b16 %v1021
    %v1061 = vunpack.c.l.b16 %v1022
    %v1062 = vunpack.c.l.b16 %v1023
    %v1063 = vunpack.c.l.b16 %v1024
    %v1064 = vunpack.c.l.b16 %v1025
    %v1065 = vunpack.c.l.b16 %v1026
    %v1066 = vunpack.c.l.b16 %v1027
    %v1067 = vunpack.c.l.b16 %v1028
    %v1068 = vunpack.c.l.b16 %v1029
    %v1069 = vpack.c.b16 %v1054, %v1053
    %v1070 = vpack.c.b16 %v1056, %v1055
    %v1071 = vpack.c.b16 %v1058, %v1057
    %v1072 = vpack.c.b16 %v1060, %v1059
    %v1073 = vpack.c.b16 %v1062, %v1061
    %v1074 = vpack.c.b16 %v1064, %v1063
    %v1075 = vpack.c.b16 %v1066, %v1065
    %v1076 = vpack.c.b16 %v1068, %v1067
    %1085 = vmatprep.subr.bf16.mxu0 0
    %1086 = vmatpush1.bf16.msra.mxu0 %v1069
    %1087 = vmatprep.subr.bf16.mxu0 0
    %1088 = vmatpush1.bf16.msra.mxu0 %v1070
    %1089 = vmatprep.subr.bf16.mxu0 0
    %1090 = vmatpush1.bf16.msra.mxu0 %v1071
    %1091 = vmatprep.subr.bf16.mxu0 0
    %1092 = vmatpush1.bf16.msra.mxu0 %v1072
    %1093 = vmatprep.subr.bf16.mxu0 0
    %1094 = vmatpush1.bf16.msra.mxu0 %v1073
    %1095 = vmatprep.subr.bf16.mxu0 0
    %1096 = vmatpush1.bf16.msra.mxu0 %v1074
    %1097 = vmatprep.subr.bf16.mxu0 0
    %1098 = vmatpush1.bf16.msra.mxu0 %v1075
    %1099 = vmatprep.subr.bf16.mxu0 0
    %1100 = vmatpush1.bf16.msra.mxu0 %v1076
    %1101 = vmatprep.subr.bf16.mxu0 0
    %1102 = vmatpush1.bf16.msra.mxu0 0
    %1103 = vmatprep.subr.bf16.mxu0 0
    %1104 = vmatpush1.bf16.msra.mxu0 0
    %1105 = vmatprep.subr.bf16.mxu0 0
    %1106 = vmatpush1.bf16.msra.mxu0 0
    %1107 = vmatprep.subr.bf16.mxu0 0
    %1108 = vmatpush1.bf16.msra.mxu0 0
    %1109 = vmatprep.subr.bf16.mxu0 0
    %1110 = vmatpush1.bf16.msra.mxu0 0
    %1111 = vmatprep.subr.bf16.mxu0 0
    %1112 = vmatpush1.bf16.msra.mxu0 0
    %1113 = vmatprep.subr.bf16.mxu0 0
    %1114 = vmatpush1.bf16.msra.mxu0 0
    %1115 = vmatprep.subr.bf16.mxu0 0
    %1116 = vmatpush1.bf16.msra.mxu0 0
    %1117 = vmatprep.mubr.bf16.mxu0 0
    %1118 = vmatmul.mubr.bf16.gmra.mrb[0].mxu0 %v998
    %v1119 = vpop.f32.mrb[0].mxu0
    %v1120 = vadd.f32 %v1035, %v1119
    %v1121 = vpop.f32.mrb[0].mxu0
    %v1122 = vpop.f32.mrb[0].mxu0
    %v1123 = vadd.f32 %v1035, %v1122
    %v1124 = vpop.f32.mrb[0].mxu0
    %1125 = vmatprep.mubr.bf16.mxu0 0
    %1126 = vmatmul.mubr.bf16.gmra.mrb[0].mxu0 %v999
    %v1127 = vpop.f32.mrb[0].mxu0
    %v1128 = vadd.f32 %v1035, %v1127
    %v1129 = vpop.f32.mrb[0].mxu0
    %v1130 = vpop.f32.mrb[0].mxu0
    %v1131 = vadd.f32 %v1035, %v1130
    %v1132 = vpop.f32.mrb[0].mxu0
    %1133 = vmatprep.mubr.bf16.mxu0 0
    %1134 = vmatmul.mubr.bf16.gmra.mrb[0].mxu0 %v1000
    %v1135 = vpop.f32.mrb[0].mxu0
    %v1136 = vadd.f32 %v1035, %v1135
    %v1137 = vpop.f32.mrb[0].mxu0
    %v1138 = vpop.f32.mrb[0].mxu0
    %v1139 = vadd.f32 %v1035, %v1138
    %v1140 = vpop.f32.mrb[0].mxu0
    %1141 = vmatprep.mubr.bf16.mxu0 0
    %1142 = vmatmul.mubr.bf16.gmra.mrb[0].mxu0 %v1001
    %v1143 = vpop.f32.mrb[0].mxu0
    %v1144 = vadd.f32 %v1035, %v1143
    %v1145 = vpop.f32.mrb[0].mxu0
    %v1146 = vpop.f32.mrb[0].mxu0
    %v1147 = vadd.f32 %v1035, %v1146
    %v1148 = vpop.f32.mrb[0].mxu0
    %1149 = vmatprep.mubr.bf16.mxu0 0
    %1150 = vmatmul.mubr.bf16.gmra.mrb[0].mxu0 %v1002
    %v1151 = vpop.f32.mrb[0].mxu0
    %v1152 = vadd.f32 %v1035, %v1151
    %v1153 = vpop.f32.mrb[0].mxu0
    %v1154 = vpop.f32.mrb[0].mxu0
    %v1155 = vadd.f32 %v1035, %v1154
    %v1156 = vpop.f32.mrb[0].mxu0
    %1157 = vmatprep.mubr.bf16.mxu0 0
    %1158 = vmatmul.mubr.bf16.gmra.mrb[0].mxu0 %v1003
    %v1159 = vpop.f32.mrb[0].mxu0
    %v1160 = vadd.f32 %v1035, %v1159
    %v1161 = vpop.f32.mrb[0].mxu0
    %v1162 = vpop.f32.mrb[0].mxu0
    %v1163 = vadd.f32 %v1035, %v1162
    %v1164 = vpop.f32.mrb[0].mxu0
    %1165 = vmatprep.mubr.bf16.mxu0 0
    %1166 = vmatmul.mubr.bf16.gmra.mrb[0].mxu0 %v1004
    %v1167 = vpop.f32.mrb[0].mxu0
    %v1168 = vadd.f32 %v1035, %v1167
    %v1169 = vpop.f32.mrb[0].mxu0
    %v1170 = vpop.f32.mrb[0].mxu0
    %v1171 = vadd.f32 %v1035, %v1170
    %v1172 = vpop.f32.mrb[0].mxu0
    %1173 = vmatprep.mubr.bf16.mxu0 0
    %1174 = vmatmul.mubr.bf16.gmra.mrb[0].mxu0 %v1005
    %v1175 = vpop.f32.mrb[0].mxu0
    %v1176 = vadd.f32 %v1035, %v1175
    %v1177 = vpop.f32.mrb[0].mxu0
    %v1178 = vpop.f32.mrb[0].mxu0
    %v1179 = vadd.f32 %v1035, %v1178
    %v1180 = vpop.f32.mrb[0].mxu0
    %1181 = vmatprep.mubr.bf16.mxu0 0
    %1182 = vmatmul.mubr.bf16.gmra.mrb[0].mxu0 %v1006
    %v1183 = vpop.f32.mrb[0].mxu0
    %v1184 = vadd.f32 %v1035, %v1183
    %v1185 = vpop.f32.mrb[0].mxu0
    %v1186 = vpop.f32.mrb[0].mxu0
    %v1187 = vadd.f32 %v1035, %v1186
    %v1188 = vpop.f32.mrb[0].mxu0
    %1189 = vmatprep.mubr.bf16.mxu0 0
    %1190 = vmatmul.mubr.bf16.gmra.mrb[0].mxu0 %v1007
    %v1191 = vpop.f32.mrb[0].mxu0
    %v1192 = vadd.f32 %v1035, %v1191
    %v1193 = vpop.f32.mrb[0].mxu0
    %v1194 = vpop.f32.mrb[0].mxu0
    %v1195 = vadd.f32 %v1035, %v1194
    %v1196 = vpop.f32.mrb[0].mxu0
    %1197 = vmatprep.mubr.bf16.mxu0 0
    %1198 = vmatmul.mubr.bf16.gmra.mrb[0].mxu0 %v1008
    %v1199 = vpop.f32.mrb[0].mxu0
    %v1200 = vadd.f32 %v1035, %v1199
    %v1201 = vpop.f32.mrb[0].mxu0
    %v1202 = vpop.f32.mrb[0].mxu0
    %v1203 = vadd.f32 %v1035, %v1202
    %v1204 = vpop.f32.mrb[0].mxu0
    %1205 = vmatprep.mubr.bf16.mxu0 0
    %1206 = vmatmul.mubr.bf16.gmra.mrb[0].mxu0 %v1009
    %v1207 = vpop.f32.mrb[0].mxu0
    %v1208 = vadd.f32 %v1035, %v1207
    %v1209 = vpop.f32.mrb[0].mxu0
    %v1210 = vpop.f32.mrb[0].mxu0
    %v1211 = vadd.f32 %v1035, %v1210
    %v1212 = vpop.f32.mrb[0].mxu0
    %1213 = vmatprep.mubr.bf16.mxu0 0
    %1214 = vmatmul.mubr.bf16.gmra.mrb[0].mxu0 %v1010
    %v1215 = vpop.f32.mrb[0].mxu0
    %v1216 = vadd.f32 %v1035, %v1215
    %v1217 = vpop.f32.mrb[0].mxu0
    %v1218 = vpop.f32.mrb[0].mxu0
    %v1219 = vadd.f32 %v1035, %v1218
    %v1220 = vpop.f32.mrb[0].mxu0
    %1221 = vmatprep.mubr.bf16.mxu0 0
    %1222 = vmatmul.mubr.bf16.gmra.mrb[0].mxu0 %v1011
    %v1223 = vpop.f32.mrb[0].mxu0
    %v1224 = vadd.f32 %v1035, %v1223
    %v1225 = vpop.f32.mrb[0].mxu0
    %v1226 = vpop.f32.mrb[0].mxu0
    %v1227 = vadd.f32 %v1035, %v1226
    %v1228 = vpop.f32.mrb[0].mxu0
    %1229 = vmatprep.mubr.bf16.mxu0 0
    %1230 = vmatmul.mubr.bf16.gmra.mrb[0].mxu0 %v1012
    %v1231 = vpop.f32.mrb[0].mxu0
    %v1232 = vadd.f32 %v1035, %v1231
    %v1233 = vpop.f32.mrb[0].mxu0
    %v1234 = vpop.f32.mrb[0].mxu0
    %v1235 = vadd.f32 %v1035, %v1234
    %v1236 = vpop.f32.mrb[0].mxu0
    %1237 = vmatprep.mubr.bf16.mxu0 0
    %1238 = vmatmul.mubr.bf16.gmra.mrb[0].mxu0 %v1013
    %v1239 = vpop.f32.mrb[0].mxu0
    %v1240 = vadd.f32 %v1035, %v1239
    %v1241 = vpop.f32.mrb[0].mxu0
    %v1242 = vpop.f32.mrb[0].mxu0
    %v1243 = vadd.f32 %v1035, %v1242
    %v1244 = vpop.f32.mrb[0].mxu0
    %1245 = vdwg.mxu0
    %v1246 = vmax.f32 %v1120, 0.0
    %v1247 = vmax.f32 %v1123, 0.0
    %v1248 = vmax.f32 %v1128, 0.0
    %v1249 = vmax.f32 %v1131, 0.0
    %v1250 = vmax.f32 %v1136, 0.0
    %v1251 = vmax.f32 %v1139, 0.0
    %v1252 = vmax.f32 %v1144, 0.0
    %v1253 = vmax.f32 %v1147, 0.0
    %v1254 = vmax.f32 %v1152, 0.0
    %v1255 = vmax.f32 %v1155, 0.0
    %v1256 = vmax.f32 %v1160, 0.0
    %v1257 = vmax.f32 %v1163, 0.0
    %v1258 = vmax.f32 %v1168, 0.0
    %v1259 = vmax.f32 %v1171, 0.0
    %v1260 = vmax.f32 %v1176, 0.0
    %v1261 = vmax.f32 %v1179, 0.0
    %v1262 = vmax.f32 %v1184, 0.0
    %v1263 = vmax.f32 %v1187, 0.0
    %v1264 = vmax.f32 %v1192, 0.0
    %v1265 = vmax.f32 %v1195, 0.0
    %v1266 = vmax.f32 %v1200, 0.0
    %v1267 = vmax.f32 %v1203, 0.0
    %v1268 = vmax.f32 %v1208, 0.0
    %v1269 = vmax.f32 %v1211, 0.0
    %v1270 = vmax.f32 %v1216, 0.0
    %v1271 = vmax.f32 %v1219, 0.0
    %v1272 = vmax.f32 %v1224, 0.0
    %v1273 = vmax.f32 %v1227, 0.0
    %v1274 = vmax.f32 %v1232, 0.0
    %v1275 = vmax.f32 %v1235, 0.0
    %v1276 = vmax.f32 %v1240, 0.0
    %v1277 = vmax.f32 %v1243, 0.0
    %v1278 = vpack.c.bf16 %v1247, %v1246
    %v1279 = vpack.c.bf16 %v1249, %v1248
    %v1280 = vpack.c.bf16 %v1251, %v1250
    %v1281 = vpack.c.bf16 %v1253, %v1252
    %v1282 = vpack.c.bf16 %v1255, %v1254
    %v1283 = vpack.c.bf16 %v1257, %v1256
    %v1284 = vpack.c.bf16 %v1259, %v1258
    %v1285 = vpack.c.bf16 %v1261, %v1260
    %v1286 = vpack.c.bf16 %v1263, %v1262
    %v1287 = vpack.c.bf16 %v1265, %v1264
    %v1288 = vpack.c.bf16 %v1267, %v1266
    %v1289 = vpack.c.bf16 %v1269, %v1268
    %v1290 = vpack.c.bf16 %v1271, %v1270
    %v1291 = vpack.c.bf16 %v1273, %v1272
    %v1292 = vpack.c.bf16 %v1275, %v1274
    %v1293 = vpack.c.bf16 %v1277, %v1276
    %v1294 = vld [vmem:[#allocation10] sm:$0xf]
    %v1295 = vld [vmem:[#allocation10 + $0x4] sm:$0xf]
    %v1296 = vld [vmem:[#allocation10 + $0x8] sm:$0xf]
    %v1297 = vld [vmem:[#allocation10 + $0xc] sm:$0xf]
    %v1298 = vld [vmem:[#allocation10 + $0x10] sm:$0xf]
    %v1299 = vld [vmem:[#allocation10 + $0x14] sm:$0xf]
    %v1300 = vld [vmem:[#allocation10 + $0x18] sm:$0xf]
    %v1301 = vld [vmem:[#allocation10 + $0x1c] sm:$0xf]
    %v1302 = vld [vmem:[#allocation10 + $0x20] sm:$0xf]
    %v1303 = vld [vmem:[#allocation10 + $0x24] sm:$0xf]
    %v1304 = vld [vmem:[#allocation10 + $0x28] sm:$0xf]
    %v1305 = vld [vmem:[#allocation10 + $0x2c] sm:$0xf]
    %v1306 = vld [vmem:[#allocation10 + $0x30] sm:$0xf]
    %v1307 = vld [vmem:[#allocation10 + $0x34] sm:$0xf]
    %v1308 = vld [vmem:[#allocation10 + $0x38] sm:$0xf]
    %v1309 = vld [vmem:[#allocation10 + $0x3c] sm:$0xf]
    %v1326 = vunpack.c.l.b16 %v1294
    %v1327 = vunpack.c.l.b16 %v1295
    %v1328 = vunpack.c.l.b16 %v1296
    %v1329 = vunpack.c.l.b16 %v1297
    %v1330 = vunpack.c.l.b16 %v1298
    %v1331 = vunpack.c.l.b16 %v1299
    %v1332 = vunpack.c.l.b16 %v1300
    %v1333 = vunpack.c.l.b16 %v1301
    %v1334 = vunpack.c.l.b16 %v1302
    %v1335 = vunpack.c.l.b16 %v1303
    %v1336 = vunpack.c.l.b16 %v1304
    %v1337 = vunpack.c.l.b16 %v1305
    %v1338 = vunpack.c.l.b16 %v1306
    %v1339 = vunpack.c.l.b16 %v1307
    %v1340 = vunpack.c.l.b16 %v1308
    %v1341 = vunpack.c.l.b16 %v1309
    %v1342 = vpack.c.b16 %v1327, %v1326
    %v1343 = vpack.c.b16 %v1329, %v1328
    %v1344 = vpack.c.b16 %v1331, %v1330
    %v1345 = vpack.c.b16 %v1333, %v1332
    %v1346 = vpack.c.b16 %v1335, %v1334
    %v1347 = vpack.c.b16 %v1337, %v1336
    %v1348 = vpack.c.b16 %v1339, %v1338
    %v1349 = vpack.c.b16 %v1341, %v1340
    %1358 = vmatprep.subr.bf16.mxu0 0
    %1359 = vmatpush1.bf16.msra.mxu0 %v1342
    %1360 = vmatprep.subr.bf16.mxu0 0
    %1361 = vmatpush1.bf16.msra.mxu0 %v1343
    %1362 = vmatprep.subr.bf16.mxu0 0
    %1363 = vmatpush1.bf16.msra.mxu0 %v1344
    %1364 = vmatprep.subr.bf16.mxu0 0
    %1365 = vmatpush1.bf16.msra.mxu0 %v1345
    %1366 = vmatprep.subr.bf16.mxu0 0
    %1367 = vmatpush1.bf16.msra.mxu0 %v1346
    %1368 = vmatprep.subr.bf16.mxu0 0
    %1369 = vmatpush1.bf16.msra.mxu0 %v1347
    %1370 = vmatprep.subr.bf16.mxu0 0
    %1371 = vmatpush1.bf16.msra.mxu0 %v1348
    %1372 = vmatprep.subr.bf16.mxu0 0
    %1373 = vmatpush1.bf16.msra.mxu0 %v1349
    %1374 = vmatprep.subr.bf16.mxu0 0
    %1375 = vmatpush1.bf16.msra.mxu0 0
    %1376 = vmatprep.subr.bf16.mxu0 0
    %1377 = vmatpush1.bf16.msra.mxu0 0
    %1378 = vmatprep.subr.bf16.mxu0 0
    %1379 = vmatpush1.bf16.msra.mxu0 0
    %1380 = vmatprep.subr.bf16.mxu0 0
    %1381 = vmatpush1.bf16.msra.mxu0 0
    %1382 = vmatprep.subr.bf16.mxu0 0
    %1383 = vmatpush1.bf16.msra.mxu0 0
    %1384 = vmatprep.subr.bf16.mxu0 0
    %1385 = vmatpush1.bf16.msra.mxu0 0
    %1386 = vmatprep.subr.bf16.mxu0 0
    %1387 = vmatpush1.bf16.msra.mxu0 0
    %1388 = vmatprep.subr.bf16.mxu0 0
    %1389 = vmatpush1.bf16.msra.mxu0 0
    %1390 = vmatprep.mubr.bf16.mxu0 0
    %1391 = vmatmul.mubr.bf16.gmra.mrb[0].mxu0 %v1278
    %v1392 = vpop.f32.mrb[0].mxu0
    %v1393 = vadd.f32 0.0, %v1392
    %v1394 = vpop.f32.mrb[0].mxu0
    %v1395 = vpop.f32.mrb[0].mxu0
    %v1396 = vadd.f32 0.0, %v1395
    %v1397 = vpop.f32.mrb[0].mxu0
    %1398 = vmatprep.mubr.bf16.mxu0 0
    %1399 = vmatmul.mubr.bf16.gmra.mrb[0].mxu0 %v1279
    %v1400 = vpop.f32.mrb[0].mxu0
    %v1401 = vadd.f32 0.0, %v1400
    %v1402 = vpop.f32.mrb[0].mxu0
    %v1403 = vpop.f32.mrb[0].mxu0
    %v1404 = vadd.f32 0.0, %v1403
    %v1405 = vpop.f32.mrb[0].mxu0
    %1406 = vmatprep.mubr.bf16.mxu0 0
    %1407 = vmatmul.mubr.bf16.gmra.mrb[0].mxu0 %v1280
    %v1408 = vpop.f32.mrb[0].mxu0
    %v1409 = vadd.f32 0.0, %v1408
    %v1410 = vpop.f32.mrb[0].mxu0
    %v1411 = vpop.f32.mrb[0].mxu0
    %v1412 = vadd.f32 0.0, %v1411
    %v1413 = vpop.f32.mrb[0].mxu0
    %1414 = vmatprep.mubr.bf16.mxu0 0
    %1415 = vmatmul.mubr.bf16.gmra.mrb[0].mxu0 %v1281
    %v1416 = vpop.f32.mrb[0].mxu0
    %v1417 = vadd.f32 0.0, %v1416
    %v1418 = vpop.f32.mrb[0].mxu0
    %v1419 = vpop.f32.mrb[0].mxu0
    %v1420 = vadd.f32 0.0, %v1419
    %v1421 = vpop.f32.mrb[0].mxu0
    %1422 = vmatprep.mubr.bf16.mxu0 0
    %1423 = vmatmul.mubr.bf16.gmra.mrb[0].mxu0 %v1282
    %v1424 = vpop.f32.mrb[0].mxu0
    %v1425 = vadd.f32 0.0, %v1424
    %v1426 = vpop.f32.mrb[0].mxu0
    %v1427 = vpop.f32.mrb[0].mxu0
    %v1428 = vadd.f32 0.0, %v1427
    %v1429 = vpop.f32.mrb[0].mxu0
    %1430 = vmatprep.mubr.bf16.mxu0 0
    %1431 = vmatmul.mubr.bf16.gmra.mrb[0].mxu0 %v1283
    %v1432 = vpop.f32.mrb[0].mxu0
    %v1433 = vadd.f32 0.0, %v1432
    %v1434 = vpop.f32.mrb[0].mxu0
    %v1435 = vpop.f32.mrb[0].mxu0
    %v1436 = vadd.f32 0.0, %v1435
    %v1437 = vpop.f32.mrb[0].mxu0
    %1438 = vmatprep.mubr.bf16.mxu0 0
    %1439 = vmatmul.mubr.bf16.gmra.mrb[0].mxu0 %v1284
    %v1440 = vpop.f32.mrb[0].mxu0
    %v1441 = vadd.f32 0.0, %v1440
    %v1442 = vpop.f32.mrb[0].mxu0
    %v1443 = vpop.f32.mrb[0].mxu0
    %v1444 = vadd.f32 0.0, %v1443
    %v1445 = vpop.f32.mrb[0].mxu0
    %1446 = vmatprep.mubr.bf16.mxu0 0
    %1447 = vmatmul.mubr.bf16.gmra.mrb[0].mxu0 %v1285
    %v1448 = vpop.f32.mrb[0].mxu0
    %v1449 = vadd.f32 0.0, %v1448
    %v1450 = vpop.f32.mrb[0].mxu0
    %v1451 = vpop.f32.mrb[0].mxu0
    %v1452 = vadd.f32 0.0, %v1451
    %v1453 = vpop.f32.mrb[0].mxu0
    %1454 = vmatprep.mubr.bf16.mxu0 0
    %1455 = vmatmul.mubr.bf16.gmra.mrb[0].mxu0 %v1286
    %v1456 = vpop.f32.mrb[0].mxu0
    %v1457 = vadd.f32 0.0, %v1456
    %v1458 = vpop.f32.mrb[0].mxu0
    %v1459 = vpop.f32.mrb[0].mxu0
    %v1460 = vadd.f32 0.0, %v1459
    %v1461 = vpop.f32.mrb[0].mxu0
    %1462 = vmatprep.mubr.bf16.mxu0 0
    %1463 = vmatmul.mubr.bf16.gmra.mrb[0].mxu0 %v1287
    %v1464 = vpop.f32.mrb[0].mxu0
    %v1465 = vadd.f32 0.0, %v1464
    %v1466 = vpop.f32.mrb[0].mxu0
    %v1467 = vpop.f32.mrb[0].mxu0
    %v1468 = vadd.f32 0.0, %v1467
    %v1469 = vpop.f32.mrb[0].mxu0
    %1470 = vmatprep.mubr.bf16.mxu0 0
    %1471 = vmatmul.mubr.bf16.gmra.mrb[0].mxu0 %v1288
    %v1472 = vpop.f32.mrb[0].mxu0
    %v1473 = vadd.f32 0.0, %v1472
    %v1474 = vpop.f32.mrb[0].mxu0
    %v1475 = vpop.f32.mrb[0].mxu0
    %v1476 = vadd.f32 0.0, %v1475
    %v1477 = vpop.f32.mrb[0].mxu0
    %1478 = vmatprep.mubr.bf16.mxu0 0
    %1479 = vmatmul.mubr.bf16.gmra.mrb[0].mxu0 %v1289
    %v1480 = vpop.f32.mrb[0].mxu0
    %v1481 = vadd.f32 0.0, %v1480
    %v1482 = vpop.f32.mrb[0].mxu0
    %v1483 = vpop.f32.mrb[0].mxu0
    %v1484 = vadd.f32 0.0, %v1483
    %v1485 = vpop.f32.mrb[0].mxu0
    %1486 = vmatprep.mubr.bf16.mxu0 0
    %1487 = vmatmul.mubr.bf16.gmra.mrb[0].mxu0 %v1290
    %v1488 = vpop.f32.mrb[0].mxu0
    %v1489 = vadd.f32 0.0, %v1488
    %v1490 = vpop.f32.mrb[0].mxu0
    %v1491 = vpop.f32.mrb[0].mxu0
    %v1492 = vadd.f32 0.0, %v1491
    %v1493 = vpop.f32.mrb[0].mxu0
    %1494 = vmatprep.mubr.bf16.mxu0 0
    %1495 = vmatmul.mubr.bf16.gmra.mrb[0].mxu0 %v1291
    %v1496 = vpop.f32.mrb[0].mxu0
    %v1497 = vadd.f32 0.0, %v1496
    %v1498 = vpop.f32.mrb[0].mxu0
    %v1499 = vpop.f32.mrb[0].mxu0
    %v1500 = vadd.f32 0.0, %v1499
    %v1501 = vpop.f32.mrb[0].mxu0
    %1502 = vmatprep.mubr.bf16.mxu0 0
    %1503 = vmatmul.mubr.bf16.gmra.mrb[0].mxu0 %v1292
    %v1504 = vpop.f32.mrb[0].mxu0
    %v1505 = vadd.f32 0.0, %v1504
    %v1506 = vpop.f32.mrb[0].mxu0
    %v1507 = vpop.f32.mrb[0].mxu0
    %v1508 = vadd.f32 0.0, %v1507
    %v1509 = vpop.f32.mrb[0].mxu0
    %1510 = vmatprep.mubr.bf16.mxu0 0
    %1511 = vmatmul.mubr.bf16.gmra.mrb[0].mxu0 %v1293
    %v1512 = vpop.f32.mrb[0].mxu0
    %v1513 = vadd.f32 0.0, %v1512
    %v1514 = vpop.f32.mrb[0].mxu0
    %v1515 = vpop.f32.mrb[0].mxu0
    %v1516 = vadd.f32 0.0, %v1515
    %v1517 = vpop.f32.mrb[0].mxu0
    %1518 = vdwg.mxu0
    %v1519 = vadd.f32 %v872, %v1393
    %v1520 = vadd.f32 %v875, %v1396
    %v1521 = vadd.f32 %v880, %v1401
    %v1522 = vadd.f32 %v883, %v1404
    %v1523 = vadd.f32 %v888, %v1409
    %v1524 = vadd.f32 %v891, %v1412
    %v1525 = vadd.f32 %v896, %v1417
    %v1526 = vadd.f32 %v899, %v1420
    %v1527 = vadd.f32 %v904, %v1425
    %v1528 = vadd.f32 %v907, %v1428
    %v1529 = vadd.f32 %v912, %v1433
    %v1530 = vadd.f32 %v915, %v1436
    %v1531 = vadd.f32 %v920, %v1441
    %v1532 = vadd.f32 %v923, %v1444
    %v1533 = vadd.f32 %v928, %v1449
    %v1534 = vadd.f32 %v931, %v1452
    %v1535 = vadd.f32 %v936, %v1457
    %v1536 = vadd.f32 %v939, %v1460
    %v1537 = vadd.f32 %v944, %v1465
    %v1538 = vadd.f32 %v947, %v1468
    %v1539 = vadd.f32 %v952, %v1473
    %v1540 = vadd.f32 %v955, %v1476
    %v1541 = vadd.f32 %v960, %v1481
    %v1542 = vadd.f32 %v963, %v1484
    %v1543 = vadd.f32 %v968, %v1489
    %v1544 = vadd.f32 %v971, %v1492
    %v1545 = vadd.f32 %v976, %v1497
    %v1546 = vadd.f32 %v979, %v1500
    %v1547 = vadd.f32 %v984, %v1505
    %v1548 = vadd.f32 %v987, %v1508
    %v1549 = vadd.f32 %v992, %v1513
    %v1550 = vadd.f32 %v995, %v1516
    %v1551 = vld [vmem:[%s8] sm:$0x1]
    %v1553 = vlaneseq
    %v1554 = vshrl.u32 %v1553, 7
    %v1555 = vsub.s32 0, %v1554
    %v1556 = vrot.slane %v1551, %v1555
    %v1558 = vadd.f32 %v1519, %v1556
    %v1559 = vadd.f32 %v1520, %v1556
    %v1560 = vadd.f32 %v1521, %v1556
    %v1561 = vadd.f32 %v1522, %v1556
    %v1562 = vadd.f32 %v1523, %v1556
    %v1563 = vadd.f32 %v1524, %v1556
    %v1564 = vadd.f32 %v1525, %v1556
    %v1565 = vadd.f32 %v1526, %v1556
    %v1566 = vadd.f32 %v1527, %v1556
    %v1567 = vadd.f32 %v1528, %v1556
    %v1568 = vadd.f32 %v1529, %v1556
    %v1569 = vadd.f32 %v1530, %v1556
    %v1570 = vadd.f32 %v1531, %v1556
    %v1571 = vadd.f32 %v1532, %v1556
    %v1572 = vadd.f32 %v1533, %v1556
    %v1573 = vadd.f32 %v1534, %v1556
    %v1574 = vadd.f32 %v1535, %v1556
    %v1575 = vadd.f32 %v1536, %v1556
    %v1576 = vadd.f32 %v1537, %v1556
    %v1577 = vadd.f32 %v1538, %v1556
    %v1578 = vadd.f32 %v1539, %v1556
    %v1579 = vadd.f32 %v1540, %v1556
    %v1580 = vadd.f32 %v1541, %v1556
    %v1581 = vadd.f32 %v1542, %v1556
    %v1582 = vadd.f32 %v1543, %v1556
    %v1583 = vadd.f32 %v1544, %v1556
    %v1584 = vadd.f32 %v1545, %v1556
    %v1585 = vadd.f32 %v1546, %v1556
    %v1586 = vadd.f32 %v1547, %v1556
    %v1587 = vadd.f32 %v1548, %v1556
    %v1588 = vadd.f32 %v1549, %v1556
    %v1589 = vadd.f32 %v1550, %v1556
    %1590 = vst [vmem:[#allocation11] sm:$0xff] %v1558
    %1591 = vst [vmem:[#allocation11 + $0x8] sm:$0xff] %v1559
    %1592 = vst [vmem:[#allocation11 + $0x10] sm:$0xff] %v1560
    %1593 = vst [vmem:[#allocation11 + $0x18] sm:$0xff] %v1561
    %1594 = vst [vmem:[#allocation11 + $0x20] sm:$0xff] %v1562
    %1595 = vst [vmem:[#allocation11 + $0x28] sm:$0xff] %v1563
    %1596 = vst [vmem:[#allocation11 + $0x30] sm:$0xff] %v1564
    %1597 = vst [vmem:[#allocation11 + $0x38] sm:$0xff] %v1565
    %1598 = vst [vmem:[#allocation11 + $0x40] sm:$0xff] %v1566
    %1599 = vst [vmem:[#allocation11 + $0x48] sm:$0xff] %v1567
    %1600 = vst [vmem:[#allocation11 + $0x50] sm:$0xff] %v1568
    %1601 = vst [vmem:[#allocation11 + $0x58] sm:$0xff] %v1569
    %1602 = vst [vmem:[#allocation11 + $0x60] sm:$0xff] %v1570
    %1603 = vst [vmem:[#allocation11 + $0x68] sm:$0xff] %v1571
    %1604 = vst [vmem:[#allocation11 + $0x70] sm:$0xff] %v1572
    %1605 = vst [vmem:[#allocation11 + $0x78] sm:$0xff] %v1573
    %1606 = vst [vmem:[#allocation11 + $0x80] sm:$0xff] %v1574
    %1607 = vst [vmem:[#allocation11 + $0x88] sm:$0xff] %v1575
    %1608 = vst [vmem:[#allocation11 + $0x90] sm:$0xff] %v1576
    %1609 = vst [vmem:[#allocation11 + $0x98] sm:$0xff] %v1577
    %1610 = vst [vmem:[#allocation11 + $0xa0] sm:$0xff] %v1578
    %1611 = vst [vmem:[#allocation11 + $0xa8] sm:$0xff] %v1579
    %1612 = vst [vmem:[#allocation11 + $0xb0] sm:$0xff] %v1580
    %1613 = vst [vmem:[#allocation11 + $0xb8] sm:$0xff] %v1581
    %1614 = vst [vmem:[#allocation11 + $0xc0] sm:$0xff] %v1582
    %1615 = vst [vmem:[#allocation11 + $0xc8] sm:$0xff] %v1583
    %1616 = vst [vmem:[#allocation11 + $0xd0] sm:$0xff] %v1584
    %1617 = vst [vmem:[#allocation11 + $0xd8] sm:$0xff] %v1585
    %1618 = vst [vmem:[#allocation11 + $0xe0] sm:$0xff] %v1586
    %1619 = vst [vmem:[#allocation11 + $0xe8] sm:$0xff] %v1587
    %1620 = vst [vmem:[#allocation11 + $0xf0] sm:$0xff] %v1588
    %1621 = vst [vmem:[#allocation11 + $0xf8] sm:$0xff] %v1589
    // Predicated region
    $region58: #{tpu_custom_call.1} parent=1 // pred_check
      _
    $region59: #{tpu_custom_call.1} parent=1 // pred_check_branch
      %1623 = sbr.rel (0) target = $region61
    $region60: #{tpu_custom_call.1} parent=1 // pred_region
      %s1625 = ssub.s32 4096, 4096
      %1626 = vsyncadd [#allocation4], %s1625
      %s1627 = sshll.u32 [#allocation11], 4
      %s1628 = int_to_ptr.vmem [resolvable:$true] %s1627
      %1633 = dma.vmem_to_hbm [thread:$0]  %s1628, 4096, %s9, [#allocation4], 128, 128, 8
    $region61: #{tpu_custom_call.1} parent=1 // pred_fallthru
      _
    // Predicated region
    $region62: #{tpu_custom_call.1} parent=1 // pred_check
      _
    $region63: #{tpu_custom_call.1} parent=1 // pred_check_branch
      %1635 = sbr.rel (0) target = $region65
    $region64: #{tpu_custom_call.1} parent=1 // pred_region
      %1636 = dma.done [#allocation4], 4096
    $region65: #{tpu_custom_call.1} parent=1 // pred_fallthru
      _
    %1637 = vsyncpa [#allocation3], 1
    %1638 = vsyncpa [#allocation6], 1
    %1639 = vsyncpa [#allocation9], 1
    %1640 = vsyncpa [#allocation4], 1

// kernel: tpu_custom_call.1
$region0: #{tpu_custom_call.1}
  #allocation0 [shape = 'u32[]', space=smem, size = 0x4, offset = 0x4, fixed_abs, tag = 'smem constant byte address 0x4 - core index']
  #allocation1 [shape = 'u32[144,128]{1,0:T(1,128)}', space=vmem, size = 0x12000, scoped, tag = 'internal scratch']
  %s0 = inlined_call_operand.hbm [shape: bf16[256,128], index: 0, kind: input, shape index: {}]
  %s1 = inlined_call_operand.hbm [shape: bf16[128,128], index: 1, kind: input, shape index: {}]
  %s2 = inlined_call_operand.vmem [shape: f32[1,128], index: 2, kind: input, shape index: {}]
  %s3 = inlined_call_operand.hbm [shape: bf16[128,128], index: 3, kind: input, shape index: {}]
  %s4 = inlined_call_operand.vmem [shape: f32[1,128], index: 4, kind: input, shape index: {}]
  %s5 = inlined_call_operand.hbm [shape: bf16[128,128], index: 5, kind: input, shape index: {}]
  %s6 = inlined_call_operand.vmem [shape: f32[1,128], index: 6, kind: input, shape index: {}]
  %s7 = inlined_call_operand.hbm [shape: bf16[128,128], index: 7, kind: input, shape index: {}]
  %s8 = inlined_call_operand.vmem [shape: f32[1,128], index: 8, kind: input, shape index: {}]
  %s9 = inlined_call_operand.hbm [shape: f32[256,128], index: 9, kind: output, shape index: {}]
  %s10 = sld [smem:[#allocation0]]
  $region66: #{tpu_custom_call.1} parent=0
    _
  %s12 = ssub.s32 1, %s10
  %s13 = scalar_select 0, %s12, %s10
  $region1: #{tpu_custom_call.1} parent=0
    #allocation2 [shape = 'u8[65536]{0}', space=vmem, size = 0x10000, scoped, tag = 'input window, operand 0, single buffered']
    #allocation3 [shape = 's32[1]{0}', space=sflag, size = 0x4, scoped, tag = 'scoped memory for tpu_custom_call.1']
    #allocation4 [shape = 's32[1]{0}', space=sflag, size = 0x4, scoped, tag = 'scoped memory for tpu_custom_call.1']
    #allocation5 [shape = 'u8[32768]{0}', space=vmem, size = 0x8000, scoped, tag = 'input window, operand 1, single buffered']
    #allocation6 [shape = 's32[1]{0}', space=sflag, size = 0x4, scoped, tag = 'scoped memory for tpu_custom_call.1']
    #allocation7 [shape = 'u8[32768]{0}', space=vmem, size = 0x8000, scoped, tag = 'input window, operand 3, single buffered']
    #allocation8 [shape = 'u8[32768]{0}', space=vmem, size = 0x8000, scoped, tag = 'input window, operand 5, single buffered']
    #allocation9 [shape = 's32[1]{0}', space=sflag, size = 0x4, scoped, tag = 'scoped memory for tpu_custom_call.1']
    #allocation10 [shape = 'u8[32768]{0}', space=vmem, size = 0x8000, scoped, tag = 'input window, operand 7, single buffered']
    #allocation11 [shape = 'u8[131072]{0}', space=vmem, size = 0x20000, scoped, tag = 'output window, operand 0, single buffered']
    %14 = vsyncpa [#allocation3], 0
    %15 = vsyncpa [#allocation6], 0
    %16 = vsyncpa [#allocation9], 0
    %17 = vsyncpa [#allocation4], 0
    // Predicated region
    $region2: #{tpu_custom_call.1} parent=1 // pred_check
      _
    $region3: #{tpu_custom_call.1} parent=1 // pred_check_branch
      %19 = sbr.rel (0) target = $region5
    $region4: #{tpu_custom_call.1} parent=1 // pred_region
      %s21 = ssub.s32 2048, 2048
      %22 = vsyncadd [#allocation3], %s21
      %s23 = sshll.u32 [#allocation2], 4
      %s24 = int_to_ptr.vmem [resolvable:$true] %s23
      %29 = dma.hbm_to_vmem [thread:$0]  %s0, 2048, %s24, [#allocation3], 64, 64, 4
    $region5: #{tpu_custom_call.1} parent=1 // pred_fallthru
      _
    // Predicated region
    $region6: #{tpu_custom_call.1} parent=1 // pred_check
      _
    $region7: #{tpu_custom_call.1} parent=1 // pred_check_branch
      %31 = sbr.rel (0) target = $region9
    $region8: #{tpu_custom_call.1} parent=1 // pred_region
      %s33 = ssub.s32 1024, 1024
      %34 = vsyncadd [#allocation6], %s33
      %s35 = sshll.u32 [#allocation5], 4
      %s36 = int_to_ptr.vmem [resolvable:$true] %s35
      %41 = dma.hbm_to_vmem [thread:$0]  %s1, 1024, %s36, [#allocation6], 64, 64, 4
    $region9: #{tpu_custom_call.1} parent=1 // pred_fallthru
      _
    // Predicated region
    $region10: #{tpu_custom_call.1} parent=1 // pred_check
      _
    $region11: #{tpu_custom_call.1} parent=1 // pred_check_branch
      %43 = sbr.rel (0) target = $region13
    $region12: #{tpu_custom_call.1} parent=1 // pred_region
      _
    $region13: #{tpu_custom_call.1} parent=1 // pred_fallthru
      _
    // Predicated region
    $region14: #{tpu_custom_call.1} parent=1 // pred_check
      _
    $region15: #{tpu_custom_call.1} parent=1 // pred_check_branch
      %45 = sbr.rel (0) target = $region17
    $region16: #{tpu_custom_call.1} parent=1 // pred_region
      %s47 = ssub.s32 1024, 1024
      %48 = vsyncadd [#allocation6], %s47
      %s49 = sshll.u32 [#allocation7], 4
      %s50 = int_to_ptr.vmem [resolvable:$true] %s49
      %55 = dma.hbm_to_vmem [thread:$0]  %s3, 1024, %s50, [#allocation6], 64, 64, 4
    $region17: #{tpu_custom_call.1} parent=1 // pred_fallthru
      _
    // Predicated region
    $region18: #{tpu_custom_call.1} parent=1 // pred_check
      _
    $region19: #{tpu_custom_call.1} parent=1 // pred_check_branch
      %57 = sbr.rel (0) target = $region21
    $region20: #{tpu_custom_call.1} parent=1 // pred_region
      _
    $region21: #{tpu_custom_call.1} parent=1 // pred_fallthru
      _
    // Predicated region
    $region22: #{tpu_custom_call.1} parent=1 // pred_check
      _
    $region23: #{tpu_custom_call.1} parent=1 // pred_check_branch
      %59 = sbr.rel (0) target = $region25
    $region24: #{tpu_custom_call.1} parent=1 // pred_region
      %s61 = ssub.s32 1024, 1024
      %62 = vsyncadd [#allocation9], %s61
      %s63 = sshll.u32 [#allocation8], 4
      %s64 = int_to_ptr.vmem [resolvable:$true] %s63
      %69 = dma.hbm_to_vmem [thread:$0]  %s5, 1024, %s64, [#allocation9], 64, 64, 4
    $region25: #{tpu_custom_call.1} parent=1 // pred_fallthru
      _
    // Predicated region
    $region26: #{tpu_custom_call.1} parent=1 // pred_check
      _
    $region27: #{tpu_custom_call.1} parent=1 // pred_check_branch
      %71 = sbr.rel (0) target = $region29
    $region28: #{tpu_custom_call.1} parent=1 // pred_region
      _
    $region29: #{tpu_custom_call.1} parent=1 // pred_fallthru
      _
    // Predicated region
    $region30: #{tpu_custom_call.1} parent=1 // pred_check
      _
    $region31: #{tpu_custom_call.1} parent=1 // pred_check_branch
      %73 = sbr.rel (0) target = $region33
    $region32: #{tpu_custom_call.1} parent=1 // pred_region
      %s75 = ssub.s32 1024, 1024
      %76 = vsyncadd [#allocation9], %s75
      %s77 = sshll.u32 [#allocation10], 4
      %s78 = int_to_ptr.vmem [resolvable:$true] %s77
      %83 = dma.hbm_to_vmem [thread:$0]  %s7, 1024, %s78, [#allocation9], 64, 64, 4
    $region33: #{tpu_custom_call.1} parent=1 // pred_fallthru
      _
    // Predicated region
    $region34: #{tpu_custom_call.1} parent=1 // pred_check
      _
    $region35: #{tpu_custom_call.1} parent=1 // pred_check_branch
      %85 = sbr.rel (0) target = $region37
    $region36: #{tpu_custom_call.1} parent=1 // pred_region
      _
    $region37: #{tpu_custom_call.1} parent=1 // pred_fallthru
      _
    // Predicated region
    $region38: #{tpu_custom_call.1} parent=1 // pred_check
      _
    $region39: #{tpu_custom_call.1} parent=1 // pred_check_branch
      %87 = sbr.rel (0) target = $region41
    $region40: #{tpu_custom_call.1} parent=1 // pred_region
      %88 = dma.done [#allocation3], 2048
    $region41: #{tpu_custom_call.1} parent=1 // pred_fallthru
      _
    // Predicated region
    $region42: #{tpu_custom_call.1} parent=1 // pred_check
      _
    $region43: #{tpu_custom_call.1} parent=1 // pred_check_branch
      %90 = sbr.rel (0) target = $region45
    $region44: #{tpu_custom_call.1} parent=1 // pred_region
      %91 = dma.done [#allocation6], 1024
    $region45: #{tpu_custom_call.1} parent=1 // pred_fallthru
      _
    // Predicated region
    $region46: #{tpu_custom_call.1} parent=1 // pred_check
      _
    $region47: #{tpu_custom_call.1} parent=1 // pred_check_branch
      %93 = sbr.rel (0) target = $region49
    $region48: #{tpu_custom_call.1} parent=1 // pred_region
      %94 = dma.done [#allocation6], 1024
    $region49: #{tpu_custom_call.1} parent=1 // pred_fallthru
      _
    // Predicated region
    $region50: #{tpu_custom_call.1} parent=1 // pred_check
      _
    $region51: #{tpu_custom_call.1} parent=1 // pred_check_branch
      %96 = sbr.rel (0) target = $region53
    $region52: #{tpu_custom_call.1} parent=1 // pred_region
      %97 = dma.done [#allocation9], 1024
    $region53: #{tpu_custom_call.1} parent=1 // pred_fallthru
      _
    // Predicated region
    $region54: #{tpu_custom_call.1} parent=1 // pred_check
      _
    $region55: #{tpu_custom_call.1} parent=1 // pred_check_branch
      %99 = sbr.rel (0) target = $region57
    $region56: #{tpu_custom_call.1} parent=1 // pred_region
      %100 = dma.done [#allocation9], 1024
    $region57: #{tpu_custom_call.1} parent=1 // pred_fallthru
      _
    %v102 = vld [vmem:[#allocation2] sm:$0xf]
    %v103 = vld [vmem:[#allocation2 + $0x4] sm:$0xf]
    %v104 = vld [vmem:[#allocation2 + $0x8] sm:$0xf]
    %v105 = vld [vmem:[#allocation2 + $0xc] sm:$0xf]
    %v106 = vld [vmem:[#allocation2 + $0x10] sm:$0xf]
    %v107 = vld [vmem:[#allocation2 + $0x14] sm:$0xf]
    %v108 = vld [vmem:[#allocation2 + $0x18] sm:$0xf]
    %v109 = vld [vmem:[#allocation2 + $0x1c] sm:$0xf]
    %v110 = vld [vmem:[#allocation2 + $0x20] sm:$0xf]
    %v111 = vld [vmem:[#allocation2 + $0x24] sm:$0xf]
    %v112 = vld [vmem:[#allocation2 + $0x28] sm:$0xf]
    %v113 = vld [vmem:[#allocation2 + $0x2c] sm:$0xf]
    %v114 = vld [vmem:[#allocation2 + $0x30] sm:$0xf]
    %v115 = vld [vmem:[#allocation2 + $0x34] sm:$0xf]
    %v116 = vld [vmem:[#allocation2 + $0x38] sm:$0xf]
    %v117 = vld [vmem:[#allocation2 + $0x3c] sm:$0xf]
    %v118 = vld [vmem:[#allocation2 + $0x40] sm:$0xf]
    %v119 = vld [vmem:[#allocation2 + $0x44] sm:$0xf]
    %v120 = vld [vmem:[#allocation2 + $0x48] sm:$0xf]
    %v121 = vld [vmem:[#allocation2 + $0x4c] sm:$0xf]
    %v122 = vld [vmem:[#allocation2 + $0x50] sm:$0xf]
    %v123 = vld [vmem:[#allocation2 + $0x54] sm:$0xf]
    %v124 = vld [vmem:[#allocation2 + $0x58] sm:$0xf]
    %v125 = vld [vmem:[#allocation2 + $0x5c] sm:$0xf]
    %v126 = vld [vmem:[#allocation2 + $0x60] sm:$0xf]
    %v127 = vld [vmem:[#allocation2 + $0x64] sm:$0xf]
    %v128 = vld [vmem:[#allocation2 + $0x68] sm:$0xf]
    %v129 = vld [vmem:[#allocation2 + $0x6c] sm:$0xf]
    %v130 = vld [vmem:[#allocation2 + $0x70] sm:$0xf]
    %v131 = vld [vmem:[#allocation2 + $0x74] sm:$0xf]
    %v132 = vld [vmem:[#allocation2 + $0x78] sm:$0xf]
    %v133 = vld [vmem:[#allocation2 + $0x7c] sm:$0xf]
    %v134 = vld [vmem:[#allocation5] sm:$0xf]
    %v135 = vld [vmem:[#allocation5 + $0x4] sm:$0xf]
    %v136 = vld [vmem:[#allocation5 + $0x8] sm:$0xf]
    %v137 = vld [vmem:[#allocation5 + $0xc] sm:$0xf]
    %v138 = vld [vmem:[#allocation5 + $0x10] sm:$0xf]
    %v139 = vld [vmem:[#allocation5 + $0x14] sm:$0xf]
    %v140 = vld [vmem:[#allocation5 + $0x18] sm:$0xf]
    %v141 = vld [vmem:[#allocation5 + $0x1c] sm:$0xf]
    %v142 = vld [vmem:[#allocation5 + $0x20] sm:$0xf]
    %v143 = vld [vmem:[#allocation5 + $0x24] sm:$0xf]
    %v144 = vld [vmem:[#allocation5 + $0x28] sm:$0xf]
    %v145 = vld [vmem:[#allocation5 + $0x2c] sm:$0xf]
    %v146 = vld [vmem:[#allocation5 + $0x30] sm:$0xf]
    %v147 = vld [vmem:[#allocation5 + $0x34] sm:$0xf]
    %v148 = vld [vmem:[#allocation5 + $0x38] sm:$0xf]
    %v149 = vld [vmem:[#allocation5 + $0x3c] sm:$0xf]
    %v150 = vld [vmem:[%s2] sm:$0x1]
    %v152 = vlaneseq
    %v153 = vshrl.u32 %v152, 7
    %v154 = vsub.s32 0, %v153
    %v155 = vrot.slane %v150, %v154
    %v189 = vunpack.c.l.b16 %v102
    %v190 = vunpack.c.l.b16 %v103
    %v191 = vunpack.c.l.b16 %v104
    %v192 = vunpack.c.l.b16 %v105
    %v193 = vunpack.c.l.b16 %v106
    %v194 = vunpack.c.l.b16 %v107
    %v195 = vunpack.c.l.b16 %v108
    %v196 = vunpack.c.l.b16 %v109
    %v197 = vunpack.c.l.b16 %v110
    %v198 = vunpack.c.l.b16 %v111
    %v199 = vunpack.c.l.b16 %v112
    %v200 = vunpack.c.l.b16 %v113
    %v201 = vunpack.c.l.b16 %v114
    %v202 = vunpack.c.l.b16 %v115
    %v203 = vunpack.c.l.b16 %v116
    %v204 = vunpack.c.l.b16 %v117
    %v205 = vunpack.c.l.b16 %v118
    %v206 = vunpack.c.l.b16 %v119
    %v207 = vunpack.c.l.b16 %v120
    %v208 = vunpack.c.l.b16 %v121
    %v209 = vunpack.c.l.b16 %v122
    %v210 = vunpack.c.l.b16 %v123
    %v211 = vunpack.c.l.b16 %v124
    %v212 = vunpack.c.l.b16 %v125
    %v213 = vunpack.c.l.b16 %v126
    %v214 = vunpack.c.l.b16 %v127
    %v215 = vunpack.c.l.b16 %v128
    %v216 = vunpack.c.l.b16 %v129
    %v217 = vunpack.c.l.b16 %v130
    %v218 = vunpack.c.l.b16 %v131
    %v219 = vunpack.c.l.b16 %v132
    %v220 = vunpack.c.l.b16 %v133
    %v221 = vpack.c.b16 %v190, %v189
    %v222 = vpack.c.b16 %v192, %v191
    %v223 = vpack.c.b16 %v194, %v193
    %v224 = vpack.c.b16 %v196, %v195
    %v225 = vpack.c.b16 %v198, %v197
    %v226 = vpack.c.b16 %v200, %v199
    %v227 = vpack.c.b16 %v202, %v201
    %v228 = vpack.c.b16 %v204, %v203
    %v229 = vpack.c.b16 %v206, %v205
    %v230 = vpack.c.b16 %v208, %v207
    %v231 = vpack.c.b16 %v210, %v209
    %v232 = vpack.c.b16 %v212, %v211
    %v233 = vpack.c.b16 %v214, %v213
    %v234 = vpack.c.b16 %v216, %v215
    %v235 = vpack.c.b16 %v218, %v217
    %v236 = vpack.c.b16 %v220, %v219
    %v269 = vunpack.c.l.b16 %v134
    %v270 = vunpack.c.l.b16 %v135
    %v271 = vunpack.c.l.b16 %v136
    %v272 = vunpack.c.l.b16 %v137
    %v273 = vunpack.c.l.b16 %v138
    %v274 = vunpack.c.l.b16 %v139
    %v275 = vunpack.c.l.b16 %v140
    %v276 = vunpack.c.l.b16 %v141
    %v277 = vunpack.c.l.b16 %v142
    %v278 = vunpack.c.l.b16 %v143
    %v279 = vunpack.c.l.b16 %v144
    %v280 = vunpack.c.l.b16 %v145
    %v281 = vunpack.c.l.b16 %v146
    %v282 = vunpack.c.l.b16 %v147
    %v283 = vunpack.c.l.b16 %v148
    %v284 = vunpack.c.l.b16 %v149
    %v285 = vpack.c.b16 %v270, %v269
    %v286 = vpack.c.b16 %v272, %v271
    %v287 = vpack.c.b16 %v274, %v273
    %v288 = vpack.c.b16 %v276, %v275
    %v289 = vpack.c.b16 %v278, %v277
    %v290 = vpack.c.b16 %v280, %v279
    %v291 = vpack.c.b16 %v282, %v281
    %v292 = vpack.c.b16 %v284, %v283
    %301 = vmatprep.subr.bf16.mxu0 0
    %302 = vmatpush1.bf16.msra.mxu0 %v285
    %303 = vmatprep.subr.bf16.mxu0 0
    %304 = vmatpush1.bf16.msra.mxu0 %v286
    %305 = vmatprep.subr.bf16.mxu0 0
    %306 = vmatpush1.bf16.msra.mxu0 %v287
    %307 = vmatprep.subr.bf16.mxu0 0
    %308 = vmatpush1.bf16.msra.mxu0 %v288
    %309 = vmatprep.subr.bf16.mxu0 0
    %310 = vmatpush1.bf16.msra.mxu0 %v289
    %311 = vmatprep.subr.bf16.mxu0 0
    %312 = vmatpush1.bf16.msra.mxu0 %v290
    %313 = vmatprep.subr.bf16.mxu0 0
    %314 = vmatpush1.bf16.msra.mxu0 %v291
    %315 = vmatprep.subr.bf16.mxu0 0
    %316 = vmatpush1.bf16.msra.mxu0 %v292
    %317 = vmatprep.subr.bf16.mxu0 0
    %318 = vmatpush1.bf16.msra.mxu0 0
    %319 = vmatprep.subr.bf16.mxu0 0
    %320 = vmatpush1.bf16.msra.mxu0 0
    %321 = vmatprep.subr.bf16.mxu0 0
    %322 = vmatpush1.bf16.msra.mxu0 0
    %323 = vmatprep.subr.bf16.mxu0 0
    %324 = vmatpush1.bf16.msra.mxu0 0
    %325 = vmatprep.subr.bf16.mxu0 0
    %326 = vmatpush1.bf16.msra.mxu0 0
    %327 = vmatprep.subr.bf16.mxu0 0
    %328 = vmatpush1.bf16.msra.mxu0 0
    %329 = vmatprep.subr.bf16.mxu0 0
    %330 = vmatpush1.bf16.msra.mxu0 0
    %331 = vmatprep.subr.bf16.mxu0 0
    %332 = vmatpush1.bf16.msra.mxu0 0
    %333 = vmatprep.mubr.bf16.mxu0 0
    %334 = vmatmul.mubr.bf16.gmra.mrb[0].mxu0 %v221
    %v335 = vpop.f32.mrb[0].mxu0
    %v336 = vadd.f32 %v155, %v335
    %v337 = vpop.f32.mrb[0].mxu0
    %v338 = vpop.f32.mrb[0].mxu0
    %v339 = vadd.f32 %v155, %v338
    %v340 = vpop.f32.mrb[0].mxu0
    %341 = vmatprep.mubr.bf16.mxu0 0
    %342 = vmatmul.mubr.bf16.gmra.mrb[0].mxu0 %v222
    %v343 = vpop.f32.mrb[0].mxu0
    %v344 = vadd.f32 %v155, %v343
    %v345 = vpop.f32.mrb[0].mxu0
    %v346 = vpop.f32.mrb[0].mxu0
    %v347 = vadd.f32 %v155, %v346
    %v348 = vpop.f32.mrb[0].mxu0
    %349 = vmatprep.mubr.bf16.mxu0 0
    %350 = vmatmul.mubr.bf16.gmra.mrb[0].mxu0 %v223
    %v351 = vpop.f32.mrb[0].mxu0
    %v352 = vadd.f32 %v155, %v351
    %v353 = vpop.f32.mrb[0].mxu0
    %v354 = vpop.f32.mrb[0].mxu0
    %v355 = vadd.f32 %v155, %v354
    %v356 = vpop.f32.mrb[0].mxu0
    %357 = vmatprep.mubr.bf16.mxu0 0
    %358 = vmatmul.mubr.bf16.gmra.mrb[0].mxu0 %v224
    %v359 = vpop.f32.mrb[0].mxu0
    %v360 = vadd.f32 %v155, %v359
    %v361 = vpop.f32.mrb[0].mxu0
    %v362 = vpop.f32.mrb[0].mxu0
    %v363 = vadd.f32 %v155, %v362
    %v364 = vpop.f32.mrb[0].mxu0
    %365 = vmatprep.mubr.bf16.mxu0 0
    %366 = vmatmul.mubr.bf16.gmra.mrb[0].mxu0 %v225
    %v367 = vpop.f32.mrb[0].mxu0
    %v368 = vadd.f32 %v155, %v367
    %v369 = vpop.f32.mrb[0].mxu0
    %v370 = vpop.f32.mrb[0].mxu0
    %v371 = vadd.f32 %v155, %v370
    %v372 = vpop.f32.mrb[0].mxu0
    %373 = vmatprep.mubr.bf16.mxu0 0
    %374 = vmatmul.mubr.bf16.gmra.mrb[0].mxu0 %v226
    %v375 = vpop.f32.mrb[0].mxu0
    %v376 = vadd.f32 %v155, %v375
    %v377 = vpop.f32.mrb[0].mxu0
    %v378 = vpop.f32.mrb[0].mxu0
    %v379 = vadd.f32 %v155, %v378
    %v380 = vpop.f32.mrb[0].mxu0
    %381 = vmatprep.mubr.bf16.mxu0 0
    %382 = vmatmul.mubr.bf16.gmra.mrb[0].mxu0 %v227
    %v383 = vpop.f32.mrb[0].mxu0
    %v384 = vadd.f32 %v155, %v383
    %v385 = vpop.f32.mrb[0].mxu0
    %v386 = vpop.f32.mrb[0].mxu0
    %v387 = vadd.f32 %v155, %v386
    %v388 = vpop.f32.mrb[0].mxu0
    %389 = vmatprep.mubr.bf16.mxu0 0
    %390 = vmatmul.mubr.bf16.gmra.mrb[0].mxu0 %v228
    %v391 = vpop.f32.mrb[0].mxu0
    %v392 = vadd.f32 %v155, %v391
    %v393 = vpop.f32.mrb[0].mxu0
    %v394 = vpop.f32.mrb[0].mxu0
    %v395 = vadd.f32 %v155, %v394
    %v396 = vpop.f32.mrb[0].mxu0
    %397 = vmatprep.mubr.bf16.mxu0 0
    %398 = vmatmul.mubr.bf16.gmra.mrb[0].mxu0 %v229
    %v399 = vpop.f32.mrb[0].mxu0
    %v400 = vadd.f32 %v155, %v399
    %v401 = vpop.f32.mrb[0].mxu0
    %v402 = vpop.f32.mrb[0].mxu0
    %v403 = vadd.f32 %v155, %v402
    %v404 = vpop.f32.mrb[0].mxu0
    %405 = vmatprep.mubr.bf16.mxu0 0
    %406 = vmatmul.mubr.bf16.gmra.mrb[0].mxu0 %v230
    %v407 = vpop.f32.mrb[0].mxu0
    %v408 = vadd.f32 %v155, %v407
    %v409 = vpop.f32.mrb[0].mxu0
    %v410 = vpop.f32.mrb[0].mxu0
    %v411 = vadd.f32 %v155, %v410
    %v412 = vpop.f32.mrb[0].mxu0
    %413 = vmatprep.mubr.bf16.mxu0 0
    %414 = vmatmul.mubr.bf16.gmra.mrb[0].mxu0 %v231
    %v415 = vpop.f32.mrb[0].mxu0
    %v416 = vadd.f32 %v155, %v415
    %v417 = vpop.f32.mrb[0].mxu0
    %v418 = vpop.f32.mrb[0].mxu0
    %v419 = vadd.f32 %v155, %v418
    %v420 = vpop.f32.mrb[0].mxu0
    %421 = vmatprep.mubr.bf16.mxu0 0
    %422 = vmatmul.mubr.bf16.gmra.mrb[0].mxu0 %v232
    %v423 = vpop.f32.mrb[0].mxu0
    %v424 = vadd.f32 %v155, %v423
    %v425 = vpop.f32.mrb[0].mxu0
    %v426 = vpop.f32.mrb[0].mxu0
    %v427 = vadd.f32 %v155, %v426
    %v428 = vpop.f32.mrb[0].mxu0
    %429 = vmatprep.mubr.bf16.mxu0 0
    %430 = vmatmul.mubr.bf16.gmra.mrb[0].mxu0 %v233
    %v431 = vpop.f32.mrb[0].mxu0
    %v432 = vadd.f32 %v155, %v431
    %v433 = vpop.f32.mrb[0].mxu0
    %v434 = vpop.f32.mrb[0].mxu0
    %v435 = vadd.f32 %v155, %v434
    %v436 = vpop.f32.mrb[0].mxu0
    %437 = vmatprep.mubr.bf16.mxu0 0
    %438 = vmatmul.mubr.bf16.gmra.mrb[0].mxu0 %v234
    %v439 = vpop.f32.mrb[0].mxu0
    %v440 = vadd.f32 %v155, %v439
    %v441 = vpop.f32.mrb[0].mxu0
    %v442 = vpop.f32.mrb[0].mxu0
    %v443 = vadd.f32 %v155, %v442
    %v444 = vpop.f32.mrb[0].mxu0
    %445 = vmatprep.mubr.bf16.mxu0 0
    %446 = vmatmul.mubr.bf16.gmra.mrb[0].mxu0 %v235
    %v447 = vpop.f32.mrb[0].mxu0
    %v448 = vadd.f32 %v155, %v447
    %v449 = vpop.f32.mrb[0].mxu0
    %v450 = vpop.f32.mrb[0].mxu0
    %v451 = vadd.f32 %v155, %v450
    %v452 = vpop.f32.mrb[0].mxu0
    %453 = vmatprep.mubr.bf16.mxu0 0
    %454 = vmatmul.mubr.bf16.gmra.mrb[0].mxu0 %v236
    %v455 = vpop.f32.mrb[0].mxu0
    %v456 = vadd.f32 %v155, %v455
    %v457 = vpop.f32.mrb[0].mxu0
    %v458 = vpop.f32.mrb[0].mxu0
    %v459 = vadd.f32 %v155, %v458
    %v460 = vpop.f32.mrb[0].mxu0
    %461 = vdwg.mxu0
    %v462 = vmul.f32 %v336, 0.5
    %v463 = vmul.f32 %v339, 0.5
    %v464 = vmul.f32 %v344, 0.5
    %v465 = vmul.f32 %v347, 0.5
    %v466 = vmul.f32 %v352, 0.5
    %v467 = vmul.f32 %v355, 0.5
    %v468 = vmul.f32 %v360, 0.5
    %v469 = vmul.f32 %v363, 0.5
    %v470 = vmul.f32 %v368, 0.5
    %v471 = vmul.f32 %v371, 0.5
    %v472 = vmul.f32 %v376, 0.5
    %v473 = vmul.f32 %v379, 0.5
    %v474 = vmul.f32 %v384, 0.5
    %v475 = vmul.f32 %v387, 0.5
    %v476 = vmul.f32 %v392, 0.5
    %v477 = vmul.f32 %v395, 0.5
    %v478 = vmul.f32 %v400, 0.5
    %v479 = vmul.f32 %v403, 0.5
    %v480 = vmul.f32 %v408, 0.5
    %v481 = vmul.f32 %v411, 0.5
    %v482 = vmul.f32 %v416, 0.5
    %v483 = vmul.f32 %v419, 0.5
    %v484 = vmul.f32 %v424, 0.5
    %v485 = vmul.f32 %v427, 0.5
    %v486 = vmul.f32 %v432, 0.5
    %v487 = vmul.f32 %v435, 0.5
    %v488 = vmul.f32 %v440, 0.5
    %v489 = vmul.f32 %v443, 0.5
    %v490 = vmul.f32 %v448, 0.5
    %v491 = vmul.f32 %v451, 0.5
    %v492 = vmul.f32 %v456, 0.5
    %v493 = vmul.f32 %v459, 0.5
    %v494 = vmul.f32 %v336, 0.044715
    %v495 = vmul.f32 %v339, 0.044715
    %v496 = vmul.f32 %v344, 0.044715
    %v497 = vmul.f32 %v347, 0.044715
    %v498 = vmul.f32 %v352, 0.044715
    %v499 = vmul.f32 %v355, 0.044715
    %v500 = vmul.f32 %v360, 0.044715
    %v501 = vmul.f32 %v363, 0.044715
    %v502 = vmul.f32 %v368, 0.044715
    %v503 = vmul.f32 %v371, 0.044715
    %v504 = vmul.f32 %v376, 0.044715
    %v505 = vmul.f32 %v379, 0.044715
    %v506 = vmul.f32 %v384, 0.044715
    %v507 = vmul.f32 %v387, 0.044715
    %v508 = vmul.f32 %v392, 0.044715
    %v509 = vmul.f32 %v395, 0.044715
    %v510 = vmul.f32 %v400, 0.044715
    %v511 = vmul.f32 %v403, 0.044715
    %v512 = vmul.f32 %v408, 0.044715
    %v513 = vmul.f32 %v411, 0.044715
    %v514 = vmul.f32 %v416, 0.044715
    %v515 = vmul.f32 %v419, 0.044715
    %v516 = vmul.f32 %v424, 0.044715
    %v517 = vmul.f32 %v427, 0.044715
    %v518 = vmul.f32 %v432, 0.044715
    %v519 = vmul.f32 %v435, 0.044715
    %v520 = vmul.f32 %v440, 0.044715
    %v521 = vmul.f32 %v443, 0.044715
    %v522 = vmul.f32 %v448, 0.044715
    %v523 = vmul.f32 %v451, 0.044715
    %v524 = vmul.f32 %v456, 0.044715
    %v525 = vmul.f32 %v459, 0.044715
    %v526 = vmul.f32 %v494, %v336
    %v527 = vmul.f32 %v495, %v339
    %v528 = vmul.f32 %v496, %v344
    %v529 = vmul.f32 %v497, %v347
    %v530 = vmul.f32 %v498, %v352
    %v531 = vmul.f32 %v499, %v355
    %v532 = vmul.f32 %v500, %v360
    %v533 = vmul.f32 %v501, %v363
    %v534 = vmul.f32 %v502, %v368
    %v535 = vmul.f32 %v503, %v371
    %v536 = vmul.f32 %v504, %v376
    %v537 = vmul.f32 %v505, %v379
    %v538 = vmul.f32 %v506, %v384
    %v539 = vmul.f32 %v507, %v387
    %v540 = vmul.f32 %v508, %v392
    %v541 = vmul.f32 %v509, %v395
    %v542 = vmul.f32 %v510, %v400
    %v543 = vmul.f32 %v511, %v403
    %v544 = vmul.f32 %v512, %v408
    %v545 = vmul.f32 %v513, %v411
    %v546 = vmul.f32 %v514, %v416
    %v547 = vmul.f32 %v515, %v419
    %v548 = vmul.f32 %v516, %v424
    %v549 = vmul.f32 %v517, %v427
    %v550 = vmul.f32 %v518, %v432
    %v551 = vmul.f32 %v519, %v435
    %v552 = vmul.f32 %v520, %v440
    %v553 = vmul.f32 %v521, %v443
    %v554 = vmul.f32 %v522, %v448
    %v555 = vmul.f32 %v523, %v451
    %v556 = vmul.f32 %v524, %v456
    %v557 = vmul.f32 %v525, %v459
    %v558 = vmul.f32 %v526, %v336
    %v559 = vmul.f32 %v527, %v339
    %v560 = vmul.f32 %v528, %v344
    %v561 = vmul.f32 %v529, %v347
    %v562 = vmul.f32 %v530, %v352
    %v563 = vmul.f32 %v531, %v355
    %v564 = vmul.f32 %v532, %v360
    %v565 = vmul.f32 %v533, %v363
    %v566 = vmul.f32 %v534, %v368
    %v567 = vmul.f32 %v535, %v371
    %v568 = vmul.f32 %v536, %v376
    %v569 = vmul.f32 %v537, %v379
    %v570 = vmul.f32 %v538, %v384
    %v571 = vmul.f32 %v539, %v387
    %v572 = vmul.f32 %v540, %v392
    %v573 = vmul.f32 %v541, %v395
    %v574 = vmul.f32 %v542, %v400
    %v575 = vmul.f32 %v543, %v403
    %v576 = vmul.f32 %v544, %v408
    %v577 = vmul.f32 %v545, %v411
    %v578 = vmul.f32 %v546, %v416
    %v579 = vmul.f32 %v547, %v419
    %v580 = vmul.f32 %v548, %v424
    %v581 = vmul.f32 %v549, %v427
    %v582 = vmul.f32 %v550, %v432
    %v583 = vmul.f32 %v551, %v435
    %v584 = vmul.f32 %v552, %v440
    %v585 = vmul.f32 %v553, %v443
    %v586 = vmul.f32 %v554, %v448
    %v587 = vmul.f32 %v555, %v451
    %v588 = vmul.f32 %v556, %v456
    %v589 = vmul.f32 %v557, %v459
    %v590 = vadd.f32 %v336, %v558
    %v591 = vadd.f32 %v339, %v559
    %v592 = vadd.f32 %v344, %v560
    %v593 = vadd.f32 %v347, %v561
    %v594 = vadd.f32 %v352, %v562
    %v595 = vadd.f32 %v355, %v563
    %v596 = vadd.f32 %v360, %v564
    %v597 = vadd.f32 %v363, %v565
    %v598 = vadd.f32 %v368, %v566
    %v599 = vadd.f32 %v371, %v567
    %v600 = vadd.f32 %v376, %v568
    %v601 = vadd.f32 %v379, %v569
    %v602 = vadd.f32 %v384, %v570
    %v603 = vadd.f32 %v387, %v571
    %v604 = vadd.f32 %v392, %v572
    %v605 = vadd.f32 %v395, %v573
    %v606 = vadd.f32 %v400, %v574
    %v607 = vadd.f32 %v403, %v575
    %v608 = vadd.f32 %v408, %v576
    %v609 = vadd.f32 %v411, %v577
    %v610 = vadd.f32 %v416, %v578
    %v611 = vadd.f32 %v419, %v579
    %v612 = vadd.f32 %v424, %v580
    %v613 = vadd.f32 %v427, %v581
    %v614 = vadd.f32 %v432, %v582
    %v615 = vadd.f32 %v435, %v583
    %v616 = vadd.f32 %v440, %v584
    %v617 = vadd.f32 %v443, %v585
    %v618 = vadd.f32 %v448, %v586
    %v619 = vadd.f32 %v451, %v587
    %v620 = vadd.f32 %v456, %v588
    %v621 = vadd.f32 %v459, %v589
    %v622 = vmul.f32 %v590, 0.7978846
    %v623 = vmul.f32 %v591, 0.7978846
    %v624 = vmul.f32 %v592, 0.7978846
    %v625 = vmul.f32 %v593, 0.7978846
    %v626 = vmul.f32 %v594, 0.7978846
    %v627 = vmul.f32 %v595, 0.7978846
    %v628 = vmul.f32 %v596, 0.7978846
    %v629 = vmul.f32 %v597, 0.7978846
    %v630 = vmul.f32 %v598, 0.7978846
    %v631 = vmul.f32 %v599, 0.7978846
    %v632 = vmul.f32 %v600, 0.7978846
    %v633 = vmul.f32 %v601, 0.7978846
    %v634 = vmul.f32 %v602, 0.7978846
    %v635 = vmul.f32 %v603, 0.7978846
    %v636 = vmul.f32 %v604, 0.7978846
    %v637 = vmul.f32 %v605, 0.7978846
    %v638 = vmul.f32 %v606, 0.7978846
    %v639 = vmul.f32 %v607, 0.7978846
    %v640 = vmul.f32 %v608, 0.7978846
    %v641 = vmul.f32 %v609, 0.7978846
    %v642 = vmul.f32 %v610, 0.7978846
    %v643 = vmul.f32 %v611, 0.7978846
    %v644 = vmul.f32 %v612, 0.7978846
    %v645 = vmul.f32 %v613, 0.7978846
    %v646 = vmul.f32 %v614, 0.7978846
    %v647 = vmul.f32 %v615, 0.7978846
    %v648 = vmul.f32 %v616, 0.7978846
    %v649 = vmul.f32 %v617, 0.7978846
    %v650 = vmul.f32 %v618, 0.7978846
    %v651 = vmul.f32 %v619, 0.7978846
    %v652 = vmul.f32 %v620, 0.7978846
    %v653 = vmul.f32 %v621, 0.7978846
    %v654 = vtanh.pop %v622
    %v655 = vtanh.pop %v623
    %v656 = vtanh.pop %v624
    %v657 = vtanh.pop %v625
    %v658 = vtanh.pop %v626
    %v659 = vtanh.pop %v627
    %v660 = vtanh.pop %v628
    %v661 = vtanh.pop %v629
    %v662 = vtanh.pop %v630
    %v663 = vtanh.pop %v631
    %v664 = vtanh.pop %v632
    %v665 = vtanh.pop %v633
    %v666 = vtanh.pop %v634
    %v667 = vtanh.pop %v635
    %v668 = vtanh.pop %v636
    %v669 = vtanh.pop %v637
    %v670 = vtanh.pop %v638
    %v671 = vtanh.pop %v639
    %v672 = vtanh.pop %v640
    %v673 = vtanh.pop %v641
    %v674 = vtanh.pop %v642
    %v675 = vtanh.pop %v643
    %v676 = vtanh.pop %v644
    %v677 = vtanh.pop %v645
    %v678 = vtanh.pop %v646
    %v679 = vtanh.pop %v647
    %v680 = vtanh.pop %v648
    %v681 = vtanh.pop %v649
    %v682 = vtanh.pop %v650
    %v683 = vtanh.pop %v651
    %v684 = vtanh.pop %v652
    %v685 = vtanh.pop %v653
    %v686 = vadd.f32 %v654, 1.0
    %v687 = vadd.f32 %v655, 1.0
    %v688 = vadd.f32 %v656, 1.0
    %v689 = vadd.f32 %v657, 1.0
    %v690 = vadd.f32 %v658, 1.0
    %v691 = vadd.f32 %v659, 1.0
    %v692 = vadd.f32 %v660, 1.0
    %v693 = vadd.f32 %v661, 1.0
    %v694 = vadd.f32 %v662, 1.0
    %v695 = vadd.f32 %v663, 1.0
    %v696 = vadd.f32 %v664, 1.0
    %v697 = vadd.f32 %v665, 1.0
    %v698 = vadd.f32 %v666, 1.0
    %v699 = vadd.f32 %v667, 1.0
    %v700 = vadd.f32 %v668, 1.0
    %v701 = vadd.f32 %v669, 1.0
    %v702 = vadd.f32 %v670, 1.0
    %v703 = vadd.f32 %v671, 1.0
    %v704 = vadd.f32 %v672, 1.0
    %v705 = vadd.f32 %v673, 1.0
    %v706 = vadd.f32 %v674, 1.0
    %v707 = vadd.f32 %v675, 1.0
    %v708 = vadd.f32 %v676, 1.0
    %v709 = vadd.f32 %v677, 1.0
    %v710 = vadd.f32 %v678, 1.0
    %v711 = vadd.f32 %v679, 1.0
    %v712 = vadd.f32 %v680, 1.0
    %v713 = vadd.f32 %v681, 1.0
    %v714 = vadd.f32 %v682, 1.0
    %v715 = vadd.f32 %v683, 1.0
    %v716 = vadd.f32 %v684, 1.0
    %v717 = vadd.f32 %v685, 1.0
    %v718 = vmul.f32 %v462, %v686
    %v719 = vmul.f32 %v463, %v687
    %v720 = vmul.f32 %v464, %v688
    %v721 = vmul.f32 %v465, %v689
    %v722 = vmul.f32 %v466, %v690
    %v723 = vmul.f32 %v467, %v691
    %v724 = vmul.f32 %v468, %v692
    %v725 = vmul.f32 %v469, %v693
    %v726 = vmul.f32 %v470, %v694
    %v727 = vmul.f32 %v471, %v695
    %v728 = vmul.f32 %v472, %v696
    %v729 = vmul.f32 %v473, %v697
    %v730 = vmul.f32 %v474, %v698
    %v731 = vmul.f32 %v475, %v699
    %v732 = vmul.f32 %v476, %v700
    %v733 = vmul.f32 %v477, %v701
    %v734 = vmul.f32 %v478, %v702
    %v735 = vmul.f32 %v479, %v703
    %v736 = vmul.f32 %v480, %v704
    %v737 = vmul.f32 %v481, %v705
    %v738 = vmul.f32 %v482, %v706
    %v739 = vmul.f32 %v483, %v707
    %v740 = vmul.f32 %v484, %v708
    %v741 = vmul.f32 %v485, %v709
    %v742 = vmul.f32 %v486, %v710
    %v743 = vmul.f32 %v487, %v711
    %v744 = vmul.f32 %v488, %v712
    %v745 = vmul.f32 %v489, %v713
    %v746 = vmul.f32 %v490, %v714
    %v747 = vmul.f32 %v491, %v715
    %v748 = vmul.f32 %v492, %v716
    %v749 = vmul.f32 %v493, %v717
    %v750 = vpack.c.bf16 %v719, %v718
    %v751 = vpack.c.bf16 %v721, %v720
    %v752 = vpack.c.bf16 %v723, %v722
    %v753 = vpack.c.bf16 %v725, %v724
    %v754 = vpack.c.bf16 %v727, %v726
    %v755 = vpack.c.bf16 %v729, %v728
    %v756 = vpack.c.bf16 %v731, %v730
    %v757 = vpack.c.bf16 %v733, %v732
    %v758 = vpack.c.bf16 %v735, %v734
    %v759 = vpack.c.bf16 %v737, %v736
    %v760 = vpack.c.bf16 %v739, %v738
    %v761 = vpack.c.bf16 %v741, %v740
    %v762 = vpack.c.bf16 %v743, %v742
    %v763 = vpack.c.bf16 %v745, %v744
    %v764 = vpack.c.bf16 %v747, %v746
    %v765 = vpack.c.bf16 %v749, %v748
    %v766 = vld [vmem:[#allocation7] sm:$0xf]
    %v767 = vld [vmem:[#allocation7 + $0x4] sm:$0xf]
    %v768 = vld [vmem:[#allocation7 + $0x8] sm:$0xf]
    %v769 = vld [vmem:[#allocation7 + $0xc] sm:$0xf]
    %v770 = vld [vmem:[#allocation7 + $0x10] sm:$0xf]
    %v771 = vld [vmem:[#allocation7 + $0x14] sm:$0xf]
    %v772 = vld [vmem:[#allocation7 + $0x18] sm:$0xf]
    %v773 = vld [vmem:[#allocation7 + $0x1c] sm:$0xf]
    %v774 = vld [vmem:[#allocation7 + $0x20] sm:$0xf]
    %v775 = vld [vmem:[#allocation7 + $0x24] sm:$0xf]
    %v776 = vld [vmem:[#allocation7 + $0x28] sm:$0xf]
    %v777 = vld [vmem:[#allocation7 + $0x2c] sm:$0xf]
    %v778 = vld [vmem:[#allocation7 + $0x30] sm:$0xf]
    %v779 = vld [vmem:[#allocation7 + $0x34] sm:$0xf]
    %v780 = vld [vmem:[#allocation7 + $0x38] sm:$0xf]
    %v781 = vld [vmem:[#allocation7 + $0x3c] sm:$0xf]
    %v782 = vld [vmem:[%s4] sm:$0x1]
    %v784 = vlaneseq
    %v785 = vshrl.u32 %v784, 7
    %v786 = vsub.s32 0, %v785
    %v787 = vrot.slane %v782, %v786
    %v805 = vunpack.c.l.b16 %v766
    %v806 = vunpack.c.l.b16 %v767
    %v807 = vunpack.c.l.b16 %v768
    %v808 = vunpack.c.l.b16 %v769
    %v809 = vunpack.c.l.b16 %v770
    %v810 = vunpack.c.l.b16 %v771
    %v811 = vunpack.c.l.b16 %v772
    %v812 = vunpack.c.l.b16 %v773
    %v813 = vunpack.c.l.b16 %v774
    %v814 = vunpack.c.l.b16 %v775
    %v815 = vunpack.c.l.b16 %v776
    %v816 = vunpack.c.l.b16 %v777
    %v817 = vunpack.c.l.b16 %v778
    %v818 = vunpack.c.l.b16 %v779
    %v819 = vunpack.c.l.b16 %v780
    %v820 = vunpack.c.l.b16 %v781
    %v821 = vpack.c.b16 %v806, %v805
    %v822 = vpack.c.b16 %v808, %v807
    %v823 = vpack.c.b16 %v810, %v809
    %v824 = vpack.c.b16 %v812, %v811
    %v825 = vpack.c.b16 %v814, %v813
    %v826 = vpack.c.b16 %v816, %v815
    %v827 = vpack.c.b16 %v818, %v817
    %v828 = vpack.c.b16 %v820, %v819
    %837 = vmatprep.subr.bf16.mxu0 0
    %838 = vmatpush1.bf16.msra.mxu0 %v821
    %839 = vmatprep.subr.bf16.mxu0 0
    %840 = vmatpush1.bf16.msra.mxu0 %v822
    %841 = vmatprep.subr.bf16.mxu0 0
    %842 = vmatpush1.bf16.msra.mxu0 %v823
    %843 = vmatprep.subr.bf16.mxu0 0
    %844 = vmatpush1.bf16.msra.mxu0 %v824
    %845 = vmatprep.subr.bf16.mxu0 0
    %846 = vmatpush1.bf16.msra.mxu0 %v825
    %847 = vmatprep.subr.bf16.mxu0 0
    %848 = vmatpush1.bf16.msra.mxu0 %v826
    %849 = vmatprep.subr.bf16.mxu0 0
    %850 = vmatpush1.bf16.msra.mxu0 %v827
    %851 = vmatprep.subr.bf16.mxu0 0
    %852 = vmatpush1.bf16.msra.mxu0 %v828
    %853 = vmatprep.subr.bf16.mxu0 0
    %854 = vmatpush1.bf16.msra.mxu0 0
    %855 = vmatprep.subr.bf16.mxu0 0
    %856 = vmatpush1.bf16.msra.mxu0 0
    %857 = vmatprep.subr.bf16.mxu0 0
    %858 = vmatpush1.bf16.msra.mxu0 0
    %859 = vmatprep.subr.bf16.mxu0 0
    %860 = vmatpush1.bf16.msra.mxu0 0
    %861 = vmatprep.subr.bf16.mxu0 0
    %862 = vmatpush1.bf16.msra.mxu0 0
    %863 = vmatprep.subr.bf16.mxu0 0
    %864 = vmatpush1.bf16.msra.mxu0 0
    %865 = vmatprep.subr.bf16.mxu0 0
    %866 = vmatpush1.bf16.msra.mxu0 0
    %867 = vmatprep.subr.bf16.mxu0 0
    %868 = vmatpush1.bf16.msra.mxu0 0
    %869 = vmatprep.mubr.bf16.mxu0 0
    %870 = vmatmul.mubr.bf16.gmra.mrb[0].mxu0 %v750
    %v871 = vpop.f32.mrb[0].mxu0
    %v872 = vadd.f32 %v787, %v871
    %v873 = vpop.f32.mrb[0].mxu0
    %v874 = vpop.f32.mrb[0].mxu0
    %v875 = vadd.f32 %v787, %v874
    %v876 = vpop.f32.mrb[0].mxu0
    %877 = vmatprep.mubr.bf16.mxu0 0
    %878 = vmatmul.mubr.bf16.gmra.mrb[0].mxu0 %v751
    %v879 = vpop.f32.mrb[0].mxu0
    %v880 = vadd.f32 %v787, %v879
    %v881 = vpop.f32.mrb[0].mxu0
    %v882 = vpop.f32.mrb[0].mxu0
    %v883 = vadd.f32 %v787, %v882
    %v884 = vpop.f32.mrb[0].mxu0
    %885 = vmatprep.mubr.bf16.mxu0 0
    %886 = vmatmul.mubr.bf16.gmra.mrb[0].mxu0 %v752
    %v887 = vpop.f32.mrb[0].mxu0
    %v888 = vadd.f32 %v787, %v887
    %v889 = vpop.f32.mrb[0].mxu0
    %v890 = vpop.f32.mrb[0].mxu0
    %v891 = vadd.f32 %v787, %v890
    %v892 = vpop.f32.mrb[0].mxu0
    %893 = vmatprep.mubr.bf16.mxu0 0
    %894 = vmatmul.mubr.bf16.gmra.mrb[0].mxu0 %v753
    %v895 = vpop.f32.mrb[0].mxu0
    %v896 = vadd.f32 %v787, %v895
    %v897 = vpop.f32.mrb[0].mxu0
    %v898 = vpop.f32.mrb[0].mxu0
    %v899 = vadd.f32 %v787, %v898
    %v900 = vpop.f32.mrb[0].mxu0
    %901 = vmatprep.mubr.bf16.mxu0 0
    %902 = vmatmul.mubr.bf16.gmra.mrb[0].mxu0 %v754
    %v903 = vpop.f32.mrb[0].mxu0
    %v904 = vadd.f32 %v787, %v903
    %v905 = vpop.f32.mrb[0].mxu0
    %v906 = vpop.f32.mrb[0].mxu0
    %v907 = vadd.f32 %v787, %v906
    %v908 = vpop.f32.mrb[0].mxu0
    %909 = vmatprep.mubr.bf16.mxu0 0
    %910 = vmatmul.mubr.bf16.gmra.mrb[0].mxu0 %v755
    %v911 = vpop.f32.mrb[0].mxu0
    %v912 = vadd.f32 %v787, %v911
    %v913 = vpop.f32.mrb[0].mxu0
    %v914 = vpop.f32.mrb[0].mxu0
    %v915 = vadd.f32 %v787, %v914
    %v916 = vpop.f32.mrb[0].mxu0
    %917 = vmatprep.mubr.bf16.mxu0 0
    %918 = vmatmul.mubr.bf16.gmra.mrb[0].mxu0 %v756
    %v919 = vpop.f32.mrb[0].mxu0
    %v920 = vadd.f32 %v787, %v919
    %v921 = vpop.f32.mrb[0].mxu0
    %v922 = vpop.f32.mrb[0].mxu0
    %v923 = vadd.f32 %v787, %v922
    %v924 = vpop.f32.mrb[0].mxu0
    %925 = vmatprep.mubr.bf16.mxu0 0
    %926 = vmatmul.mubr.bf16.gmra.mrb[0].mxu0 %v757
    %v927 = vpop.f32.mrb[0].mxu0
    %v928 = vadd.f32 %v787, %v927
    %v929 = vpop.f32.mrb[0].mxu0
    %v930 = vpop.f32.mrb[0].mxu0
    %v931 = vadd.f32 %v787, %v930
    %v932 = vpop.f32.mrb[0].mxu0
    %933 = vmatprep.mubr.bf16.mxu0 0
    %934 = vmatmul.mubr.bf16.gmra.mrb[0].mxu0 %v758
    %v935 = vpop.f32.mrb[0].mxu0
    %v936 = vadd.f32 %v787, %v935
    %v937 = vpop.f32.mrb[0].mxu0
    %v938 = vpop.f32.mrb[0].mxu0
    %v939 = vadd.f32 %v787, %v938
    %v940 = vpop.f32.mrb[0].mxu0
    %941 = vmatprep.mubr.bf16.mxu0 0
    %942 = vmatmul.mubr.bf16.gmra.mrb[0].mxu0 %v759
    %v943 = vpop.f32.mrb[0].mxu0
    %v944 = vadd.f32 %v787, %v943
    %v945 = vpop.f32.mrb[0].mxu0
    %v946 = vpop.f32.mrb[0].mxu0
    %v947 = vadd.f32 %v787, %v946
    %v948 = vpop.f32.mrb[0].mxu0
    %949 = vmatprep.mubr.bf16.mxu0 0
    %950 = vmatmul.mubr.bf16.gmra.mrb[0].mxu0 %v760
    %v951 = vpop.f32.mrb[0].mxu0
    %v952 = vadd.f32 %v787, %v951
    %v953 = vpop.f32.mrb[0].mxu0
    %v954 = vpop.f32.mrb[0].mxu0
    %v955 = vadd.f32 %v787, %v954
    %v956 = vpop.f32.mrb[0].mxu0
    %957 = vmatprep.mubr.bf16.mxu0 0
    %958 = vmatmul.mubr.bf16.gmra.mrb[0].mxu0 %v761
    %v959 = vpop.f32.mrb[0].mxu0
    %v960 = vadd.f32 %v787, %v959
    %v961 = vpop.f32.mrb[0].mxu0
    %v962 = vpop.f32.mrb[0].mxu0
    %v963 = vadd.f32 %v787, %v962
    %v964 = vpop.f32.mrb[0].mxu0
    %965 = vmatprep.mubr.bf16.mxu0 0
    %966 = vmatmul.mubr.bf16.gmra.mrb[0].mxu0 %v762
    %v967 = vpop.f32.mrb[0].mxu0
    %v968 = vadd.f32 %v787, %v967
    %v969 = vpop.f32.mrb[0].mxu0
    %v970 = vpop.f32.mrb[0].mxu0
    %v971 = vadd.f32 %v787, %v970
    %v972 = vpop.f32.mrb[0].mxu0
    %973 = vmatprep.mubr.bf16.mxu0 0
    %974 = vmatmul.mubr.bf16.gmra.mrb[0].mxu0 %v763
    %v975 = vpop.f32.mrb[0].mxu0
    %v976 = vadd.f32 %v787, %v975
    %v977 = vpop.f32.mrb[0].mxu0
    %v978 = vpop.f32.mrb[0].mxu0
    %v979 = vadd.f32 %v787, %v978
    %v980 = vpop.f32.mrb[0].mxu0
    %981 = vmatprep.mubr.bf16.mxu0 0
    %982 = vmatmul.mubr.bf16.gmra.mrb[0].mxu0 %v764
    %v983 = vpop.f32.mrb[0].mxu0
    %v984 = vadd.f32 %v787, %v983
    %v985 = vpop.f32.mrb[0].mxu0
    %v986 = vpop.f32.mrb[0].mxu0
    %v987 = vadd.f32 %v787, %v986
    %v988 = vpop.f32.mrb[0].mxu0
    %989 = vmatprep.mubr.bf16.mxu0 0
    %990 = vmatmul.mubr.bf16.gmra.mrb[0].mxu0 %v765
    %v991 = vpop.f32.mrb[0].mxu0
    %v992 = vadd.f32 %v787, %v991
    %v993 = vpop.f32.mrb[0].mxu0
    %v994 = vpop.f32.mrb[0].mxu0
    %v995 = vadd.f32 %v787, %v994
    %v996 = vpop.f32.mrb[0].mxu0
    %997 = vdwg.mxu0
    %v998 = vpack.c.bf16 %v875, %v872
    %v999 = vpack.c.bf16 %v883, %v880
    %v1000 = vpack.c.bf16 %v891, %v888
    %v1001 = vpack.c.bf16 %v899, %v896
    %v1002 = vpack.c.bf16 %v907, %v904
    %v1003 = vpack.c.bf16 %v915, %v912
    %v1004 = vpack.c.bf16 %v923, %v920
    %v1005 = vpack.c.bf16 %v931, %v928
    %v1006 = vpack.c.bf16 %v939, %v936
    %v1007 = vpack.c.bf16 %v947, %v944
    %v1008 = vpack.c.bf16 %v955, %v952
    %v1009 = vpack.c.bf16 %v963, %v960
    %v1010 = vpack.c.bf16 %v971, %v968
    %v1011 = vpack.c.bf16 %v979, %v976
    %v1012 = vpack.c.bf16 %v987, %v984
    %v1013 = vpack.c.bf16 %v995, %v992
    %v1014 = vld [vmem:[#allocation8] sm:$0xf]
    %v1015 = vld [vmem:[#allocation8 + $0x4] sm:$0xf]
    %v1016 = vld [vmem:[#allocation8 + $0x8] sm:$0xf]
    %v1017 = vld [vmem:[#allocation8 + $0xc] sm:$0xf]
    %v1018 = vld [vmem:[#allocation8 + $0x10] sm:$0xf]
    %v1019 = vld [vmem:[#allocation8 + $0x14] sm:$0xf]
    %v1020 = vld [vmem:[#allocation8 + $0x18] sm:$0xf]
    %v1021 = vld [vmem:[#allocation8 + $0x1c] sm:$0xf]
    %v1022 = vld [vmem:[#allocation8 + $0x20] sm:$0xf]
    %v1023 = vld [vmem:[#allocation8 + $0x24] sm:$0xf]
    %v1024 = vld [vmem:[#allocation8 + $0x28] sm:$0xf]
    %v1025 = vld [vmem:[#allocation8 + $0x2c] sm:$0xf]
    %v1026 = vld [vmem:[#allocation8 + $0x30] sm:$0xf]
    %v1027 = vld [vmem:[#allocation8 + $0x34] sm:$0xf]
    %v1028 = vld [vmem:[#allocation8 + $0x38] sm:$0xf]
    %v1029 = vld [vmem:[#allocation8 + $0x3c] sm:$0xf]
    %v1030 = vld [vmem:[%s6] sm:$0x1]
    %v1032 = vlaneseq
    %v1033 = vshrl.u32 %v1032, 7
    %v1034 = vsub.s32 0, %v1033
    %v1035 = vrot.slane %v1030, %v1034
    %v1053 = vunpack.c.l.b16 %v1014
    %v1054 = vunpack.c.l.b16 %v1015
    %v1055 = vunpack.c.l.b16 %v1016
    %v1056 = vunpack.c.l.b16 %v1017
    %v1057 = vunpack.c.l.b16 %v1018
    %v1058 = vunpack.c.l.b16 %v1019
    %v1059 = vunpack.c.l.b16 %v1020
    %v1060 = vunpack.c.l.b16 %v1021
    %v1061 = vunpack.c.l.b16 %v1022
    %v1062 = vunpack.c.l.b16 %v1023
    %v1063 = vunpack.c.l.b16 %v1024
    %v1064 = vunpack.c.l.b16 %v1025
    %v1065 = vunpack.c.l.b16 %v1026
    %v1066 = vunpack.c.l.b16 %v1027
    %v1067 = vunpack.c.l.b16 %v1028
    %v1068 = vunpack.c.l.b16 %v1029
    %v1069 = vpack.c.b16 %v1054, %v1053
    %v1070 = vpack.c.b16 %v1056, %v1055
    %v1071 = vpack.c.b16 %v1058, %v1057
    %v1072 = vpack.c.b16 %v1060, %v1059
    %v1073 = vpack.c.b16 %v1062, %v1061
    %v1074 = vpack.c.b16 %v1064, %v1063
    %v1075 = vpack.c.b16 %v1066, %v1065
    %v1076 = vpack.c.b16 %v1068, %v1067
    %1085 = vmatprep.subr.bf16.mxu0 0
    %1086 = vmatpush1.bf16.msra.mxu0 %v1069
    %1087 = vmatprep.subr.bf16.mxu0 0
    %1088 = vmatpush1.bf16.msra.mxu0 %v1070
    %1089 = vmatprep.subr.bf16.mxu0 0
    %1090 = vmatpush1.bf16.msra.mxu0 %v1071
    %1091 = vmatprep.subr.bf16.mxu0 0
    %1092 = vmatpush1.bf16.msra.mxu0 %v1072
    %1093 = vmatprep.subr.bf16.mxu0 0
    %1094 = vmatpush1.bf16.msra.mxu0 %v1073
    %1095 = vmatprep.subr.bf16.mxu0 0
    %1096 = vmatpush1.bf16.msra.mxu0 %v1074
    %1097 = vmatprep.subr.bf16.mxu0 0
    %1098 = vmatpush1.bf16.msra.mxu0 %v1075
    %1099 = vmatprep.subr.bf16.mxu0 0
    %1100 = vmatpush1.bf16.msra.mxu0 %v1076
    %1101 = vmatprep.subr.bf16.mxu0 0
    %1102 = vmatpush1.bf16.msra.mxu0 0
    %1103 = vmatprep.subr.bf16.mxu0 0
    %1104 = vmatpush1.bf16.msra.mxu0 0
    %1105 = vmatprep.subr.bf16.mxu0 0
    %1106 = vmatpush1.bf16.msra.mxu0 0
    %1107 = vmatprep.subr.bf16.mxu0 0
    %1108 = vmatpush1.bf16.msra.mxu0 0
    %1109 = vmatprep.subr.bf16.mxu0 0
    %1110 = vmatpush1.bf16.msra.mxu0 0
    %1111 = vmatprep.subr.bf16.mxu0 0
    %1112 = vmatpush1.bf16.msra.mxu0 0
    %1113 = vmatprep.subr.bf16.mxu0 0
    %1114 = vmatpush1.bf16.msra.mxu0 0
    %1115 = vmatprep.subr.bf16.mxu0 0
    %1116 = vmatpush1.bf16.msra.mxu0 0
    %1117 = vmatprep.mubr.bf16.mxu0 0
    %1118 = vmatmul.mubr.bf16.gmra.mrb[0].mxu0 %v998
    %v1119 = vpop.f32.mrb[0].mxu0
    %v1120 = vadd.f32 %v1035, %v1119
    %v1121 = vpop.f32.mrb[0].mxu0
    %v1122 = vpop.f32.mrb[0].mxu0
    %v1123 = vadd.f32 %v1035, %v1122
    %v1124 = vpop.f32.mrb[0].mxu0
    %1125 = vmatprep.mubr.bf16.mxu0 0
    %1126 = vmatmul.mubr.bf16.gmra.mrb[0].mxu0 %v999
    %v1127 = vpop.f32.mrb[0].mxu0
    %v1128 = vadd.f32 %v1035, %v1127
    %v1129 = vpop.f32.mrb[0].mxu0
    %v1130 = vpop.f32.mrb[0].mxu0
    %v1131 = vadd.f32 %v1035, %v1130
    %v1132 = vpop.f32.mrb[0].mxu0
    %1133 = vmatprep.mubr.bf16.mxu0 0
    %1134 = vmatmul.mubr.bf16.gmra.mrb[0].mxu0 %v1000
    %v1135 = vpop.f32.mrb[0].mxu0
    %v1136 = vadd.f32 %v1035, %v1135
    %v1137 = vpop.f32.mrb[0].mxu0
    %v1138 = vpop.f32.mrb[0].mxu0
    %v1139 = vadd.f32 %v1035, %v1138
    %v1140 = vpop.f32.mrb[0].mxu0
    %1141 = vmatprep.mubr.bf16.mxu0 0
    %1142 = vmatmul.mubr.bf16.gmra.mrb[0].mxu0 %v1001
    %v1143 = vpop.f32.mrb[0].mxu0
    %v1144 = vadd.f32 %v1035, %v1143
    %v1145 = vpop.f32.mrb[0].mxu0
    %v1146 = vpop.f32.mrb[0].mxu0
    %v1147 = vadd.f32 %v1035, %v1146
    %v1148 = vpop.f32.mrb[0].mxu0
    %1149 = vmatprep.mubr.bf16.mxu0 0
    %1150 = vmatmul.mubr.bf16.gmra.mrb[0].mxu0 %v1002
    %v1151 = vpop.f32.mrb[0].mxu0
    %v1152 = vadd.f32 %v1035, %v1151
    %v1153 = vpop.f32.mrb[0].mxu0
    %v1154 = vpop.f32.mrb[0].mxu0
    %v1155 = vadd.f32 %v1035, %v1154
    %v1156 = vpop.f32.mrb[0].mxu0
    %1157 = vmatprep.mubr.bf16.mxu0 0
    %1158 = vmatmul.mubr.bf16.gmra.mrb[0].mxu0 %v1003
    %v1159 = vpop.f32.mrb[0].mxu0
    %v1160 = vadd.f32 %v1035, %v1159
    %v1161 = vpop.f32.mrb[0].mxu0
    %v1162 = vpop.f32.mrb[0].mxu0
    %v1163 = vadd.f32 %v1035, %v1162
    %v1164 = vpop.f32.mrb[0].mxu0
    %1165 = vmatprep.mubr.bf16.mxu0 0
    %1166 = vmatmul.mubr.bf16.gmra.mrb[0].mxu0 %v1004
    %v1167 = vpop.f32.mrb[0].mxu0
    %v1168 = vadd.f32 %v1035, %v1167
    %v1169 = vpop.f32.mrb[0].mxu0
    %v1170 = vpop.f32.mrb[0].mxu0
    %v1171 = vadd.f32 %v1035, %v1170
    %v1172 = vpop.f32.mrb[0].mxu0
    %1173 = vmatprep.mubr.bf16.mxu0 0
    %1174 = vmatmul.mubr.bf16.gmra.mrb[0].mxu0 %v1005
    %v1175 = vpop.f32.mrb[0].mxu0
    %v1176 = vadd.f32 %v1035, %v1175
    %v1177 = vpop.f32.mrb[0].mxu0
    %v1178 = vpop.f32.mrb[0].mxu0
    %v1179 = vadd.f32 %v1035, %v1178
    %v1180 = vpop.f32.mrb[0].mxu0
    %1181 = vmatprep.mubr.bf16.mxu0 0
    %1182 = vmatmul.mubr.bf16.gmra.mrb[0].mxu0 %v1006
    %v1183 = vpop.f32.mrb[0].mxu0
    %v1184 = vadd.f32 %v1035, %v1183
    %v1185 = vpop.f32.mrb[0].mxu0
    %v1186 = vpop.f32.mrb[0].mxu0
    %v1187 = vadd.f32 %v1035, %v1186
    %v1188 = vpop.f32.mrb[0].mxu0
    %1189 = vmatprep.mubr.bf16.mxu0 0
    %1190 = vmatmul.mubr.bf16.gmra.mrb[0].mxu0 %v1007
    %v1191 = vpop.f32.mrb[0].mxu0
    %v1192 = vadd.f32 %v1035, %v1191
    %v1193 = vpop.f32.mrb[0].mxu0
    %v1194 = vpop.f32.mrb[0].mxu0
    %v1195 = vadd.f32 %v1035, %v1194
    %v1196 = vpop.f32.mrb[0].mxu0
    %1197 = vmatprep.mubr.bf16.mxu0 0
    %1198 = vmatmul.mubr.bf16.gmra.mrb[0].mxu0 %v1008
    %v1199 = vpop.f32.mrb[0].mxu0
    %v1200 = vadd.f32 %v1035, %v1199
    %v1201 = vpop.f32.mrb[0].mxu0
    %v1202 = vpop.f32.mrb[0].mxu0
    %v1203 = vadd.f32 %v1035, %v1202
    %v1204 = vpop.f32.mrb[0].mxu0
    %1205 = vmatprep.mubr.bf16.mxu0 0
    %1206 = vmatmul.mubr.bf16.gmra.mrb[0].mxu0 %v1009
    %v1207 = vpop.f32.mrb[0].mxu0
    %v1208 = vadd.f32 %v1035, %v1207
    %v1209 = vpop.f32.mrb[0].mxu0
    %v1210 = vpop.f32.mrb[0].mxu0
    %v1211 = vadd.f32 %v1035, %v1210
    %v1212 = vpop.f32.mrb[0].mxu0
    %1213 = vmatprep.mubr.bf16.mxu0 0
    %1214 = vmatmul.mubr.bf16.gmra.mrb[0].mxu0 %v1010
    %v1215 = vpop.f32.mrb[0].mxu0
    %v1216 = vadd.f32 %v1035, %v1215
    %v1217 = vpop.f32.mrb[0].mxu0
    %v1218 = vpop.f32.mrb[0].mxu0
    %v1219 = vadd.f32 %v1035, %v1218
    %v1220 = vpop.f32.mrb[0].mxu0
    %1221 = vmatprep.mubr.bf16.mxu0 0
    %1222 = vmatmul.mubr.bf16.gmra.mrb[0].mxu0 %v1011
    %v1223 = vpop.f32.mrb[0].mxu0
    %v1224 = vadd.f32 %v1035, %v1223
    %v1225 = vpop.f32.mrb[0].mxu0
    %v1226 = vpop.f32.mrb[0].mxu0
    %v1227 = vadd.f32 %v1035, %v1226
    %v1228 = vpop.f32.mrb[0].mxu0
    %1229 = vmatprep.mubr.bf16.mxu0 0
    %1230 = vmatmul.mubr.bf16.gmra.mrb[0].mxu0 %v1012
    %v1231 = vpop.f32.mrb[0].mxu0
    %v1232 = vadd.f32 %v1035, %v1231
    %v1233 = vpop.f32.mrb[0].mxu0
    %v1234 = vpop.f32.mrb[0].mxu0
    %v1235 = vadd.f32 %v1035, %v1234
    %v1236 = vpop.f32.mrb[0].mxu0
    %1237 = vmatprep.mubr.bf16.mxu0 0
    %1238 = vmatmul.mubr.bf16.gmra.mrb[0].mxu0 %v1013
    %v1239 = vpop.f32.mrb[0].mxu0
    %v1240 = vadd.f32 %v1035, %v1239
    %v1241 = vpop.f32.mrb[0].mxu0
    %v1242 = vpop.f32.mrb[0].mxu0
    %v1243 = vadd.f32 %v1035, %v1242
    %v1244 = vpop.f32.mrb[0].mxu0
    %1245 = vdwg.mxu0
    %v1246 = vmax.f32 %v1120, 0.0
    %v1247 = vmax.f32 %v1123, 0.0
    %v1248 = vmax.f32 %v1128, 0.0
    %v1249 = vmax.f32 %v1131, 0.0
    %v1250 = vmax.f32 %v1136, 0.0
    %v1251 = vmax.f32 %v1139, 0.0
    %v1252 = vmax.f32 %v1144, 0.0
    %v1253 = vmax.f32 %v1147, 0.0
    %v1254 = vmax.f32 %v1152, 0.0
    %v1255 = vmax.f32 %v1155, 0.0
    %v1256 = vmax.f32 %v1160, 0.0
    %v1257 = vmax.f32 %v1163, 0.0
    %v1258 = vmax.f32 %v1168, 0.0
    %v1259 = vmax.f32 %v1171, 0.0
    %v1260 = vmax.f32 %v1176, 0.0
    %v1261 = vmax.f32 %v1179, 0.0
    %v1262 = vmax.f32 %v1184, 0.0
    %v1263 = vmax.f32 %v1187, 0.0
    %v1264 = vmax.f32 %v1192, 0.0
    %v1265 = vmax.f32 %v1195, 0.0
    %v1266 = vmax.f32 %v1200, 0.0
    %v1267 = vmax.f32 %v1203, 0.0
    %v1268 = vmax.f32 %v1208, 0.0
    %v1269 = vmax.f32 %v1211, 0.0
    %v1270 = vmax.f32 %v1216, 0.0
    %v1271 = vmax.f32 %v1219, 0.0
    %v1272 = vmax.f32 %v1224, 0.0
    %v1273 = vmax.f32 %v1227, 0.0
    %v1274 = vmax.f32 %v1232, 0.0
    %v1275 = vmax.f32 %v1235, 0.0
    %v1276 = vmax.f32 %v1240, 0.0
    %v1277 = vmax.f32 %v1243, 0.0
    %v1278 = vpack.c.bf16 %v1247, %v1246
    %v1279 = vpack.c.bf16 %v1249, %v1248
    %v1280 = vpack.c.bf16 %v1251, %v1250
    %v1281 = vpack.c.bf16 %v1253, %v1252
    %v1282 = vpack.c.bf16 %v1255, %v1254
    %v1283 = vpack.c.bf16 %v1257, %v1256
    %v1284 = vpack.c.bf16 %v1259, %v1258
    %v1285 = vpack.c.bf16 %v1261, %v1260
    %v1286 = vpack.c.bf16 %v1263, %v1262
    %v1287 = vpack.c.bf16 %v1265, %v1264
    %v1288 = vpack.c.bf16 %v1267, %v1266
    %v1289 = vpack.c.bf16 %v1269, %v1268
    %v1290 = vpack.c.bf16 %v1271, %v1270
    %v1291 = vpack.c.bf16 %v1273, %v1272
    %v1292 = vpack.c.bf16 %v1275, %v1274
    %v1293 = vpack.c.bf16 %v1277, %v1276
    %v1294 = vld [vmem:[#allocation10] sm:$0xf]
    %v1295 = vld [vmem:[#allocation10 + $0x4] sm:$0xf]
    %v1296 = vld [vmem:[#allocation10 + $0x8] sm:$0xf]
    %v1297 = vld [vmem:[#allocation10 + $0xc] sm:$0xf]
    %v1298 = vld [vmem:[#allocation10 + $0x10] sm:$0xf]
    %v1299 = vld [vmem:[#allocation10 + $0x14] sm:$0xf]
    %v1300 = vld [vmem:[#allocation10 + $0x18] sm:$0xf]
    %v1301 = vld [vmem:[#allocation10 + $0x1c] sm:$0xf]
    %v1302 = vld [vmem:[#allocation10 + $0x20] sm:$0xf]
    %v1303 = vld [vmem:[#allocation10 + $0x24] sm:$0xf]
    %v1304 = vld [vmem:[#allocation10 + $0x28] sm:$0xf]
    %v1305 = vld [vmem:[#allocation10 + $0x2c] sm:$0xf]
    %v1306 = vld [vmem:[#allocation10 + $0x30] sm:$0xf]
    %v1307 = vld [vmem:[#allocation10 + $0x34] sm:$0xf]
    %v1308 = vld [vmem:[#allocation10 + $0x38] sm:$0xf]
    %v1309 = vld [vmem:[#allocation10 + $0x3c] sm:$0xf]
    %v1326 = vunpack.c.l.b16 %v1294
    %v1327 = vunpack.c.l.b16 %v1295
    %v1328 = vunpack.c.l.b16 %v1296
    %v1329 = vunpack.c.l.b16 %v1297
    %v1330 = vunpack.c.l.b16 %v1298
    %v1331 = vunpack.c.l.b16 %v1299
    %v1332 = vunpack.c.l.b16 %v1300
    %v1333 = vunpack.c.l.b16 %v1301
    %v1334 = vunpack.c.l.b16 %v1302
    %v1335 = vunpack.c.l.b16 %v1303
    %v1336 = vunpack.c.l.b16 %v1304
    %v1337 = vunpack.c.l.b16 %v1305
    %v1338 = vunpack.c.l.b16 %v1306
    %v1339 = vunpack.c.l.b16 %v1307
    %v1340 = vunpack.c.l.b16 %v1308
    %v1341 = vunpack.c.l.b16 %v1309
    %v1342 = vpack.c.b16 %v1327, %v1326
    %v1343 = vpack.c.b16 %v1329, %v1328
    %v1344 = vpack.c.b16 %v1331, %v1330
    %v1345 = vpack.c.b16 %v1333, %v1332
    %v1346 = vpack.c.b16 %v1335, %v1334
    %v1347 = vpack.c.b16 %v1337, %v1336
    %v1348 = vpack.c.b16 %v1339, %v1338
    %v1349 = vpack.c.b16 %v1341, %v1340
    %1358 = vmatprep.subr.bf16.mxu0 0
    %1359 = vmatpush1.bf16.msra.mxu0 %v1342
    %1360 = vmatprep.subr.bf16.mxu0 0
    %1361 = vmatpush1.bf16.msra.mxu0 %v1343
    %1362 = vmatprep.subr.bf16.mxu0 0
    %1363 = vmatpush1.bf16.msra.mxu0 %v1344
    %1364 = vmatprep.subr.bf16.mxu0 0
    %1365 = vmatpush1.bf16.msra.mxu0 %v1345
    %1366 = vmatprep.subr.bf16.mxu0 0
    %1367 = vmatpush1.bf16.msra.mxu0 %v1346
    %1368 = vmatprep.subr.bf16.mxu0 0
    %1369 = vmatpush1.bf16.msra.mxu0 %v1347
    %1370 = vmatprep.subr.bf16.mxu0 0
    %1371 = vmatpush1.bf16.msra.mxu0 %v1348
    %1372 = vmatprep.subr.bf16.mxu0 0
    %1373 = vmatpush1.bf16.msra.mxu0 %v1349
    %1374 = vmatprep.subr.bf16.mxu0 0
    %1375 = vmatpush1.bf16.msra.mxu0 0
    %1376 = vmatprep.subr.bf16.mxu0 0
    %1377 = vmatpush1.bf16.msra.mxu0 0
    %1378 = vmatprep.subr.bf16.mxu0 0
    %1379 = vmatpush1.bf16.msra.mxu0 0
    %1380 = vmatprep.subr.bf16.mxu0 0
    %1381 = vmatpush1.bf16.msra.mxu0 0
    %1382 = vmatprep.subr.bf16.mxu0 0
    %1383 = vmatpush1.bf16.msra.mxu0 0
    %1384 = vmatprep.subr.bf16.mxu0 0
    %1385 = vmatpush1.bf16.msra.mxu0 0
    %1386 = vmatprep.subr.bf16.mxu0 0
    %1387 = vmatpush1.bf16.msra.mxu0 0
    %1388 = vmatprep.subr.bf16.mxu0 0
    %1389 = vmatpush1.bf16.msra.mxu0 0
    %1390 = vmatprep.mubr.bf16.mxu0 0
    %1391 = vmatmul.mubr.bf16.gmra.mrb[0].mxu0 %v1278
    %v1392 = vpop.f32.mrb[0].mxu0
    %v1393 = vadd.f32 0.0, %v1392
    %v1394 = vpop.f32.mrb[0].mxu0
    %v1395 = vpop.f32.mrb[0].mxu0
    %v1396 = vadd.f32 0.0, %v1395
    %v1397 = vpop.f32.mrb[0].mxu0
    %1398 = vmatprep.mubr.bf16.mxu0 0
    %1399 = vmatmul.mubr.bf16.gmra.mrb[0].mxu0 %v1279
    %v1400 = vpop.f32.mrb[0].mxu0
    %v1401 = vadd.f32 0.0, %v1400
    %v1402 = vpop.f32.mrb[0].mxu0
    %v1403 = vpop.f32.mrb[0].mxu0
    %v1404 = vadd.f32 0.0, %v1403
    %v1405 = vpop.f32.mrb[0].mxu0
    %1406 = vmatprep.mubr.bf16.mxu0 0
    %1407 = vmatmul.mubr.bf16.gmra.mrb[0].mxu0 %v1280
    %v1408 = vpop.f32.mrb[0].mxu0
    %v1409 = vadd.f32 0.0, %v1408
    %v1410 = vpop.f32.mrb[0].mxu0
    %v1411 = vpop.f32.mrb[0].mxu0
    %v1412 = vadd.f32 0.0, %v1411
    %v1413 = vpop.f32.mrb[0].mxu0
    %1414 = vmatprep.mubr.bf16.mxu0 0
    %1415 = vmatmul.mubr.bf16.gmra.mrb[0].mxu0 %v1281
    %v1416 = vpop.f32.mrb[0].mxu0
    %v1417 = vadd.f32 0.0, %v1416
    %v1418 = vpop.f32.mrb[0].mxu0
    %v1419 = vpop.f32.mrb[0].mxu0
    %v1420 = vadd.f32 0.0, %v1419
    %v1421 = vpop.f32.mrb[0].mxu0
    %1422 = vmatprep.mubr.bf16.mxu0 0
    %1423 = vmatmul.mubr.bf16.gmra.mrb[0].mxu0 %v1282
    %v1424 = vpop.f32.mrb[0].mxu0
    %v1425 = vadd.f32 0.0, %v1424
    %v1426 = vpop.f32.mrb[0].mxu0
    %v1427 = vpop.f32.mrb[0].mxu0
    %v1428 = vadd.f32 0.0, %v1427
    %v1429 = vpop.f32.mrb[0].mxu0
    %1430 = vmatprep.mubr.bf16.mxu0 0
    %1431 = vmatmul.mubr.bf16.gmra.mrb[0].mxu0 %v1283
    %v1432 = vpop.f32.mrb[0].mxu0
    %v1433 = vadd.f32 0.0, %v1432
    %v1434 = vpop.f32.mrb[0].mxu0
    %v1435 = vpop.f32.mrb[0].mxu0
    %v1436 = vadd.f32 0.0, %v1435
    %v1437 = vpop.f32.mrb[0].mxu0
    %1438 = vmatprep.mubr.bf16.mxu0 0
    %1439 = vmatmul.mubr.bf16.gmra.mrb[0].mxu0 %v1284
    %v1440 = vpop.f32.mrb[0].mxu0
    %v1441 = vadd.f32 0.0, %v1440
    %v1442 = vpop.f32.mrb[0].mxu0
    %v1443 = vpop.f32.mrb[0].mxu0
    %v1444 = vadd.f32 0.0, %v1443
    %v1445 = vpop.f32.mrb[0].mxu0
    %1446 = vmatprep.mubr.bf16.mxu0 0
    %1447 = vmatmul.mubr.bf16.gmra.mrb[0].mxu0 %v1285
    %v1448 = vpop.f32.mrb[0].mxu0
    %v1449 = vadd.f32 0.0, %v1448
    %v1450 = vpop.f32.mrb[0].mxu0
    %v1451 = vpop.f32.mrb[0].mxu0
    %v1452 = vadd.f32 0.0, %v1451
    %v1453 = vpop.f32.mrb[0].mxu0
    %1454 = vmatprep.mubr.bf16.mxu0 0
    %1455 = vmatmul.mubr.bf16.gmra.mrb[0].mxu0 %v1286
    %v1456 = vpop.f32.mrb[0].mxu0
    %v1457 = vadd.f32 0.0, %v1456
    %v1458 = vpop.f32.mrb[0].mxu0
    %v1459 = vpop.f32.mrb[0].mxu0
    %v1460 = vadd.f32 0.0, %v1459
    %v1461 = vpop.f32.mrb[0].mxu0
    %1462 = vmatprep.mubr.bf16.mxu0 0
    %1463 = vmatmul.mubr.bf16.gmra.mrb[0].mxu0 %v1287
    %v1464 = vpop.f32.mrb[0].mxu0
    %v1465 = vadd.f32 0.0, %v1464
    %v1466 = vpop.f32.mrb[0].mxu0
    %v1467 = vpop.f32.mrb[0].mxu0
    %v1468 = vadd.f32 0.0, %v1467
    %v1469 = vpop.f32.mrb[0].mxu0
    %1470 = vmatprep.mubr.bf16.mxu0 0
    %1471 = vmatmul.mubr.bf16.gmra.mrb[0].mxu0 %v1288
    %v1472 = vpop.f32.mrb[0].mxu0
    %v1473 = vadd.f32 0.0, %v1472
    %v1474 = vpop.f32.mrb[0].mxu0
    %v1475 = vpop.f32.mrb[0].mxu0
    %v1476 = vadd.f32 0.0, %v1475
    %v1477 = vpop.f32.mrb[0].mxu0
    %1478 = vmatprep.mubr.bf16.mxu0 0
    %1479 = vmatmul.mubr.bf16.gmra.mrb[0].mxu0 %v1289
    %v1480 = vpop.f32.mrb[0].mxu0
    %v1481 = vadd.f32 0.0, %v1480
    %v1482 = vpop.f32.mrb[0].mxu0
    %v1483 = vpop.f32.mrb[0].mxu0
    %v1484 = vadd.f32 0.0, %v1483
    %v1485 = vpop.f32.mrb[0].mxu0
    %1486 = vmatprep.mubr.bf16.mxu0 0
    %1487 = vmatmul.mubr.bf16.gmra.mrb[0].mxu0 %v1290
    %v1488 = vpop.f32.mrb[0].mxu0
    %v1489 = vadd.f32 0.0, %v1488
    %v1490 = vpop.f32.mrb[0].mxu0
    %v1491 = vpop.f32.mrb[0].mxu0
    %v1492 = vadd.f32 0.0, %v1491
    %v1493 = vpop.f32.mrb[0].mxu0
    %1494 = vmatprep.mubr.bf16.mxu0 0
    %1495 = vmatmul.mubr.bf16.gmra.mrb[0].mxu0 %v1291
    %v1496 = vpop.f32.mrb[0].mxu0
    %v1497 = vadd.f32 0.0, %v1496
    %v1498 = vpop.f32.mrb[0].mxu0
    %v1499 = vpop.f32.mrb[0].mxu0
    %v1500 = vadd.f32 0.0, %v1499
    %v1501 = vpop.f32.mrb[0].mxu0
    %1502 = vmatprep.mubr.bf16.mxu0 0
    %1503 = vmatmul.mubr.bf16.gmra.mrb[0].mxu0 %v1292
    %v1504 = vpop.f32.mrb[0].mxu0
    %v1505 = vadd.f32 0.0, %v1504
    %v1506 = vpop.f32.mrb[0].mxu0
    %v1507 = vpop.f32.mrb[0].mxu0
    %v1508 = vadd.f32 0.0, %v1507
    %v1509 = vpop.f32.mrb[0].mxu0
    %1510 = vmatprep.mubr.bf16.mxu0 0
    %1511 = vmatmul.mubr.bf16.gmra.mrb[0].mxu0 %v1293
    %v1512 = vpop.f32.mrb[0].mxu0
    %v1513 = vadd.f32 0.0, %v1512
    %v1514 = vpop.f32.mrb[0].mxu0
    %v1515 = vpop.f32.mrb[0].mxu0
    %v1516 = vadd.f32 0.0, %v1515
    %v1517 = vpop.f32.mrb[0].mxu0
    %1518 = vdwg.mxu0
    %v1519 = vadd.f32 %v872, %v1393
    %v1520 = vadd.f32 %v875, %v1396
    %v1521 = vadd.f32 %v880, %v1401
    %v1522 = vadd.f32 %v883, %v1404
    %v1523 = vadd.f32 %v888, %v1409
    %v1524 = vadd.f32 %v891, %v1412
    %v1525 = vadd.f32 %v896, %v1417
    %v1526 = vadd.f32 %v899, %v1420
    %v1527 = vadd.f32 %v904, %v1425
    %v1528 = vadd.f32 %v907, %v1428
    %v1529 = vadd.f32 %v912, %v1433
    %v1530 = vadd.f32 %v915, %v1436
    %v1531 = vadd.f32 %v920, %v1441
    %v1532 = vadd.f32 %v923, %v1444
    %v1533 = vadd.f32 %v928, %v1449
    %v1534 = vadd.f32 %v931, %v1452
    %v1535 = vadd.f32 %v936, %v1457
    %v1536 = vadd.f32 %v939, %v1460
    %v1537 = vadd.f32 %v944, %v1465
    %v1538 = vadd.f32 %v947, %v1468
    %v1539 = vadd.f32 %v952, %v1473
    %v1540 = vadd.f32 %v955, %v1476
    %v1541 = vadd.f32 %v960, %v1481
    %v1542 = vadd.f32 %v963, %v1484
    %v1543 = vadd.f32 %v968, %v1489
    %v1544 = vadd.f32 %v971, %v1492
    %v1545 = vadd.f32 %v976, %v1497
    %v1546 = vadd.f32 %v979, %v1500
    %v1547 = vadd.f32 %v984, %v1505
    %v1548 = vadd.f32 %v987, %v1508
    %v1549 = vadd.f32 %v992, %v1513
    %v1550 = vadd.f32 %v995, %v1516
    %v1551 = vld [vmem:[%s8] sm:$0x1]
    %v1553 = vlaneseq
    %v1554 = vshrl.u32 %v1553, 7
    %v1555 = vsub.s32 0, %v1554
    %v1556 = vrot.slane %v1551, %v1555
    %v1558 = vadd.f32 %v1519, %v1556
    %v1559 = vadd.f32 %v1520, %v1556
    %v1560 = vadd.f32 %v1521, %v1556
    %v1561 = vadd.f32 %v1522, %v1556
    %v1562 = vadd.f32 %v1523, %v1556
    %v1563 = vadd.f32 %v1524, %v1556
    %v1564 = vadd.f32 %v1525, %v1556
    %v1565 = vadd.f32 %v1526, %v1556
    %v1566 = vadd.f32 %v1527, %v1556
    %v1567 = vadd.f32 %v1528, %v1556
    %v1568 = vadd.f32 %v1529, %v1556
    %v1569 = vadd.f32 %v1530, %v1556
    %v1570 = vadd.f32 %v1531, %v1556
    %v1571 = vadd.f32 %v1532, %v1556
    %v1572 = vadd.f32 %v1533, %v1556
    %v1573 = vadd.f32 %v1534, %v1556
    %v1574 = vadd.f32 %v1535, %v1556
    %v1575 = vadd.f32 %v1536, %v1556
    %v1576 = vadd.f32 %v1537, %v1556
    %v1577 = vadd.f32 %v1538, %v1556
    %v1578 = vadd.f32 %v1539, %v1556
    %v1579 = vadd.f32 %v1540, %v1556
    %v1580 = vadd.f32 %v1541, %v1556
    %v1581 = vadd.f32 %v1542, %v1556
    %v1582 = vadd.f32 %v1543, %v1556
    %v1583 = vadd.f32 %v1544, %v1556
    %v1584 = vadd.f32 %v1545, %v1556
    %v1585 = vadd.f32 %v1546, %v1556
    %v1586 = vadd.f32 %v1547, %v1556
    %v1587 = vadd.f32 %v1548, %v1556
    %v1588 = vadd.f32 %v1549, %v1556
    %v1589 = vadd.f32 %v1550, %v1556
    %1590 = vst [vmem:[#allocation11] sm:$0xff] %v1558
    %1591 = vst [vmem:[#allocation11 + $0x8] sm:$0xff] %v1559
    %1592 = vst [vmem:[#allocation11 + $0x10] sm:$0xff] %v1560
    %1593 = vst [vmem:[#allocation11 + $0x18] sm:$0xff] %v1561
    %1594 = vst [vmem:[#allocation11 + $0x20] sm:$0xff] %v1562
    %1595 = vst [vmem:[#allocation11 + $0x28] sm:$0xff] %v1563
    %1596 = vst [vmem:[#allocation11 + $0x30] sm:$0xff] %v1564
    %1597 = vst [vmem:[#allocation11 + $0x38] sm:$0xff] %v1565
    %1598 = vst [vmem:[#allocation11 + $0x40] sm:$0xff] %v1566
    %1599 = vst [vmem:[#allocation11 + $0x48] sm:$0xff] %v1567
    %1600 = vst [vmem:[#allocation11 + $0x50] sm:$0xff] %v1568
    %1601 = vst [vmem:[#allocation11 + $0x58] sm:$0xff] %v1569
    %1602 = vst [vmem:[#allocation11 + $0x60] sm:$0xff] %v1570
    %1603 = vst [vmem:[#allocation11 + $0x68] sm:$0xff] %v1571
    %1604 = vst [vmem:[#allocation11 + $0x70] sm:$0xff] %v1572
    %1605 = vst [vmem:[#allocation11 + $0x78] sm:$0xff] %v1573
    %1606 = vst [vmem:[#allocation11 + $0x80] sm:$0xff] %v1574
    %1607 = vst [vmem:[#allocation11 + $0x88] sm:$0xff] %v1575
    %1608 = vst [vmem:[#allocation11 + $0x90] sm:$0xff] %v1576
    %1609 = vst [vmem:[#allocation11 + $0x98] sm:$0xff] %v1577
    %1610 = vst [vmem:[#allocation11 + $0xa0] sm:$0xff] %v1578
    %1611 = vst [vmem:[#allocation11 + $0xa8] sm:$0xff] %v1579
    %1612 = vst [vmem:[#allocation11 + $0xb0] sm:$0xff] %v1580
    %1613 = vst [vmem:[#allocation11 + $0xb8] sm:$0xff] %v1581
    %1614 = vst [vmem:[#allocation11 + $0xc0] sm:$0xff] %v1582
    %1615 = vst [vmem:[#allocation11 + $0xc8] sm:$0xff] %v1583
    %1616 = vst [vmem:[#allocation11 + $0xd0] sm:$0xff] %v1584
    %1617 = vst [vmem:[#allocation11 + $0xd8] sm:$0xff] %v1585
    %1618 = vst [vmem:[#allocation11 + $0xe0] sm:$0xff] %v1586
    %1619 = vst [vmem:[#allocation11 + $0xe8] sm:$0xff] %v1587
    %1620 = vst [vmem:[#allocation11 + $0xf0] sm:$0xff] %v1588
    %1621 = vst [vmem:[#allocation11 + $0xf8] sm:$0xff] %v1589
    // Predicated region
    $region58: #{tpu_custom_call.1} parent=1 // pred_check
      _
    $region59: #{tpu_custom_call.1} parent=1 // pred_check_branch
      %1623 = sbr.rel (0) target = $region61
    $region60: #{tpu_custom_call.1} parent=1 // pred_region
      %s1625 = ssub.s32 4096, 4096
      %1626 = vsyncadd [#allocation4], %s1625
      %s1627 = sshll.u32 [#allocation11], 4
      %s1628 = int_to_ptr.vmem [resolvable:$true] %s1627
      %1633 = dma.vmem_to_hbm [thread:$0]  %s1628, 4096, %s9, [#allocation4], 128, 128, 8
    $region61: #{tpu_custom_call.1} parent=1 // pred_fallthru
      _
    // Predicated region
    $region62: #{tpu_custom_call.1} parent=1 // pred_check
      _
    $region63: #{tpu_custom_call.1} parent=1 // pred_check_branch
      %1635 = sbr.rel (0) target = $region65
    $region64: #{tpu_custom_call.1} parent=1 // pred_region
      %1636 = dma.done [#allocation4], 4096
    $region65: #{tpu_custom_call.1} parent=1 // pred_fallthru
      _
    %1637 = vsyncpa [#allocation3], 1
    %1638 = vsyncpa [#allocation6], 1
    %1639 = vsyncpa [#allocation9], 1
    %1640 = vsyncpa [#allocation4], 1

</llo_original>
